<compile_context>
chip_gen: v7x
topology: tpu7x:2x2x1
jax: 0.10.0
libtpu: 0.0.40
codegen_flags: <defaults>
</compile_context>

<pallas_src>
import functools
import math

import jax
import jax.numpy as jnp
from jax.experimental import pallas as pl
from jax.experimental.pallas import tpu as pltpu

# ---------------- synthetic GPT-2 config (small) ----------------
VOCAB = 64
N_POS = 16
N_EMBD = 32
N_HEAD = 4
N_LAYER = 2
HEAD_DIM = N_EMBD // N_HEAD
LN_EPS = 1e-5
MXU_DTYPE = jnp.bfloat16          # MXU-input dtype for all weight matmuls

# Packed-slab layout constants (static, shared by wrapper + kernel).
SLAB_COLS = 4 * N_EMBD            # 128: every slab row is padded to 128 lanes
W_LAYER_ROWS = 7 * N_EMBD         # attn_w(D)+proj_w(D)+fc_w(D)+fcproj_w(4D)=224
P_LAYER_ROWS = 8                  # ln1_g,ln1_b,attn_b,proj_b,ln2_g,ln2_b,fc_b,fcproj_b


def _layernorm(x, g, b):
    mu = jnp.mean(x, axis=-1, keepdims=True)
    var = jnp.mean((x - mu) ** 2, axis=-1, keepdims=True)
    return (x - mu) * jax.lax.rsqrt(var + LN_EPS) * g + b


# ---------------- single fused Pallas kernel ----------------
def gpt2_reward_kernel(h_ref, mask_ref, w_ref, p_ref, o_ref, attn_ref,
                       *, B, S, apply_sigmoid):
    """Whole GPT-2 reward forward in one kernel invocation (no grid)."""
    D, H, Dh = N_EMBD, N_HEAD, HEAD_DIM
    f32 = jnp.float32
    bf16 = MXU_DTYPE

    h = h_ref[...].astype(f32)                        # (B*S, D) embeddings
    amask = mask_ref[...].astype(f32)                 # (B, S)   1=valid 0=pad

    # causal + padding mask built ONCE for the whole model, batched (B,S,S)
    row = jax.lax.broadcasted_iota(jnp.int32, (S, S), 0)
    col = jax.lax.broadcasted_iota(jnp.int32, (S, S), 1)
    causal = jnp.where(col <= row, 0.0, -1e9).astype(f32)          # (S, S)
    pad = (1.0 - amask) * -1e9                                     # (B, S)
    mask_bss = (jnp.broadcast_to(causal[None, :, :], (B, S, S)) +
                jnp.broadcast_to(pad[:, None, :], (B, S, S)))      # (B, S, S)

    scale = 1.0 / math.sqrt(Dh)

    def prow(r, w):                      # small-param row -> (1, w) f32
        return p_ref[r:r + 1, 0:w]

    for layer in range(N_LAYER):         # static unroll (N_LAYER=2)
        wr0 = layer * W_LAYER_ROWS
        pr0 = layer * P_LAYER_ROWS

        # small params (f32 slab rows)
        ln1_g, ln1_b = prow(pr0 + 0, D), prow(pr0 + 1, D)
        attn_b = prow(pr0 + 2, 3 * D)
        proj_b = prow(pr0 + 3, D)
        ln2_g, ln2_b = prow(pr0 + 4, D), prow(pr0 + 5, D)
        fc_b = prow(pr0 + 6, 4 * D)
        fcproj_b = prow(pr0 + 7, D)

        # matmul weights (bf16 slab, static row/col carve-outs)
        attn_w = w_ref[wr0 + 0 * D:wr0 + 1 * D, 0:3 * D]           # (D, 3D)
        proj_w = w_ref[wr0 + 1 * D:wr0 + 2 * D, 0:D]               # (D, D)
        fc_w = w_ref[wr0 + 2 * D:wr0 + 3 * D, 0:4 * D]             # (D, 4D)
        fcproj_w = w_ref[wr0 + 3 * D:wr0 + 7 * D, 0:D]             # (4D, D)

        # ---- attention sub-block: LN1 -> QKV -> attention -> proj+residual ----
        x = _layernorm(h, ln1_g, ln1_b)
        qkv = jnp.dot(x.astype(bf16), attn_w,
                      preferred_element_type=f32) + attn_b          # (B*S, 3D)
        qkv = qkv.reshape(B, S, 3 * D)                              # free view

        for hh in range(H):                                         # static, H=4
            q = qkv[:, :, 0 * D + hh * Dh: 0 * D + (hh + 1) * Dh].astype(bf16)
            k = qkv[:, :, 1 * D + hh * Dh: 1 * D + (hh + 1) * Dh].astype(bf16)
            v = qkv[:, :, 2 * D + hh * Dh: 2 * D + (hh + 1) * Dh].astype(bf16)
            # batched over B, no explicit k.T (contraction on last axes)
            s = jnp.einsum('bqd,bkd->bqk', q, k,
                           preferred_element_type=f32) * scale + mask_bss
            s = s - jnp.max(s, axis=-1, keepdims=True)
            p = jnp.exp(s)
            p = p / jnp.sum(p, axis=-1, keepdims=True)              # exact softmax
            o_h = jnp.einsum('bqk,bkd->bqd', p.astype(bf16), v,
                             preferred_element_type=f32)            # (B, S, Dh)
            # heads land in a VMEM scratch at static column offsets (no concat)
            attn_ref[:, hh * Dh:(hh + 1) * Dh] = o_h.reshape(B * S, Dh)

        attn = attn_ref[...]                                        # (B*S, D)
        h = h + jnp.dot(attn.astype(bf16), proj_w,
                        preferred_element_type=f32) + proj_b

        # ---- MLP sub-block: LN2 -> fc -> gelu -> fcproj + residual ----
        x = _layernorm(h, ln2_g, ln2_b)
        m = jnp.dot(x.astype(bf16), fc_w,
                    preferred_element_type=f32) + fc_b              # (B*S, 4D)
        m = jax.nn.gelu(m, approximate=True)                        # GPT-2 gelu_new
        h = h + jnp.dot(m.astype(bf16), fcproj_w,
                        preferred_element_type=f32) + fcproj_b

    # ---- final LN -> mean pool -> regression head ----
    pr = N_LAYER * P_LAYER_ROWS
    lnf_g, lnf_b = prow(pr + 0, D), prow(pr + 1, D)
    head_w = prow(pr + 2, D)                                        # (1, D)
    head_b = prow(pr + 3, 1)                                        # (1, 1)

    hf = _layernorm(h, lnf_g, lnf_b)                                # (B*S, D)
    # mean pool over sequence (matches torch.mean(hidden, dim=1); includes pads)
    pooled = jnp.mean(hf.reshape(B, S, D), axis=1)                  # (B, D)
    # TODO(synk): nn.Dropout(0.1) is identity in eval mode; omitted (no RNG).

    # regression head (D -> 1) as a VPU lane-reduce (not an N=1 MXU matmul)
    logits = jnp.sum(pooled * head_w, axis=-1, keepdims=True) + head_b   # (B, 1)
    if apply_sigmoid:
        logits = jax.nn.sigmoid(logits)
    o_ref[...] = logits.astype(o_ref.dtype)


# ---------------- one-time operand packing (outside the jitted forward) --------
def pack_params(params):
    """Pack all weights into a bf16 matmul slab + an f32 small-param slab."""
    D = N_EMBD

    def pad_cols(a):
        r, c = a.shape
        return jnp.pad(a, ((0, 0), (0, SLAB_COLS - c)))

    w_rows, p_rows = [], []
    for layer in params["layers"]:
        w_rows += [pad_cols(layer["attn_w"]), pad_cols(layer["proj_w"]),
                   pad_cols(layer["fc_w"]), pad_cols(layer["fcproj_w"])]
        p_rows += [pad_cols(layer["ln1_g"].reshape(1, D)),
                   pad_cols(layer["ln1_b"].reshape(1, D)),
                   pad_cols(layer["attn_b"].reshape(1, 3 * D)),
                   pad_cols(layer["proj_b"].reshape(1, D)),
                   pad_cols(layer["ln2_g"].reshape(1, D)),
                   pad_cols(layer["ln2_b"].reshape(1, D)),
                   pad_cols(layer["fc_b"].reshape(1, 4 * D)),
                   pad_cols(layer["fcproj_b"].reshape(1, D))]
    p_rows += [pad_cols(params["lnf_g"].reshape(1, D)),
               pad_cols(params["lnf_b"].reshape(1, D)),
               pad_cols(params["head_w"].reshape(1, D)),
               pad_cols(params["head_b"].reshape(1, 1))]

    wslab = jnp.concatenate(w_rows, axis=0).astype(MXU_DTYPE)       # (2*224, 128) bf16
    pslab = jnp.concatenate(p_rows, axis=0).astype(jnp.float32)     # (20, 128)   f32
    return {"wte": params["wte"].astype(jnp.float32),
            "wpe": params["wpe"].astype(jnp.float32),
            "wslab": wslab, "pslab": pslab}


# ---------------- wrapper: one pallas_call for the whole model ----------------
def gpt2_reward_forward(packed, input_ids, attention_mask=None,
                        apply_sigmoid=False):
    B, S = input_ids.shape
    D = N_EMBD
    if attention_mask is None:
        attention_mask = jnp.ones((B, S), jnp.float32)

    # token + position embedding gather (plain-JAX glue; a single fused XLA op)
    h0 = (packed["wte"][input_ids] + packed["wpe"][:S]).reshape(B * S, D)
    h0 = h0.astype(jnp.float32)

    kern = functools.partial(gpt2_reward_kernel, B=B, S=S,
                             apply_sigmoid=apply_sigmoid)
    vmem = pl.BlockSpec(memory_space=pltpu.MemorySpace.VMEM)
    # Gridless: 4 operands (embeddings, mask, weight slab, param slab), all
    # fully VMEM-resident (~130 KB total), one invocation, no HBM round trips.
    logits = pl.pallas_call(
        kern,
        out_shape=jax.ShapeDtypeStruct((B, 1), jnp.float32),
        in_specs=[vmem, vmem, vmem, vmem],
        out_specs=vmem,
        scratch_shapes=[pltpu.VMEM((B * S, D), jnp.float32)],   # head-output slab
    )(h0, attention_mask.astype(jnp.float32), packed["wslab"], packed["pslab"])
    return logits[:, 0]                                          # squeeze(-1) -> (B,)


# ---------------- deterministic parameter init ----------------
def init_params(key):
    def normal(k, shape, std=0.02):
        return jax.random.normal(k, shape, jnp.float32) * std

    k_it = iter(jax.random.split(key, 64))
    params = {
        "wte": normal(next(k_it), (VOCAB, N_EMBD)),
        "wpe": normal(next(k_it), (N_POS, N_EMBD), std=0.01),
        "layers": [],
        "lnf_g": jnp.ones((N_EMBD,), jnp.float32),
        "lnf_b": jnp.zeros((N_EMBD,), jnp.float32),
    }
    for _ in range(N_LAYER):
        params["layers"].append({
            "ln1_g": jnp.ones((N_EMBD,), jnp.float32),
            "ln1_b": jnp.zeros((N_EMBD,), jnp.float32),
            "attn_w": normal(next(k_it), (N_EMBD, 3 * N_EMBD)),
            "attn_b": jnp.zeros((3 * N_EMBD,), jnp.float32),
            "proj_w": normal(next(k_it), (N_EMBD, N_EMBD)),
            "proj_b": jnp.zeros((N_EMBD,), jnp.float32),
            "ln2_g": jnp.ones((N_EMBD,), jnp.float32),
            "ln2_b": jnp.zeros((N_EMBD,), jnp.float32),
            "fc_w": normal(next(k_it), (N_EMBD, 4 * N_EMBD)),
            "fc_b": jnp.zeros((4 * N_EMBD,), jnp.float32),
            "fcproj_w": normal(next(k_it), (4 * N_EMBD, N_EMBD)),
            "fcproj_b": jnp.zeros((N_EMBD,), jnp.float32),
        })
    # regression head: xavier_uniform weight, zero bias (as in the PyTorch __init__)
    limit = math.sqrt(6.0 / (N_EMBD + 1))
    params["head_w"] = jax.random.uniform(next(k_it), (N_EMBD, 1), jnp.float32,
                                          -limit, limit)
    params["head_b"] = jnp.zeros((1,), jnp.float32)
    return params


if __name__ == "__main__":
    # TODO(synk): pretrained-weight loading / tokenizer resize have no kernel
    # equivalent; weights are synthetic and deterministic.
    key = jax.random.PRNGKey(0)
    pkey, dkey = jax.random.split(key)
    params = init_params(pkey)
    packed = pack_params(params)          # one-time packing + bf16 cast (not jitted)

    B, S = 2, 8
    input_ids = jax.random.randint(dkey, (B, S), 0, VOCAB)
    attention_mask = jnp.ones((B, S), jnp.float32)

    fwd = jax.jit(gpt2_reward_forward, static_argnames=("apply_sigmoid",))
    logits = fwd(packed, input_ids, attention_mask, apply_sigmoid=False)
    probs = fwd(packed, input_ids, attention_mask, apply_sigmoid=True)
    jax.block_until_ready((logits, probs))

    assert logits.shape == (B,), logits.shape
    assert probs.shape == (B,), probs.shape
    assert bool(jnp.all((probs >= 0.0) & (probs <= 1.0)))
    assert bool(jnp.all(jnp.isfinite(logits)))
    print("KERNEL_OK")
</pallas_src>

<mosaic_0001>
module attributes {stable_mosaic.version = 11 : i64} {
  func.func @gpt2_reward_kernel(%arg0: memref<16x32xf32, #tpu.memory_space<vmem>>, %arg1: memref<2x8xf32, #tpu.memory_space<vmem>>, %arg2: memref<448x128xbf16, #tpu.memory_space<vmem>>, %arg3: memref<20x128xf32, #tpu.memory_space<vmem>>, %arg4: memref<2x1xf32, #tpu.memory_space<vmem>>, %arg5: memref<16x32xf32, #tpu.memory_space<vmem>>) attributes {dimension_semantics = [], scalar_prefetch = 0 : i64, scratch_operands = 1 : i64, tpu.core_type = #tpu.core_type<tc>} {
    %c0 = arith.constant 0 : index
    %c0_0 = arith.constant 0 : index
    %0 = vector.load %arg0[%c0, %c0_0] : memref<16x32xf32, #tpu.memory_space<vmem>>, vector<16x32xf32>
    %c0_1 = arith.constant 0 : index
    %c0_2 = arith.constant 0 : index
    %1 = vector.load %arg1[%c0_1, %c0_2] : memref<2x8xf32, #tpu.memory_space<vmem>>, vector<2x8xf32>
    %2 = tpu.iota {dimensions = array<i32: 0>} : vector<8x8xi32>
    %3 = tpu.iota {dimensions = array<i32: 1>} : vector<8x8xi32>
    %4 = arith.cmpi sle, %3, %2 : vector<8x8xi32>
    %cst = arith.constant 0.000000e+00 : f32
    %cst_3 = arith.constant -1.000000e+09 : f32
    %5 = vector.broadcast %cst : f32 to vector<8x8xf32>
    %6 = vector.broadcast %cst_3 : f32 to vector<8x8xf32>
    %7 = arith.select %4, %5, %6 : vector<8x8xi1>, vector<8x8xf32>
    %cst_4 = arith.constant 1.000000e+00 : f32
    %8 = vector.broadcast %cst_4 : f32 to vector<2x8xf32>
    %9 = arith.subf %8, %1 : vector<2x8xf32>
    %cst_5 = arith.constant -1.000000e+09 : f32
    %10 = vector.broadcast %cst_5 : f32 to vector<2x8xf32>
    %11 = arith.mulf %9, %10 : vector<2x8xf32>
    %12 = vector.shape_cast %7 : vector<8x8xf32> to vector<1x8x8xf32>
    %13 = vector.shape_cast %12 : vector<1x8x8xf32> to vector<1x8x8xf32>
    %14 = vector.broadcast %13 : vector<1x8x8xf32> to vector<2x8x8xf32>
    %15 = vector.shape_cast %11 : vector<2x8xf32> to vector<2x1x8xf32>
    %16 = vector.shape_cast %15 : vector<2x1x8xf32> to vector<2x1x8xf32>
    %17 = vector.broadcast %16 : vector<2x1x8xf32> to vector<2x8x8xf32>
    %18 = arith.addf %14, %17 : vector<2x8x8xf32>
    %c0_6 = arith.constant 0 : index
    %c0_7 = arith.constant 0 : index
    %19 = vector.load %arg3[%c0_6, %c0_7] : memref<20x128xf32, #tpu.memory_space<vmem>>, vector<1x32xf32>
    %c1 = arith.constant 1 : index
    %c0_8 = arith.constant 0 : index
    %20 = vector.load %arg3[%c1, %c0_8] : memref<20x128xf32, #tpu.memory_space<vmem>>, vector<1x32xf32>
    %c2 = arith.constant 2 : index
    %c0_9 = arith.constant 0 : index
    %21 = vector.load %arg3[%c2, %c0_9] : memref<20x128xf32, #tpu.memory_space<vmem>>, vector<1x96xf32>
    %c3 = arith.constant 3 : index
    %c0_10 = arith.constant 0 : index
    %22 = vector.load %arg3[%c3, %c0_10] : memref<20x128xf32, #tpu.memory_space<vmem>>, vector<1x32xf32>
    %c4 = arith.constant 4 : index
    %c0_11 = arith.constant 0 : index
    %23 = vector.load %arg3[%c4, %c0_11] : memref<20x128xf32, #tpu.memory_space<vmem>>, vector<1x32xf32>
    %c5 = arith.constant 5 : index
    %c0_12 = arith.constant 0 : index
    %24 = vector.load %arg3[%c5, %c0_12] : memref<20x128xf32, #tpu.memory_space<vmem>>, vector<1x32xf32>
    %c6 = arith.constant 6 : index
    %c0_13 = arith.constant 0 : index
    %25 = vector.load %arg3[%c6, %c0_13] : memref<20x128xf32, #tpu.memory_space<vmem>>, vector<1x128xf32>
    %c7 = arith.constant 7 : index
    %c0_14 = arith.constant 0 : index
    %26 = vector.load %arg3[%c7, %c0_14] : memref<20x128xf32, #tpu.memory_space<vmem>>, vector<1x32xf32>
    %c0_15 = arith.constant 0 : index
    %c0_16 = arith.constant 0 : index
    %27 = vector.load %arg2[%c0_15, %c0_16] : memref<448x128xbf16, #tpu.memory_space<vmem>>, vector<32x96xbf16>
    %c32 = arith.constant 32 : index
    %c0_17 = arith.constant 0 : index
    %28 = vector.load %arg2[%c32, %c0_17] : memref<448x128xbf16, #tpu.memory_space<vmem>>, vector<32x32xbf16>
    %c64 = arith.constant 64 : index
    %c0_18 = arith.constant 0 : index
    %29 = vector.load %arg2[%c64, %c0_18] : memref<448x128xbf16, #tpu.memory_space<vmem>>, vector<32x128xbf16>
    %c96 = arith.constant 96 : index
    %c0_19 = arith.constant 0 : index
    %30 = vector.load %arg2[%c96, %c0_19] : memref<448x128xbf16, #tpu.memory_space<vmem>>, vector<128x32xbf16>
    %cst_20 = arith.constant dense<0.000000e+00> : vector<16xf32>
    %31 = vector.multi_reduction <add>, %0, %cst_20 [1] : vector<16x32xf32> to vector<16xf32>
    %32 = vector.shape_cast %31 : vector<16xf32> to vector<16x1xf32>
    %cst_21 = arith.constant 3.200000e+01 : f32
    %33 = vector.broadcast %cst_21 : f32 to vector<16x1xf32>
    %34 = arith.divf %32, %33 : vector<16x1xf32>
    %35 = vector.broadcast %34 : vector<16x1xf32> to vector<16x32xf32>
    %36 = arith.subf %0, %35 : vector<16x32xf32>
    %37 = arith.mulf %36, %36 : vector<16x32xf32>
    %cst_22 = arith.constant dense<0.000000e+00> : vector<16xf32>
    %38 = vector.multi_reduction <add>, %37, %cst_22 [1] : vector<16x32xf32> to vector<16xf32>
    %39 = vector.shape_cast %38 : vector<16xf32> to vector<16x1xf32>
    %cst_23 = arith.constant 3.200000e+01 : f32
    %40 = vector.broadcast %cst_23 : f32 to vector<16x1xf32>
    %41 = arith.divf %39, %40 : vector<16x1xf32>
    %42 = vector.broadcast %34 : vector<16x1xf32> to vector<16x32xf32>
    %43 = arith.subf %0, %42 : vector<16x32xf32>
    %cst_24 = arith.constant 9.99999974E-6 : f32
    %44 = vector.broadcast %cst_24 : f32 to vector<16x1xf32>
    %45 = arith.addf %41, %44 : vector<16x1xf32>
    %46 = math.rsqrt %45 : vector<16x1xf32>
    %47 = vector.broadcast %46 : vector<16x1xf32> to vector<16x32xf32>
    %48 = arith.mulf %43, %47 : vector<16x32xf32>
    %49 = vector.broadcast %19 : vector<1x32xf32> to vector<16x32xf32>
    %50 = arith.mulf %48, %49 : vector<16x32xf32>
    %51 = vector.broadcast %20 : vector<1x32xf32> to vector<16x32xf32>
    %52 = arith.addf %50, %51 : vector<16x32xf32>
    %53 = arith.truncf %52 : vector<16x32xf32> to vector<16x32xbf16>
    %cst_25 = arith.constant dense<0.000000e+00> : vector<16x96xf32>
    %54 = tpu.matmul %53, %27, %cst_25 {dimension_numbers = #tpu.dot_dimension_numbers<[1], [0], [0], [1], [0, 0, 1, 1], [], []>} : vector<16x32xbf16>, vector<32x96xbf16>, vector<16x96xf32> -> vector<16x96xf32>
    %55 = vector.broadcast %21 : vector<1x96xf32> to vector<16x96xf32>
    %56 = arith.addf %54, %55 : vector<16x96xf32>
    %57 = vector.shape_cast %56 : vector<16x96xf32> to vector<2x8x96xf32>
    %58 = vector.extract_strided_slice %57 {offsets = [0, 0, 0], sizes = [2, 8, 8], strides = [1, 1, 1]} : vector<2x8x96xf32> to vector<2x8x8xf32>
    %59 = arith.truncf %58 : vector<2x8x8xf32> to vector<2x8x8xbf16>
    %60 = vector.extract_strided_slice %57 {offsets = [0, 0, 32], sizes = [2, 8, 8], strides = [1, 1, 1]} : vector<2x8x96xf32> to vector<2x8x8xf32>
    %61 = arith.truncf %60 : vector<2x8x8xf32> to vector<2x8x8xbf16>
    %62 = vector.extract_strided_slice %57 {offsets = [0, 0, 64], sizes = [2, 8, 8], strides = [1, 1, 1]} : vector<2x8x96xf32> to vector<2x8x8xf32>
    %63 = arith.truncf %62 : vector<2x8x8xf32> to vector<2x8x8xbf16>
    "tpu.trace_start"() <{level = 10 : i32, message = "bqd,bkd->bqk"}> : () -> ()
    %cst_26 = arith.constant dense<0.000000e+00> : vector<2x8x8xf32>
    %64 = tpu.matmul %59, %61, %cst_26 {dimension_numbers = #tpu.dot_dimension_numbers<[2], [2], [1], [1], [0, 0, 0, 1, 1, 1], [0], [0]>} : vector<2x8x8xbf16>, vector<2x8x8xbf16>, vector<2x8x8xf32> -> vector<2x8x8xf32>
    "tpu.trace_stop"() : () -> ()
    %cst_27 = arith.constant 0.353553385 : f32
    %65 = vector.broadcast %cst_27 : f32 to vector<2x8x8xf32>
    %66 = arith.mulf %64, %65 : vector<2x8x8xf32>
    %67 = arith.addf %66, %18 : vector<2x8x8xf32>
    %cst_28 = arith.constant dense<0xFF800000> : vector<2x8xf32>
    %68 = vector.multi_reduction <maximumf>, %67, %cst_28 [2] : vector<2x8x8xf32> to vector<2x8xf32>
    %69 = vector.shape_cast %68 : vector<2x8xf32> to vector<2x8x1xf32>
    %70 = vector.broadcast %69 : vector<2x8x1xf32> to vector<2x8x8xf32>
    %71 = arith.subf %67, %70 : vector<2x8x8xf32>
    %72 = math.exp %71 : vector<2x8x8xf32>
    %cst_29 = arith.constant dense<0.000000e+00> : vector<2x8xf32>
    %73 = vector.multi_reduction <add>, %72, %cst_29 [2] : vector<2x8x8xf32> to vector<2x8xf32>
    %74 = vector.shape_cast %73 : vector<2x8xf32> to vector<2x8x1xf32>
    %75 = vector.broadcast %74 : vector<2x8x1xf32> to vector<2x8x8xf32>
    %76 = arith.divf %72, %75 : vector<2x8x8xf32>
    %77 = arith.truncf %76 : vector<2x8x8xf32> to vector<2x8x8xbf16>
    "tpu.trace_start"() <{level = 10 : i32, message = "bqk,bkd->bqd"}> : () -> ()
    %cst_30 = arith.constant dense<0.000000e+00> : vector<2x8x8xf32>
    %78 = tpu.matmul %77, %63, %cst_30 {dimension_numbers = #tpu.dot_dimension_numbers<[2], [1], [1], [2], [0, 0, 0, 1, 1, 2], [0], [0]>} : vector<2x8x8xbf16>, vector<2x8x8xbf16>, vector<2x8x8xf32> -> vector<2x8x8xf32>
    "tpu.trace_stop"() : () -> ()
    %79 = vector.shape_cast %78 : vector<2x8x8xf32> to vector<16x8xf32>
    %c0_31 = arith.constant 0 : index
    %c0_32 = arith.constant 0 : index
    %80 = vector.load %arg5[%c0_31, %c0_32] : memref<16x32xf32, #tpu.memory_space<vmem>>, vector<16x8xf32>
    tpu.vector_store %arg5[%c0_31, %c0_32], %79 {strides = array<i32>} : memref<16x32xf32, #tpu.memory_space<vmem>>, vector<16x8xf32>,
    %81 = vector.extract_strided_slice %57 {offsets = [0, 0, 8], sizes = [2, 8, 8], strides = [1, 1, 1]} : vector<2x8x96xf32> to vector<2x8x8xf32>
    %82 = arith.truncf %81 : vector<2x8x8xf32> to vector<2x8x8xbf16>
    %83 = vector.extract_strided_slice %57 {offsets = [0, 0, 40], sizes = [2, 8, 8], strides = [1, 1, 1]} : vector<2x8x96xf32> to vector<2x8x8xf32>
    %84 = arith.truncf %83 : vector<2x8x8xf32> to vector<2x8x8xbf16>
    %85 = vector.extract_strided_slice %57 {offsets = [0, 0, 72], sizes = [2, 8, 8], strides = [1, 1, 1]} : vector<2x8x96xf32> to vector<2x8x8xf32>
    %86 = arith.truncf %85 : vector<2x8x8xf32> to vector<2x8x8xbf16>
    "tpu.trace_start"() <{level = 10 : i32, message = "bqd,bkd->bqk"}> : () -> ()
    %cst_33 = arith.constant dense<0.000000e+00> : vector<2x8x8xf32>
    %87 = tpu.matmul %82, %84, %cst_33 {dimension_numbers = #tpu.dot_dimension_numbers<[2], [2], [1], [1], [0, 0, 0, 1, 1, 1], [0], [0]>} : vector<2x8x8xbf16>, vector<2x8x8xbf16>, vector<2x8x8xf32> -> vector<2x8x8xf32>
    "tpu.trace_stop"() : () -> ()
    %cst_34 = arith.constant 0.353553385 : f32
    %88 = vector.broadcast %cst_34 : f32 to vector<2x8x8xf32>
    %89 = arith.mulf %87, %88 : vector<2x8x8xf32>
    %90 = arith.addf %89, %18 : vector<2x8x8xf32>
    %cst_35 = arith.constant dense<0xFF800000> : vector<2x8xf32>
    %91 = vector.multi_reduction <maximumf>, %90, %cst_35 [2] : vector<2x8x8xf32> to vector<2x8xf32>
    %92 = vector.shape_cast %91 : vector<2x8xf32> to vector<2x8x1xf32>
    %93 = vector.broadcast %92 : vector<2x8x1xf32> to vector<2x8x8xf32>
    %94 = arith.subf %90, %93 : vector<2x8x8xf32>
    %95 = math.exp %94 : vector<2x8x8xf32>
    %cst_36 = arith.constant dense<0.000000e+00> : vector<2x8xf32>
    %96 = vector.multi_reduction <add>, %95, %cst_36 [2] : vector<2x8x8xf32> to vector<2x8xf32>
    %97 = vector.shape_cast %96 : vector<2x8xf32> to vector<2x8x1xf32>
    %98 = vector.broadcast %97 : vector<2x8x1xf32> to vector<2x8x8xf32>
    %99 = arith.divf %95, %98 : vector<2x8x8xf32>
    %100 = arith.truncf %99 : vector<2x8x8xf32> to vector<2x8x8xbf16>
    "tpu.trace_start"() <{level = 10 : i32, message = "bqk,bkd->bqd"}> : () -> ()
    %cst_37 = arith.constant dense<0.000000e+00> : vector<2x8x8xf32>
    %101 = tpu.matmul %100, %86, %cst_37 {dimension_numbers = #tpu.dot_dimension_numbers<[2], [1], [1], [2], [0, 0, 0, 1, 1, 2], [0], [0]>} : vector<2x8x8xbf16>, vector<2x8x8xbf16>, vector<2x8x8xf32> -> vector<2x8x8xf32>
    "tpu.trace_stop"() : () -> ()
    %102 = vector.shape_cast %101 : vector<2x8x8xf32> to vector<16x8xf32>
    %c0_38 = arith.constant 0 : index
    %c8 = arith.constant 8 : index
    %103 = vector.load %arg5[%c0_38, %c8] : memref<16x32xf32, #tpu.memory_space<vmem>>, vector<16x8xf32>
    tpu.vector_store %arg5[%c0_38, %c8], %102 {strides = array<i32>} : memref<16x32xf32, #tpu.memory_space<vmem>>, vector<16x8xf32>,
    %104 = vector.extract_strided_slice %57 {offsets = [0, 0, 16], sizes = [2, 8, 8], strides = [1, 1, 1]} : vector<2x8x96xf32> to vector<2x8x8xf32>
    %105 = arith.truncf %104 : vector<2x8x8xf32> to vector<2x8x8xbf16>
    %106 = vector.extract_strided_slice %57 {offsets = [0, 0, 48], sizes = [2, 8, 8], strides = [1, 1, 1]} : vector<2x8x96xf32> to vector<2x8x8xf32>
    %107 = arith.truncf %106 : vector<2x8x8xf32> to vector<2x8x8xbf16>
    %108 = vector.extract_strided_slice %57 {offsets = [0, 0, 80], sizes = [2, 8, 8], strides = [1, 1, 1]} : vector<2x8x96xf32> to vector<2x8x8xf32>
    %109 = arith.truncf %108 : vector<2x8x8xf32> to vector<2x8x8xbf16>
    "tpu.trace_start"() <{level = 10 : i32, message = "bqd,bkd->bqk"}> : () -> ()
    %cst_39 = arith.constant dense<0.000000e+00> : vector<2x8x8xf32>
    %110 = tpu.matmul %105, %107, %cst_39 {dimension_numbers = #tpu.dot_dimension_numbers<[2], [2], [1], [1], [0, 0, 0, 1, 1, 1], [0], [0]>} : vector<2x8x8xbf16>, vector<2x8x8xbf16>, vector<2x8x8xf32> -> vector<2x8x8xf32>
    "tpu.trace_stop"() : () -> ()
    %cst_40 = arith.constant 0.353553385 : f32
    %111 = vector.broadcast %cst_40 : f32 to vector<2x8x8xf32>
    %112 = arith.mulf %110, %111 : vector<2x8x8xf32>
    %113 = arith.addf %112, %18 : vector<2x8x8xf32>
    %cst_41 = arith.constant dense<0xFF800000> : vector<2x8xf32>
    %114 = vector.multi_reduction <maximumf>, %113, %cst_41 [2] : vector<2x8x8xf32> to vector<2x8xf32>
    %115 = vector.shape_cast %114 : vector<2x8xf32> to vector<2x8x1xf32>
    %116 = vector.broadcast %115 : vector<2x8x1xf32> to vector<2x8x8xf32>
    %117 = arith.subf %113, %116 : vector<2x8x8xf32>
    %118 = math.exp %117 : vector<2x8x8xf32>
    %cst_42 = arith.constant dense<0.000000e+00> : vector<2x8xf32>
    %119 = vector.multi_reduction <add>, %118, %cst_42 [2] : vector<2x8x8xf32> to vector<2x8xf32>
    %120 = vector.shape_cast %119 : vector<2x8xf32> to vector<2x8x1xf32>
    %121 = vector.broadcast %120 : vector<2x8x1xf32> to vector<2x8x8xf32>
    %122 = arith.divf %118, %121 : vector<2x8x8xf32>
    %123 = arith.truncf %122 : vector<2x8x8xf32> to vector<2x8x8xbf16>
    "tpu.trace_start"() <{level = 10 : i32, message = "bqk,bkd->bqd"}> : () -> ()
    %cst_43 = arith.constant dense<0.000000e+00> : vector<2x8x8xf32>
    %124 = tpu.matmul %123, %109, %cst_43 {dimension_numbers = #tpu.dot_dimension_numbers<[2], [1], [1], [2], [0, 0, 0, 1, 1, 2], [0], [0]>} : vector<2x8x8xbf16>, vector<2x8x8xbf16>, vector<2x8x8xf32> -> vector<2x8x8xf32>
    "tpu.trace_stop"() : () -> ()
    %125 = vector.shape_cast %124 : vector<2x8x8xf32> to vector<16x8xf32>
    %c0_44 = arith.constant 0 : index
    %c16 = arith.constant 16 : index
    %126 = vector.load %arg5[%c0_44, %c16] : memref<16x32xf32, #tpu.memory_space<vmem>>, vector<16x8xf32>
    tpu.vector_store %arg5[%c0_44, %c16], %125 {strides = array<i32>} : memref<16x32xf32, #tpu.memory_space<vmem>>, vector<16x8xf32>,
    %127 = vector.extract_strided_slice %57 {offsets = [0, 0, 24], sizes = [2, 8, 8], strides = [1, 1, 1]} : vector<2x8x96xf32> to vector<2x8x8xf32>
    %128 = arith.truncf %127 : vector<2x8x8xf32> to vector<2x8x8xbf16>
    %129 = vector.extract_strided_slice %57 {offsets = [0, 0, 56], sizes = [2, 8, 8], strides = [1, 1, 1]} : vector<2x8x96xf32> to vector<2x8x8xf32>
    %130 = arith.truncf %129 : vector<2x8x8xf32> to vector<2x8x8xbf16>
    %131 = vector.extract_strided_slice %57 {offsets = [0, 0, 88], sizes = [2, 8, 8], strides = [1, 1, 1]} : vector<2x8x96xf32> to vector<2x8x8xf32>
    %132 = arith.truncf %131 : vector<2x8x8xf32> to vector<2x8x8xbf16>
    "tpu.trace_start"() <{level = 10 : i32, message = "bqd,bkd->bqk"}> : () -> ()
    %cst_45 = arith.constant dense<0.000000e+00> : vector<2x8x8xf32>
    %133 = tpu.matmul %128, %130, %cst_45 {dimension_numbers = #tpu.dot_dimension_numbers<[2], [2], [1], [1], [0, 0, 0, 1, 1, 1], [0], [0]>} : vector<2x8x8xbf16>, vector<2x8x8xbf16>, vector<2x8x8xf32> -> vector<2x8x8xf32>
    "tpu.trace_stop"() : () -> ()
    %cst_46 = arith.constant 0.353553385 : f32
    %134 = vector.broadcast %cst_46 : f32 to vector<2x8x8xf32>
    %135 = arith.mulf %133, %134 : vector<2x8x8xf32>
    %136 = arith.addf %135, %18 : vector<2x8x8xf32>
    %cst_47 = arith.constant dense<0xFF800000> : vector<2x8xf32>
    %137 = vector.multi_reduction <maximumf>, %136, %cst_47 [2] : vector<2x8x8xf32> to vector<2x8xf32>
    %138 = vector.shape_cast %137 : vector<2x8xf32> to vector<2x8x1xf32>
    %139 = vector.broadcast %138 : vector<2x8x1xf32> to vector<2x8x8xf32>
    %140 = arith.subf %136, %139 : vector<2x8x8xf32>
    %141 = math.exp %140 : vector<2x8x8xf32>
    %cst_48 = arith.constant dense<0.000000e+00> : vector<2x8xf32>
    %142 = vector.multi_reduction <add>, %141, %cst_48 [2] : vector<2x8x8xf32> to vector<2x8xf32>
    %143 = vector.shape_cast %142 : vector<2x8xf32> to vector<2x8x1xf32>
    %144 = vector.broadcast %143 : vector<2x8x1xf32> to vector<2x8x8xf32>
    %145 = arith.divf %141, %144 : vector<2x8x8xf32>
    %146 = arith.truncf %145 : vector<2x8x8xf32> to vector<2x8x8xbf16>
    "tpu.trace_start"() <{level = 10 : i32, message = "bqk,bkd->bqd"}> : () -> ()
    %cst_49 = arith.constant dense<0.000000e+00> : vector<2x8x8xf32>
    %147 = tpu.matmul %146, %132, %cst_49 {dimension_numbers = #tpu.dot_dimension_numbers<[2], [1], [1], [2], [0, 0, 0, 1, 1, 2], [0], [0]>} : vector<2x8x8xbf16>, vector<2x8x8xbf16>, vector<2x8x8xf32> -> vector<2x8x8xf32>
    "tpu.trace_stop"() : () -> ()
    %148 = vector.shape_cast %147 : vector<2x8x8xf32> to vector<16x8xf32>
    %c0_50 = arith.constant 0 : index
    %c24 = arith.constant 24 : index
    %149 = vector.load %arg5[%c0_50, %c24] : memref<16x32xf32, #tpu.memory_space<vmem>>, vector<16x8xf32>
    tpu.vector_store %arg5[%c0_50, %c24], %148 {strides = array<i32>} : memref<16x32xf32, #tpu.memory_space<vmem>>, vector<16x8xf32>,
    %c0_51 = arith.constant 0 : index
    %c0_52 = arith.constant 0 : index
    %150 = vector.load %arg5[%c0_51, %c0_52] : memref<16x32xf32, #tpu.memory_space<vmem>>, vector<16x32xf32>
    %151 = arith.truncf %150 : vector<16x32xf32> to vector<16x32xbf16>
    %cst_53 = arith.constant dense<0.000000e+00> : vector<16x32xf32>
    %152 = tpu.matmul %151, %28, %cst_53 {dimension_numbers = #tpu.dot_dimension_numbers<[1], [0], [0], [1], [0, 0, 1, 1], [], []>} : vector<16x32xbf16>, vector<32x32xbf16>, vector<16x32xf32> -> vector<16x32xf32>
    %153 = arith.addf %0, %152 : vector<16x32xf32>
    %154 = vector.broadcast %22 : vector<1x32xf32> to vector<16x32xf32>
    %155 = arith.addf %153, %154 : vector<16x32xf32>
    %cst_54 = arith.constant dense<0.000000e+00> : vector<16xf32>
    %156 = vector.multi_reduction <add>, %155, %cst_54 [1] : vector<16x32xf32> to vector<16xf32>
    %157 = vector.shape_cast %156 : vector<16xf32> to vector<16x1xf32>
    %cst_55 = arith.constant 3.200000e+01 : f32
    %158 = vector.broadcast %cst_55 : f32 to vector<16x1xf32>
    %159 = arith.divf %157, %158 : vector<16x1xf32>
    %160 = vector.broadcast %159 : vector<16x1xf32> to vector<16x32xf32>
    %161 = arith.subf %155, %160 : vector<16x32xf32>
    %162 = arith.mulf %161, %161 : vector<16x32xf32>
    %cst_56 = arith.constant dense<0.000000e+00> : vector<16xf32>
    %163 = vector.multi_reduction <add>, %162, %cst_56 [1] : vector<16x32xf32> to vector<16xf32>
    %164 = vector.shape_cast %163 : vector<16xf32> to vector<16x1xf32>
    %cst_57 = arith.constant 3.200000e+01 : f32
    %165 = vector.broadcast %cst_57 : f32 to vector<16x1xf32>
    %166 = arith.divf %164, %165 : vector<16x1xf32>
    %167 = vector.broadcast %159 : vector<16x1xf32> to vector<16x32xf32>
    %168 = arith.subf %155, %167 : vector<16x32xf32>
    %cst_58 = arith.constant 9.99999974E-6 : f32
    %169 = vector.broadcast %cst_58 : f32 to vector<16x1xf32>
    %170 = arith.addf %166, %169 : vector<16x1xf32>
    %171 = math.rsqrt %170 : vector<16x1xf32>
    %172 = vector.broadcast %171 : vector<16x1xf32> to vector<16x32xf32>
    %173 = arith.mulf %168, %172 : vector<16x32xf32>
    %174 = vector.broadcast %23 : vector<1x32xf32> to vector<16x32xf32>
    %175 = arith.mulf %173, %174 : vector<16x32xf32>
    %176 = vector.broadcast %24 : vector<1x32xf32> to vector<16x32xf32>
    %177 = arith.addf %175, %176 : vector<16x32xf32>
    %178 = arith.truncf %177 : vector<16x32xf32> to vector<16x32xbf16>
    %cst_59 = arith.constant dense<0.000000e+00> : vector<16x128xf32>
    %179 = tpu.matmul %178, %29, %cst_59 {dimension_numbers = #tpu.dot_dimension_numbers<[1], [0], [0], [1], [0, 0, 1, 1], [], []>} : vector<16x32xbf16>, vector<32x128xbf16>, vector<16x128xf32> -> vector<16x128xf32>
    %180 = vector.broadcast %25 : vector<1x128xf32> to vector<16x128xf32>
    %181 = arith.addf %179, %180 : vector<16x128xf32>
    %182 = arith.mulf %181, %181 : vector<16x128xf32>
    %183 = arith.mulf %181, %182 : vector<16x128xf32>
    %cst_60 = arith.constant 4.471500e-02 : f32
    %184 = vector.broadcast %cst_60 : f32 to vector<16x128xf32>
    %185 = arith.mulf %184, %183 : vector<16x128xf32>
    %186 = arith.addf %181, %185 : vector<16x128xf32>
    %cst_61 = arith.constant 0.797884583 : f32
    %187 = vector.broadcast %cst_61 : f32 to vector<16x128xf32>
    %188 = arith.mulf %187, %186 : vector<16x128xf32>
    %189 = math.tanh %188 : vector<16x128xf32>
    %cst_62 = arith.constant 1.000000e+00 : f32
    %190 = vector.broadcast %cst_62 : f32 to vector<16x128xf32>
    %191 = arith.addf %190, %189 : vector<16x128xf32>
    %cst_63 = arith.constant 5.000000e-01 : f32
    %192 = vector.broadcast %cst_63 : f32 to vector<16x128xf32>
    %193 = arith.mulf %192, %191 : vector<16x128xf32>
    %194 = arith.mulf %181, %193 : vector<16x128xf32>
    %195 = arith.truncf %194 : vector<16x128xf32> to vector<16x128xbf16>
    %cst_64 = arith.constant dense<0.000000e+00> : vector<16x32xf32>
    %196 = tpu.matmul %195, %30, %cst_64 {dimension_numbers = #tpu.dot_dimension_numbers<[1], [0], [0], [1], [0, 0, 1, 1], [], []>} : vector<16x128xbf16>, vector<128x32xbf16>, vector<16x32xf32> -> vector<16x32xf32>
    %197 = arith.addf %155, %196 : vector<16x32xf32>
    %198 = vector.broadcast %26 : vector<1x32xf32> to vector<16x32xf32>
    %199 = arith.addf %197, %198 : vector<16x32xf32>
    %c8_65 = arith.constant 8 : index
    %c0_66 = arith.constant 0 : index
    %200 = vector.load %arg3[%c8_65, %c0_66] : memref<20x128xf32, #tpu.memory_space<vmem>>, vector<1x32xf32>
    %c9 = arith.constant 9 : index
    %c0_67 = arith.constant 0 : index
    %201 = vector.load %arg3[%c9, %c0_67] : memref<20x128xf32, #tpu.memory_space<vmem>>, vector<1x32xf32>
    %c10 = arith.constant 10 : index
    %c0_68 = arith.constant 0 : index
    %202 = vector.load %arg3[%c10, %c0_68] : memref<20x128xf32, #tpu.memory_space<vmem>>, vector<1x96xf32>
    %c11 = arith.constant 11 : index
    %c0_69 = arith.constant 0 : index
    %203 = vector.load %arg3[%c11, %c0_69] : memref<20x128xf32, #tpu.memory_space<vmem>>, vector<1x32xf32>
    %c12 = arith.constant 12 : index
    %c0_70 = arith.constant 0 : index
    %204 = vector.load %arg3[%c12, %c0_70] : memref<20x128xf32, #tpu.memory_space<vmem>>, vector<1x32xf32>
    %c13 = arith.constant 13 : index
    %c0_71 = arith.constant 0 : index
    %205 = vector.load %arg3[%c13, %c0_71] : memref<20x128xf32, #tpu.memory_space<vmem>>, vector<1x32xf32>
    %c14 = arith.constant 14 : index
    %c0_72 = arith.constant 0 : index
    %206 = vector.load %arg3[%c14, %c0_72] : memref<20x128xf32, #tpu.memory_space<vmem>>, vector<1x128xf32>
    %c15 = arith.constant 15 : index
    %c0_73 = arith.constant 0 : index
    %207 = vector.load %arg3[%c15, %c0_73] : memref<20x128xf32, #tpu.memory_space<vmem>>, vector<1x32xf32>
    %c224 = arith.constant 224 : index
    %c0_74 = arith.constant 0 : index
    %208 = vector.load %arg2[%c224, %c0_74] : memref<448x128xbf16, #tpu.memory_space<vmem>>, vector<32x96xbf16>
    %c256 = arith.constant 256 : index
    %c0_75 = arith.constant 0 : index
    %209 = vector.load %arg2[%c256, %c0_75] : memref<448x128xbf16, #tpu.memory_space<vmem>>, vector<32x32xbf16>
    %c288 = arith.constant 288 : index
    %c0_76 = arith.constant 0 : index
    %210 = vector.load %arg2[%c288, %c0_76] : memref<448x128xbf16, #tpu.memory_space<vmem>>, vector<32x128xbf16>
    %c320 = arith.constant 320 : index
    %c0_77 = arith.constant 0 : index
    %211 = vector.load %arg2[%c320, %c0_77] : memref<448x128xbf16, #tpu.memory_space<vmem>>, vector<128x32xbf16>
    %cst_78 = arith.constant dense<0.000000e+00> : vector<16xf32>
    %212 = vector.multi_reduction <add>, %199, %cst_78 [1] : vector<16x32xf32> to vector<16xf32>
    %213 = vector.shape_cast %212 : vector<16xf32> to vector<16x1xf32>
    %cst_79 = arith.constant 3.200000e+01 : f32
    %214 = vector.broadcast %cst_79 : f32 to vector<16x1xf32>
    %215 = arith.divf %213, %214 : vector<16x1xf32>
    %216 = vector.broadcast %215 : vector<16x1xf32> to vector<16x32xf32>
    %217 = arith.subf %199, %216 : vector<16x32xf32>
    %218 = arith.mulf %217, %217 : vector<16x32xf32>
    %cst_80 = arith.constant dense<0.000000e+00> : vector<16xf32>
    %219 = vector.multi_reduction <add>, %218, %cst_80 [1] : vector<16x32xf32> to vector<16xf32>
    %220 = vector.shape_cast %219 : vector<16xf32> to vector<16x1xf32>
    %cst_81 = arith.constant 3.200000e+01 : f32
    %221 = vector.broadcast %cst_81 : f32 to vector<16x1xf32>
    %222 = arith.divf %220, %221 : vector<16x1xf32>
    %223 = vector.broadcast %215 : vector<16x1xf32> to vector<16x32xf32>
    %224 = arith.subf %199, %223 : vector<16x32xf32>
    %cst_82 = arith.constant 9.99999974E-6 : f32
    %225 = vector.broadcast %cst_82 : f32 to vector<16x1xf32>
    %226 = arith.addf %222, %225 : vector<16x1xf32>
    %227 = math.rsqrt %226 : vector<16x1xf32>
    %228 = vector.broadcast %227 : vector<16x1xf32> to vector<16x32xf32>
    %229 = arith.mulf %224, %228 : vector<16x32xf32>
    %230 = vector.broadcast %200 : vector<1x32xf32> to vector<16x32xf32>
    %231 = arith.mulf %229, %230 : vector<16x32xf32>
    %232 = vector.broadcast %201 : vector<1x32xf32> to vector<16x32xf32>
    %233 = arith.addf %231, %232 : vector<16x32xf32>
    %234 = arith.truncf %233 : vector<16x32xf32> to vector<16x32xbf16>
    %cst_83 = arith.constant dense<0.000000e+00> : vector<16x96xf32>
    %235 = tpu.matmul %234, %208, %cst_83 {dimension_numbers = #tpu.dot_dimension_numbers<[1], [0], [0], [1], [0, 0, 1, 1], [], []>} : vector<16x32xbf16>, vector<32x96xbf16>, vector<16x96xf32> -> vector<16x96xf32>
    %236 = vector.broadcast %202 : vector<1x96xf32> to vector<16x96xf32>
    %237 = arith.addf %235, %236 : vector<16x96xf32>
    %238 = vector.shape_cast %237 : vector<16x96xf32> to vector<2x8x96xf32>
    %239 = vector.extract_strided_slice %238 {offsets = [0, 0, 0], sizes = [2, 8, 8], strides = [1, 1, 1]} : vector<2x8x96xf32> to vector<2x8x8xf32>
    %240 = arith.truncf %239 : vector<2x8x8xf32> to vector<2x8x8xbf16>
    %241 = vector.extract_strided_slice %238 {offsets = [0, 0, 32], sizes = [2, 8, 8], strides = [1, 1, 1]} : vector<2x8x96xf32> to vector<2x8x8xf32>
    %242 = arith.truncf %241 : vector<2x8x8xf32> to vector<2x8x8xbf16>
    %243 = vector.extract_strided_slice %238 {offsets = [0, 0, 64], sizes = [2, 8, 8], strides = [1, 1, 1]} : vector<2x8x96xf32> to vector<2x8x8xf32>
    %244 = arith.truncf %243 : vector<2x8x8xf32> to vector<2x8x8xbf16>
    "tpu.trace_start"() <{level = 10 : i32, message = "bqd,bkd->bqk"}> : () -> ()
    %cst_84 = arith.constant dense<0.000000e+00> : vector<2x8x8xf32>
    %245 = tpu.matmul %240, %242, %cst_84 {dimension_numbers = #tpu.dot_dimension_numbers<[2], [2], [1], [1], [0, 0, 0, 1, 1, 1], [0], [0]>} : vector<2x8x8xbf16>, vector<2x8x8xbf16>, vector<2x8x8xf32> -> vector<2x8x8xf32>
    "tpu.trace_stop"() : () -> ()
    %cst_85 = arith.constant 0.353553385 : f32
    %246 = vector.broadcast %cst_85 : f32 to vector<2x8x8xf32>
    %247 = arith.mulf %245, %246 : vector<2x8x8xf32>
    %248 = arith.addf %247, %18 : vector<2x8x8xf32>
    %cst_86 = arith.constant dense<0xFF800000> : vector<2x8xf32>
    %249 = vector.multi_reduction <maximumf>, %248, %cst_86 [2] : vector<2x8x8xf32> to vector<2x8xf32>
    %250 = vector.shape_cast %249 : vector<2x8xf32> to vector<2x8x1xf32>
    %251 = vector.broadcast %250 : vector<2x8x1xf32> to vector<2x8x8xf32>
    %252 = arith.subf %248, %251 : vector<2x8x8xf32>
    %253 = math.exp %252 : vector<2x8x8xf32>
    %cst_87 = arith.constant dense<0.000000e+00> : vector<2x8xf32>
    %254 = vector.multi_reduction <add>, %253, %cst_87 [2] : vector<2x8x8xf32> to vector<2x8xf32>
    %255 = vector.shape_cast %254 : vector<2x8xf32> to vector<2x8x1xf32>
    %256 = vector.broadcast %255 : vector<2x8x1xf32> to vector<2x8x8xf32>
    %257 = arith.divf %253, %256 : vector<2x8x8xf32>
    %258 = arith.truncf %257 : vector<2x8x8xf32> to vector<2x8x8xbf16>
    "tpu.trace_start"() <{level = 10 : i32, message = "bqk,bkd->bqd"}> : () -> ()
    %cst_88 = arith.constant dense<0.000000e+00> : vector<2x8x8xf32>
    %259 = tpu.matmul %258, %244, %cst_88 {dimension_numbers = #tpu.dot_dimension_numbers<[2], [1], [1], [2], [0, 0, 0, 1, 1, 2], [0], [0]>} : vector<2x8x8xbf16>, vector<2x8x8xbf16>, vector<2x8x8xf32> -> vector<2x8x8xf32>
    "tpu.trace_stop"() : () -> ()
    %260 = vector.shape_cast %259 : vector<2x8x8xf32> to vector<16x8xf32>
    %c0_89 = arith.constant 0 : index
    %c0_90 = arith.constant 0 : index
    %261 = vector.load %arg5[%c0_89, %c0_90] : memref<16x32xf32, #tpu.memory_space<vmem>>, vector<16x8xf32>
    tpu.vector_store %arg5[%c0_89, %c0_90], %260 {strides = array<i32>} : memref<16x32xf32, #tpu.memory_space<vmem>>, vector<16x8xf32>,
    %262 = vector.extract_strided_slice %238 {offsets = [0, 0, 8], sizes = [2, 8, 8], strides = [1, 1, 1]} : vector<2x8x96xf32> to vector<2x8x8xf32>
    %263 = arith.truncf %262 : vector<2x8x8xf32> to vector<2x8x8xbf16>
    %264 = vector.extract_strided_slice %238 {offsets = [0, 0, 40], sizes = [2, 8, 8], strides = [1, 1, 1]} : vector<2x8x96xf32> to vector<2x8x8xf32>
    %265 = arith.truncf %264 : vector<2x8x8xf32> to vector<2x8x8xbf16>
    %266 = vector.extract_strided_slice %238 {offsets = [0, 0, 72], sizes = [2, 8, 8], strides = [1, 1, 1]} : vector<2x8x96xf32> to vector<2x8x8xf32>
    %267 = arith.truncf %266 : vector<2x8x8xf32> to vector<2x8x8xbf16>
    "tpu.trace_start"() <{level = 10 : i32, message = "bqd,bkd->bqk"}> : () -> ()
    %cst_91 = arith.constant dense<0.000000e+00> : vector<2x8x8xf32>
    %268 = tpu.matmul %263, %265, %cst_91 {dimension_numbers = #tpu.dot_dimension_numbers<[2], [2], [1], [1], [0, 0, 0, 1, 1, 1], [0], [0]>} : vector<2x8x8xbf16>, vector<2x8x8xbf16>, vector<2x8x8xf32> -> vector<2x8x8xf32>
    "tpu.trace_stop"() : () -> ()
    %cst_92 = arith.constant 0.353553385 : f32
    %269 = vector.broadcast %cst_92 : f32 to vector<2x8x8xf32>
    %270 = arith.mulf %268, %269 : vector<2x8x8xf32>
    %271 = arith.addf %270, %18 : vector<2x8x8xf32>
    %cst_93 = arith.constant dense<0xFF800000> : vector<2x8xf32>
    %272 = vector.multi_reduction <maximumf>, %271, %cst_93 [2] : vector<2x8x8xf32> to vector<2x8xf32>
    %273 = vector.shape_cast %272 : vector<2x8xf32> to vector<2x8x1xf32>
    %274 = vector.broadcast %273 : vector<2x8x1xf32> to vector<2x8x8xf32>
    %275 = arith.subf %271, %274 : vector<2x8x8xf32>
    %276 = math.exp %275 : vector<2x8x8xf32>
    %cst_94 = arith.constant dense<0.000000e+00> : vector<2x8xf32>
    %277 = vector.multi_reduction <add>, %276, %cst_94 [2] : vector<2x8x8xf32> to vector<2x8xf32>
    %278 = vector.shape_cast %277 : vector<2x8xf32> to vector<2x8x1xf32>
    %279 = vector.broadcast %278 : vector<2x8x1xf32> to vector<2x8x8xf32>
    %280 = arith.divf %276, %279 : vector<2x8x8xf32>
    %281 = arith.truncf %280 : vector<2x8x8xf32> to vector<2x8x8xbf16>
    "tpu.trace_start"() <{level = 10 : i32, message = "bqk,bkd->bqd"}> : () -> ()
    %cst_95 = arith.constant dense<0.000000e+00> : vector<2x8x8xf32>
    %282 = tpu.matmul %281, %267, %cst_95 {dimension_numbers = #tpu.dot_dimension_numbers<[2], [1], [1], [2], [0, 0, 0, 1, 1, 2], [0], [0]>} : vector<2x8x8xbf16>, vector<2x8x8xbf16>, vector<2x8x8xf32> -> vector<2x8x8xf32>
    "tpu.trace_stop"() : () -> ()
    %283 = vector.shape_cast %282 : vector<2x8x8xf32> to vector<16x8xf32>
    %c0_96 = arith.constant 0 : index
    %c8_97 = arith.constant 8 : index
    %284 = vector.load %arg5[%c0_96, %c8_97] : memref<16x32xf32, #tpu.memory_space<vmem>>, vector<16x8xf32>
    tpu.vector_store %arg5[%c0_96, %c8_97], %283 {strides = array<i32>} : memref<16x32xf32, #tpu.memory_space<vmem>>, vector<16x8xf32>,
    %285 = vector.extract_strided_slice %238 {offsets = [0, 0, 16], sizes = [2, 8, 8], strides = [1, 1, 1]} : vector<2x8x96xf32> to vector<2x8x8xf32>
    %286 = arith.truncf %285 : vector<2x8x8xf32> to vector<2x8x8xbf16>
    %287 = vector.extract_strided_slice %238 {offsets = [0, 0, 48], sizes = [2, 8, 8], strides = [1, 1, 1]} : vector<2x8x96xf32> to vector<2x8x8xf32>
    %288 = arith.truncf %287 : vector<2x8x8xf32> to vector<2x8x8xbf16>
    %289 = vector.extract_strided_slice %238 {offsets = [0, 0, 80], sizes = [2, 8, 8], strides = [1, 1, 1]} : vector<2x8x96xf32> to vector<2x8x8xf32>
    %290 = arith.truncf %289 : vector<2x8x8xf32> to vector<2x8x8xbf16>
    "tpu.trace_start"() <{level = 10 : i32, message = "bqd,bkd->bqk"}> : () -> ()
    %cst_98 = arith.constant dense<0.000000e+00> : vector<2x8x8xf32>
    %291 = tpu.matmul %286, %288, %cst_98 {dimension_numbers = #tpu.dot_dimension_numbers<[2], [2], [1], [1], [0, 0, 0, 1, 1, 1], [0], [0]>} : vector<2x8x8xbf16>, vector<2x8x8xbf16>, vector<2x8x8xf32> -> vector<2x8x8xf32>
    "tpu.trace_stop"() : () -> ()
    %cst_99 = arith.constant 0.353553385 : f32
    %292 = vector.broadcast %cst_99 : f32 to vector<2x8x8xf32>
    %293 = arith.mulf %291, %292 : vector<2x8x8xf32>
    %294 = arith.addf %293, %18 : vector<2x8x8xf32>
    %cst_100 = arith.constant dense<0xFF800000> : vector<2x8xf32>
    %295 = vector.multi_reduction <maximumf>, %294, %cst_100 [2] : vector<2x8x8xf32> to vector<2x8xf32>
    %296 = vector.shape_cast %295 : vector<2x8xf32> to vector<2x8x1xf32>
    %297 = vector.broadcast %296 : vector<2x8x1xf32> to vector<2x8x8xf32>
    %298 = arith.subf %294, %297 : vector<2x8x8xf32>
    %299 = math.exp %298 : vector<2x8x8xf32>
    %cst_101 = arith.constant dense<0.000000e+00> : vector<2x8xf32>
    %300 = vector.multi_reduction <add>, %299, %cst_101 [2] : vector<2x8x8xf32> to vector<2x8xf32>
    %301 = vector.shape_cast %300 : vector<2x8xf32> to vector<2x8x1xf32>
    %302 = vector.broadcast %301 : vector<2x8x1xf32> to vector<2x8x8xf32>
    %303 = arith.divf %299, %302 : vector<2x8x8xf32>
    %304 = arith.truncf %303 : vector<2x8x8xf32> to vector<2x8x8xbf16>
    "tpu.trace_start"() <{level = 10 : i32, message = "bqk,bkd->bqd"}> : () -> ()
    %cst_102 = arith.constant dense<0.000000e+00> : vector<2x8x8xf32>
    %305 = tpu.matmul %304, %290, %cst_102 {dimension_numbers = #tpu.dot_dimension_numbers<[2], [1], [1], [2], [0, 0, 0, 1, 1, 2], [0], [0]>} : vector<2x8x8xbf16>, vector<2x8x8xbf16>, vector<2x8x8xf32> -> vector<2x8x8xf32>
    "tpu.trace_stop"() : () -> ()
    %306 = vector.shape_cast %305 : vector<2x8x8xf32> to vector<16x8xf32>
    %c0_103 = arith.constant 0 : index
    %c16_104 = arith.constant 16 : index
    %307 = vector.load %arg5[%c0_103, %c16_104] : memref<16x32xf32, #tpu.memory_space<vmem>>, vector<16x8xf32>
    tpu.vector_store %arg5[%c0_103, %c16_104], %306 {strides = array<i32>} : memref<16x32xf32, #tpu.memory_space<vmem>>, vector<16x8xf32>,
    %308 = vector.extract_strided_slice %238 {offsets = [0, 0, 24], sizes = [2, 8, 8], strides = [1, 1, 1]} : vector<2x8x96xf32> to vector<2x8x8xf32>
    %309 = arith.truncf %308 : vector<2x8x8xf32> to vector<2x8x8xbf16>
    %310 = vector.extract_strided_slice %238 {offsets = [0, 0, 56], sizes = [2, 8, 8], strides = [1, 1, 1]} : vector<2x8x96xf32> to vector<2x8x8xf32>
    %311 = arith.truncf %310 : vector<2x8x8xf32> to vector<2x8x8xbf16>
    %312 = vector.extract_strided_slice %238 {offsets = [0, 0, 88], sizes = [2, 8, 8], strides = [1, 1, 1]} : vector<2x8x96xf32> to vector<2x8x8xf32>
    %313 = arith.truncf %312 : vector<2x8x8xf32> to vector<2x8x8xbf16>
    "tpu.trace_start"() <{level = 10 : i32, message = "bqd,bkd->bqk"}> : () -> ()
    %cst_105 = arith.constant dense<0.000000e+00> : vector<2x8x8xf32>
    %314 = tpu.matmul %309, %311, %cst_105 {dimension_numbers = #tpu.dot_dimension_numbers<[2], [2], [1], [1], [0, 0, 0, 1, 1, 1], [0], [0]>} : vector<2x8x8xbf16>, vector<2x8x8xbf16>, vector<2x8x8xf32> -> vector<2x8x8xf32>
    "tpu.trace_stop"() : () -> ()
    %cst_106 = arith.constant 0.353553385 : f32
    %315 = vector.broadcast %cst_106 : f32 to vector<2x8x8xf32>
    %316 = arith.mulf %314, %315 : vector<2x8x8xf32>
    %317 = arith.addf %316, %18 : vector<2x8x8xf32>
    %cst_107 = arith.constant dense<0xFF800000> : vector<2x8xf32>
    %318 = vector.multi_reduction <maximumf>, %317, %cst_107 [2] : vector<2x8x8xf32> to vector<2x8xf32>
    %319 = vector.shape_cast %318 : vector<2x8xf32> to vector<2x8x1xf32>
    %320 = vector.broadcast %319 : vector<2x8x1xf32> to vector<2x8x8xf32>
    %321 = arith.subf %317, %320 : vector<2x8x8xf32>
    %322 = math.exp %321 : vector<2x8x8xf32>
    %cst_108 = arith.constant dense<0.000000e+00> : vector<2x8xf32>
    %323 = vector.multi_reduction <add>, %322, %cst_108 [2] : vector<2x8x8xf32> to vector<2x8xf32>
    %324 = vector.shape_cast %323 : vector<2x8xf32> to vector<2x8x1xf32>
    %325 = vector.broadcast %324 : vector<2x8x1xf32> to vector<2x8x8xf32>
    %326 = arith.divf %322, %325 : vector<2x8x8xf32>
    %327 = arith.truncf %326 : vector<2x8x8xf32> to vector<2x8x8xbf16>
    "tpu.trace_start"() <{level = 10 : i32, message = "bqk,bkd->bqd"}> : () -> ()
    %cst_109 = arith.constant dense<0.000000e+00> : vector<2x8x8xf32>
    %328 = tpu.matmul %327, %313, %cst_109 {dimension_numbers = #tpu.dot_dimension_numbers<[2], [1], [1], [2], [0, 0, 0, 1, 1, 2], [0], [0]>} : vector<2x8x8xbf16>, vector<2x8x8xbf16>, vector<2x8x8xf32> -> vector<2x8x8xf32>
    "tpu.trace_stop"() : () -> ()
    %329 = vector.shape_cast %328 : vector<2x8x8xf32> to vector<16x8xf32>
    %c0_110 = arith.constant 0 : index
    %c24_111 = arith.constant 24 : index
    %330 = vector.load %arg5[%c0_110, %c24_111] : memref<16x32xf32, #tpu.memory_space<vmem>>, vector<16x8xf32>
    tpu.vector_store %arg5[%c0_110, %c24_111], %329 {strides = array<i32>} : memref<16x32xf32, #tpu.memory_space<vmem>>, vector<16x8xf32>,
    %c0_112 = arith.constant 0 : index
    %c0_113 = arith.constant 0 : index
    %331 = vector.load %arg5[%c0_112, %c0_113] : memref<16x32xf32, #tpu.memory_space<vmem>>, vector<16x32xf32>
    %332 = arith.truncf %331 : vector<16x32xf32> to vector<16x32xbf16>
    %cst_114 = arith.constant dense<0.000000e+00> : vector<16x32xf32>
    %333 = tpu.matmul %332, %209, %cst_114 {dimension_numbers = #tpu.dot_dimension_numbers<[1], [0], [0], [1], [0, 0, 1, 1], [], []>} : vector<16x32xbf16>, vector<32x32xbf16>, vector<16x32xf32> -> vector<16x32xf32>
    %334 = arith.addf %199, %333 : vector<16x32xf32>
    %335 = vector.broadcast %203 : vector<1x32xf32> to vector<16x32xf32>
    %336 = arith.addf %334, %335 : vector<16x32xf32>
    %cst_115 = arith.constant dense<0.000000e+00> : vector<16xf32>
    %337 = vector.multi_reduction <add>, %336, %cst_115 [1] : vector<16x32xf32> to vector<16xf32>
    %338 = vector.shape_cast %337 : vector<16xf32> to vector<16x1xf32>
    %cst_116 = arith.constant 3.200000e+01 : f32
    %339 = vector.broadcast %cst_116 : f32 to vector<16x1xf32>
    %340 = arith.divf %338, %339 : vector<16x1xf32>
    %341 = vector.broadcast %340 : vector<16x1xf32> to vector<16x32xf32>
    %342 = arith.subf %336, %341 : vector<16x32xf32>
    %343 = arith.mulf %342, %342 : vector<16x32xf32>
    %cst_117 = arith.constant dense<0.000000e+00> : vector<16xf32>
    %344 = vector.multi_reduction <add>, %343, %cst_117 [1] : vector<16x32xf32> to vector<16xf32>
    %345 = vector.shape_cast %344 : vector<16xf32> to vector<16x1xf32>
    %cst_118 = arith.constant 3.200000e+01 : f32
    %346 = vector.broadcast %cst_118 : f32 to vector<16x1xf32>
    %347 = arith.divf %345, %346 : vector<16x1xf32>
    %348 = vector.broadcast %340 : vector<16x1xf32> to vector<16x32xf32>
    %349 = arith.subf %336, %348 : vector<16x32xf32>
    %cst_119 = arith.constant 9.99999974E-6 : f32
    %350 = vector.broadcast %cst_119 : f32 to vector<16x1xf32>
    %351 = arith.addf %347, %350 : vector<16x1xf32>
    %352 = math.rsqrt %351 : vector<16x1xf32>
    %353 = vector.broadcast %352 : vector<16x1xf32> to vector<16x32xf32>
    %354 = arith.mulf %349, %353 : vector<16x32xf32>
    %355 = vector.broadcast %204 : vector<1x32xf32> to vector<16x32xf32>
    %356 = arith.mulf %354, %355 : vector<16x32xf32>
    %357 = vector.broadcast %205 : vector<1x32xf32> to vector<16x32xf32>
    %358 = arith.addf %356, %357 : vector<16x32xf32>
    %359 = arith.truncf %358 : vector<16x32xf32> to vector<16x32xbf16>
    %cst_120 = arith.constant dense<0.000000e+00> : vector<16x128xf32>
    %360 = tpu.matmul %359, %210, %cst_120 {dimension_numbers = #tpu.dot_dimension_numbers<[1], [0], [0], [1], [0, 0, 1, 1], [], []>} : vector<16x32xbf16>, vector<32x128xbf16>, vector<16x128xf32> -> vector<16x128xf32>
    %361 = vector.broadcast %206 : vector<1x128xf32> to vector<16x128xf32>
    %362 = arith.addf %360, %361 : vector<16x128xf32>
    %363 = arith.mulf %362, %362 : vector<16x128xf32>
    %364 = arith.mulf %362, %363 : vector<16x128xf32>
    %cst_121 = arith.constant 4.471500e-02 : f32
    %365 = vector.broadcast %cst_121 : f32 to vector<16x128xf32>
    %366 = arith.mulf %365, %364 : vector<16x128xf32>
    %367 = arith.addf %362, %366 : vector<16x128xf32>
    %cst_122 = arith.constant 0.797884583 : f32
    %368 = vector.broadcast %cst_122 : f32 to vector<16x128xf32>
    %369 = arith.mulf %368, %367 : vector<16x128xf32>
    %370 = math.tanh %369 : vector<16x128xf32>
    %cst_123 = arith.constant 1.000000e+00 : f32
    %371 = vector.broadcast %cst_123 : f32 to vector<16x128xf32>
    %372 = arith.addf %371, %370 : vector<16x128xf32>
    %cst_124 = arith.constant 5.000000e-01 : f32
    %373 = vector.broadcast %cst_124 : f32 to vector<16x128xf32>
    %374 = arith.mulf %373, %372 : vector<16x128xf32>
    %375 = arith.mulf %362, %374 : vector<16x128xf32>
    %376 = arith.truncf %375 : vector<16x128xf32> to vector<16x128xbf16>
    %cst_125 = arith.constant dense<0.000000e+00> : vector<16x32xf32>
    %377 = tpu.matmul %376, %211, %cst_125 {dimension_numbers = #tpu.dot_dimension_numbers<[1], [0], [0], [1], [0, 0, 1, 1], [], []>} : vector<16x128xbf16>, vector<128x32xbf16>, vector<16x32xf32> -> vector<16x32xf32>
    %378 = arith.addf %336, %377 : vector<16x32xf32>
    %379 = vector.broadcast %207 : vector<1x32xf32> to vector<16x32xf32>
    %380 = arith.addf %378, %379 : vector<16x32xf32>
    %c16_126 = arith.constant 16 : index
    %c0_127 = arith.constant 0 : index
    %381 = vector.load %arg3[%c16_126, %c0_127] : memref<20x128xf32, #tpu.memory_space<vmem>>, vector<1x32xf32>
    %c17 = arith.constant 17 : index
    %c0_128 = arith.constant 0 : index
    %382 = vector.load %arg3[%c17, %c0_128] : memref<20x128xf32, #tpu.memory_space<vmem>>, vector<1x32xf32>
    %c18 = arith.constant 18 : index
    %c0_129 = arith.constant 0 : index
    %383 = vector.load %arg3[%c18, %c0_129] : memref<20x128xf32, #tpu.memory_space<vmem>>, vector<1x32xf32>
    %c19 = arith.constant 19 : index
    %c0_130 = arith.constant 0 : index
    %384 = vector.load %arg3[%c19, %c0_130] : memref<20x128xf32, #tpu.memory_space<vmem>>, vector<1x1xf32>
    %cst_131 = arith.constant dense<0.000000e+00> : vector<16xf32>
    %385 = vector.multi_reduction <add>, %380, %cst_131 [1] : vector<16x32xf32> to vector<16xf32>
    %386 = vector.shape_cast %385 : vector<16xf32> to vector<16x1xf32>
    %cst_132 = arith.constant 3.200000e+01 : f32
    %387 = vector.broadcast %cst_132 : f32 to vector<16x1xf32>
    %388 = arith.divf %386, %387 : vector<16x1xf32>
    %389 = vector.broadcast %388 : vector<16x1xf32> to vector<16x32xf32>
    %390 = arith.subf %380, %389 : vector<16x32xf32>
    %391 = arith.mulf %390, %390 : vector<16x32xf32>
    %cst_133 = arith.constant dense<0.000000e+00> : vector<16xf32>
    %392 = vector.multi_reduction <add>, %391, %cst_133 [1] : vector<16x32xf32> to vector<16xf32>
    %393 = vector.shape_cast %392 : vector<16xf32> to vector<16x1xf32>
    %cst_134 = arith.constant 3.200000e+01 : f32
    %394 = vector.broadcast %cst_134 : f32 to vector<16x1xf32>
    %395 = arith.divf %393, %394 : vector<16x1xf32>
    %396 = vector.broadcast %388 : vector<16x1xf32> to vector<16x32xf32>
    %397 = arith.subf %380, %396 : vector<16x32xf32>
    %cst_135 = arith.constant 9.99999974E-6 : f32
    %398 = vector.broadcast %cst_135 : f32 to vector<16x1xf32>
    %399 = arith.addf %395, %398 : vector<16x1xf32>
    %400 = math.rsqrt %399 : vector<16x1xf32>
    %401 = vector.broadcast %400 : vector<16x1xf32> to vector<16x32xf32>
    %402 = arith.mulf %397, %401 : vector<16x32xf32>
    %403 = vector.broadcast %381 : vector<1x32xf32> to vector<16x32xf32>
    %404 = arith.mulf %402, %403 : vector<16x32xf32>
    %405 = vector.broadcast %382 : vector<1x32xf32> to vector<16x32xf32>
    %406 = arith.addf %404, %405 : vector<16x32xf32>
    %407 = vector.shape_cast %406 : vector<16x32xf32> to vector<2x8x32xf32>
    %cst_136 = arith.constant dense<0.000000e+00> : vector<2x32xf32>
    %408 = vector.multi_reduction <add>, %407, %cst_136 [1] : vector<2x8x32xf32> to vector<2x32xf32>
    %cst_137 = arith.constant 8.000000e+00 : f32
    %409 = vector.broadcast %cst_137 : f32 to vector<2x32xf32>
    %410 = arith.divf %408, %409 : vector<2x32xf32>
    %411 = vector.broadcast %383 : vector<1x32xf32> to vector<2x32xf32>
    %412 = arith.mulf %410, %411 : vector<2x32xf32>
    %cst_138 = arith.constant dense<0.000000e+00> : vector<2xf32>
    %413 = vector.multi_reduction <add>, %412, %cst_138 [1] : vector<2x32xf32> to vector<2xf32>
    %414 = vector.shape_cast %413 : vector<2xf32> to vector<2x1xf32>
    %415 = vector.broadcast %384 : vector<1x1xf32> to vector<2x1xf32>
    %416 = arith.addf %414, %415 : vector<2x1xf32>
    %c0_139 = arith.constant 0 : index
    %c0_140 = arith.constant 0 : index
    %417 = vector.load %arg4[%c0_139, %c0_140] : memref<2x1xf32, #tpu.memory_space<vmem>>, vector<2x1xf32>
    tpu.vector_store %arg4[%c0_139, %c0_140], %416 {strides = array<i32>} : memref<2x1xf32, #tpu.memory_space<vmem>>, vector<2x1xf32>,
    return
  }
}

</mosaic_0001>

<llo_original>
// kernel: gpt2_reward_forward.1
$region0: #{gpt2_reward_forward.1}
  #allocation0 [shape = 'u32[]', space=smem, size = 0x4, offset = 0x4, fixed_abs, tag = 'smem constant byte address 0x4 - core index']
  #allocation1 [shape = 'u32[144,128]{1,0:T(1,128)}', space=vmem, size = 0x12000, scoped, tag = 'internal scratch']
  #allocation2 [shape = 'f32[16,32]{1,0:T(8,128)}', space=vmem, size = 0x2000, scoped, tag = 'scratch operand']
  %s0 = inlined_call_operand.vmem [shape: f32[16,32], index: 0, kind: input, shape index: {}]
  %s1 = inlined_call_operand.vmem [shape: f32[2,8], index: 1, kind: input, shape index: {}]
  %s2 = inlined_call_operand.vmem [shape: bf16[448,128], index: 2, kind: input, shape index: {}]
  %s3 = inlined_call_operand.vmem [shape: f32[20,128], index: 3, kind: input, shape index: {}]
  %s4 = inlined_call_operand.vmem [shape: f32[2,1], index: 4, kind: output, shape index: {}]
  %s5 = sld [smem:[#allocation0]]
  $region26: #{gpt2_reward_forward.1} parent=0
    _
  %s7 = ssub.s32 1, %s5
  %s8 = scalar_select 0, %s7, %s5
  // Predicated region
  $region2: #{gpt2_reward_forward.1} parent=0 // pred_check
    _
  $region3: #{gpt2_reward_forward.1} parent=0 // pred_check_branch
    %10 = sbr.rel (0) target = $region5
  $region4: #{gpt2_reward_forward.1} parent=0 // pred_region
    _
  $region5: #{gpt2_reward_forward.1} parent=0 // pred_fallthru
    _
  // Predicated region
  $region6: #{gpt2_reward_forward.1} parent=0 // pred_check
    _
  $region7: #{gpt2_reward_forward.1} parent=0 // pred_check_branch
    %12 = sbr.rel (0) target = $region9
  $region8: #{gpt2_reward_forward.1} parent=0 // pred_region
    _
  $region9: #{gpt2_reward_forward.1} parent=0 // pred_fallthru
    _
  // Predicated region
  $region10: #{gpt2_reward_forward.1} parent=0 // pred_check
    _
  $region11: #{gpt2_reward_forward.1} parent=0 // pred_check_branch
    %14 = sbr.rel (0) target = $region13
  $region12: #{gpt2_reward_forward.1} parent=0 // pred_region
    _
  $region13: #{gpt2_reward_forward.1} parent=0 // pred_fallthru
    _
  // Predicated region
  $region14: #{gpt2_reward_forward.1} parent=0 // pred_check
    _
  $region15: #{gpt2_reward_forward.1} parent=0 // pred_check_branch
    %16 = sbr.rel (0) target = $region17
  $region16: #{gpt2_reward_forward.1} parent=0 // pred_region
    _
  $region17: #{gpt2_reward_forward.1} parent=0 // pred_fallthru
    _
  %v18 = vld [vmem:[%s0] sm:$0xff]
  %v19 = vld [vmem:[%s0 + $0x8] sm:$0xff]
  %v20 = vld [vmem:[%s1] sm:$0x3]
  %v21 = vlaneseq
  %v22 = vshrl.u32 %v21, 7
  %v23 = vlaneseq
  %v24 = vand.u32 %v23, 127
  %vm25 = vcmp.le.s32.totalorder %v24, %v22
  %v26 = vsel %vm25, 0.0, -1e+09
  %v27 = vsub.f32 1.0, %v20
  %v28 = vmul.f32 %v27, -1e+09
  %v31 = vunpack.c.l.s4 1966171168
  %v32 = vunpack.c.0.s8 %v31
  %v33 = vlaneseq
  %v34 = vshrl.u32 %v33, 7
  %v35 = vsub.s32 %v32, %v34
  %v36 = vrot.slane %v28, %v35
  %v37 = vcombine.high %v36, %v36
  %v39 = vunpack.c.l.s4 1966171168
  %v40 = vunpack.c.0.s8 %v39
  %v41 = vlaneseq
  %v42 = vshrl.u32 %v41, 7
  %v43 = vsub.s32 %v40, %v42
  %v44 = vrot.slane %v36, %v43
  %v46 = vunpack.c.l.s4 1966171168
  %v47 = vunpack.c.0.s8 %v46
  %v48 = vlaneseq
  %v49 = vshrl.u32 %v48, 7
  %v50 = vsub.s32 %v47, %v49
  %v51 = vrot.slane %v37, %v50
  %v52 = vlaneseq
  %v53 = vshrl.u32 %v52, 7
  %v54 = vsub.s32 0, %v53
  %v55 = vrot.slane %v44, %v54
  %v56 = vlaneseq
  %v57 = vshrl.u32 %v56, 7
  %v58 = vsub.s32 0, %v57
  %v59 = vrot.slane %v51, %v58
  %v62 = vadd.f32 %v26, %v55
  %v63 = vadd.f32 %v26, %v59
  %v64 = vld [vmem:[%s3] sm:$0x1]
  %v65 = vld [vmem:[%s3 + $0x1] sm:$0x1]
  %v66 = vld [vmem:[%s3 + $0x2] sm:$0x1]
  %v67 = vld [vmem:[%s3 + $0x3] sm:$0x1]
  %v68 = vld [vmem:[%s3 + $0x4] sm:$0x1]
  %v69 = vld [vmem:[%s3 + $0x5] sm:$0x1]
  %v70 = vld [vmem:[%s3 + $0x6] sm:$0x1]
  %v71 = vld [vmem:[%s3 + $0x7] sm:$0x1]
  %v72 = vld [vmem:[%s2] sm:$0xf]
  %v73 = vld [vmem:[%s2 + $0x4] sm:$0xf]
  %v74 = vld [vmem:[%s2 + $0x8] sm:$0xf]
  %v75 = vld [vmem:[%s2 + $0xc] sm:$0xf]
  %v76 = vld [vmem:[%s2 + $0x10] sm:$0xf]
  %v77 = vld [vmem:[%s2 + $0x14] sm:$0xf]
  %v78 = vld [vmem:[%s2 + $0x18] sm:$0xf]
  %v79 = vld [vmem:[%s2 + $0x1c] sm:$0xf]
  %v80 = vld [vmem:[%s2 + $0x20] sm:$0xf]
  %v81 = vld [vmem:[%s2 + $0x24] sm:$0xf]
  %v82 = vld [vmem:[%s2 + $0x28] sm:$0xf]
  %v83 = vld [vmem:[%s2 + $0x2c] sm:$0xf]
  %v84 = vld [vmem:[%s2 + $0x30] sm:$0xf]
  %v85 = vld [vmem:[%s2 + $0x34] sm:$0xf]
  %v86 = vld [vmem:[%s2 + $0x38] sm:$0xf]
  %v87 = vld [vmem:[%s2 + $0x3c] sm:$0xf]
  %v88 = vld [vmem:[%s2 + $0x40] sm:$0xf]
  %v89 = vld [vmem:[%s2 + $0x44] sm:$0xf]
  %v90 = vld [vmem:[%s2 + $0x48] sm:$0xf]
  %v91 = vld [vmem:[%s2 + $0x4c] sm:$0xf]
  %v92 = vld [vmem:[%s2 + $0x50] sm:$0xf]
  %v93 = vld [vmem:[%s2 + $0x54] sm:$0xf]
  %v94 = vld [vmem:[%s2 + $0x58] sm:$0xf]
  %v95 = vld [vmem:[%s2 + $0x5c] sm:$0xf]
  %v96 = vld [vmem:[%s2 + $0x60] sm:$0xf]
  %v97 = vld [vmem:[%s2 + $0x64] sm:$0xf]
  %v98 = vld [vmem:[%s2 + $0x68] sm:$0xf]
  %v99 = vld [vmem:[%s2 + $0x6c] sm:$0xf]
  %vm100 = vcmask 261120
  %v101 = vsel %vm100, %v18, 0.0
  %102 = vadd.xlane.f32.xlu0 %v101
  %v103 = vpop.xlane.xlu0 %102
  %v104 = vsel %vm100, %v19, 0.0
  %105 = vadd.xlane.f32.xlu0 %v104
  %v106 = vpop.xlane.xlu0 %105
  %v107 = vrcp.pop 32.0
  %v108 = vmul.f32 %v103, %v107
  %v109 = vmul.f32 %v106, %v107
  %v110 = vsub.f32 %v18, %v108
  %v111 = vsub.f32 %v19, %v109
  %v112 = vmul.f32 %v110, %v110
  %v113 = vmul.f32 %v111, %v111
  %v114 = vsel %vm100, %v112, 0.0
  %115 = vadd.xlane.f32.xlu0 %v114
  %v116 = vpop.xlane.xlu0 %115
  %v117 = vsel %vm100, %v113, 0.0
  %118 = vadd.xlane.f32.xlu0 %v117
  %v119 = vpop.xlane.xlu0 %118
  %v120 = vmul.f32 %v116, %v107
  %v121 = vmul.f32 %v119, %v107
  %v122 = vadd.f32 %v120, 1e-05
  %v123 = vadd.f32 %v121, 1e-05
  %v124 = vrsqrt.pop %v122
  %v125 = vrsqrt.pop %v123
  %v126 = vmul.f32 %v110, %v124
  %v127 = vmul.f32 %v111, %v125
  %v128 = vlaneseq
  %v129 = vshrl.u32 %v128, 7
  %v130 = vsub.s32 0, %v129
  %v131 = vrot.slane %v64, %v130
  %v132 = vmul.f32 %v126, %v131
  %v133 = vmul.f32 %v127, %v131
  %v134 = vlaneseq
  %v135 = vshrl.u32 %v134, 7
  %v136 = vsub.s32 0, %v135
  %v137 = vrot.slane %v65, %v136
  %v138 = vadd.f32 %v132, %v137
  %v139 = vadd.f32 %v133, %v137
  %v140 = vpack.c.bf16 %v139, %v138
  %v141 = vlaneseq
  %v142 = vshrl.u32 %v141, 7
  %v143 = vsub.s32 0, %v142
  %v144 = vrot.slane %v66, %v143
  %v149 = vunpack.c.l.b16 %v72
  %v150 = vunpack.c.l.b16 %v73
  %v151 = vunpack.c.l.b16 %v74
  %v152 = vunpack.c.l.b16 %v75
  %v153 = vpack.c.b16 %v150, %v149
  %v154 = vpack.c.b16 %v152, %v151
  %v158 = vsel %vm100, %v140, 0
  %160 = vmatprep.subr.bf16.mxu0 0
  %161 = vmatpush1.bf16.msra.mxu0 %v153
  %162 = vmatprep.subr.bf16.mxu0 0
  %163 = vmatpush1.bf16.msra.mxu0 %v154
  %164 = vmatprep.subr.bf16.mxu0 0
  %165 = vmatpush1.bf16.msra.mxu0 0
  %166 = vmatprep.subr.bf16.mxu0 0
  %167 = vmatpush1.bf16.msra.mxu0 0
  %168 = vmatprep.subr.bf16.mxu0 0
  %169 = vmatpush1.bf16.msra.mxu0 0
  %170 = vmatprep.subr.bf16.mxu0 0
  %171 = vmatpush1.bf16.msra.mxu0 0
  %172 = vmatprep.subr.bf16.mxu0 0
  %173 = vmatpush1.bf16.msra.mxu0 0
  %174 = vmatprep.subr.bf16.mxu0 0
  %175 = vmatpush1.bf16.msra.mxu0 0
  %176 = vmatprep.subr.bf16.mxu0 0
  %177 = vmatpush1.bf16.msra.mxu0 0
  %178 = vmatprep.subr.bf16.mxu0 0
  %179 = vmatpush1.bf16.msra.mxu0 0
  %180 = vmatprep.subr.bf16.mxu0 0
  %181 = vmatpush1.bf16.msra.mxu0 0
  %182 = vmatprep.subr.bf16.mxu0 0
  %183 = vmatpush1.bf16.msra.mxu0 0
  %184 = vmatprep.subr.bf16.mxu0 0
  %185 = vmatpush1.bf16.msra.mxu0 0
  %186 = vmatprep.subr.bf16.mxu0 0
  %187 = vmatpush1.bf16.msra.mxu0 0
  %188 = vmatprep.subr.bf16.mxu0 0
  %189 = vmatpush1.bf16.msra.mxu0 0
  %190 = vmatprep.subr.bf16.mxu0 0
  %191 = vmatpush1.bf16.msra.mxu0 0
  %192 = vmatprep.mubr.bf16.mxu0 0
  %193 = vmatmul.mubr.bf16.gmra.mrb[0].mxu0 %v158
  %v194 = vpop.f32.mrb[0].mxu0
  %v195 = vadd.f32 %v144, %v194
  %v196 = vpop.f32.mrb[0].mxu0
  %v197 = vpop.f32.mrb[0].mxu0
  %v198 = vadd.f32 %v144, %v197
  %v199 = vpop.f32.mrb[0].mxu0
  %200 = vdwg.mxu0
  %v201 = vpack.c.bf16 %v195, %v195
  %v202 = vpack.c.bf16 %v198, %v198
  %204 = vrot.lane.b32.xlu0 %v201, 96
  %v205 = vpop.permute.xlu0 %204
  %vm206 = vcmask 64512
  %v208 = vsel %vm206, %v201, 0
  %v211 = vsel %vm206, %v205, 0
  %213 = vmatprep.subr.bf16.mxu0 0
  %214 = vmatpush1.bf16.xpose.msra.mxu0 %v211
  %215 = vmatprep.subr.bf16.mxu0 0
  %216 = vmatpush1.bf16.xpose.msra.mxu0 0
  %217 = vmatprep.subr.bf16.mxu0 0
  %218 = vmatpush1.bf16.xpose.msra.mxu0 0
  %219 = vmatprep.subr.bf16.mxu0 0
  %220 = vmatpush1.bf16.xpose.msra.mxu0 0
  %221 = vmatprep.subr.bf16.mxu0 0
  %222 = vmatpush1.bf16.xpose.msra.mxu0 0
  %223 = vmatprep.subr.bf16.mxu0 0
  %224 = vmatpush1.bf16.xpose.msra.mxu0 0
  %225 = vmatprep.subr.bf16.mxu0 0
  %226 = vmatpush1.bf16.xpose.msra.mxu0 0
  %227 = vmatprep.subr.bf16.mxu0 0
  %228 = vmatpush1.bf16.xpose.msra.mxu0 0
  %229 = vmatprep.subr.bf16.mxu0 0
  %230 = vmatpush1.bf16.xpose.msra.mxu0 0
  %231 = vmatprep.subr.bf16.mxu0 0
  %232 = vmatpush1.bf16.xpose.msra.mxu0 0
  %233 = vmatprep.subr.bf16.mxu0 0
  %234 = vmatpush1.bf16.xpose.msra.mxu0 0
  %235 = vmatprep.subr.bf16.mxu0 0
  %236 = vmatpush1.bf16.xpose.msra.mxu0 0
  %237 = vmatprep.subr.bf16.mxu0 0
  %238 = vmatpush1.bf16.xpose.msra.mxu0 0
  %239 = vmatprep.subr.bf16.mxu0 0
  %240 = vmatpush1.bf16.xpose.msra.mxu0 0
  %241 = vmatprep.subr.bf16.mxu0 0
  %242 = vmatpush1.bf16.xpose.msra.mxu0 0
  %243 = vmatprep.subr.bf16.mxu0 0
  %244 = vmatpush1.bf16.xpose.msra.mxu0 0
  %245 = vmatprep.mubr.bf16.mxu0 0
  %246 = vmatmul.mubr.bf16.gmra.mrb[0].mxu0 %v208
  %v247 = vpop.f32.mrb[0].mxu0
  %v248 = vadd.f32 0.0, %v247
  %v249 = vpop.f32.mrb[0].mxu0
  %v250 = vpop.f32.mrb[0].mxu0
  %v251 = vpop.f32.mrb[0].mxu0
  %252 = vdwg.mxu0
  %254 = vrot.lane.b32.xlu0 %v202, 96
  %v255 = vpop.permute.xlu0 %254
  %v257 = vsel %vm206, %v202, 0
  %v260 = vsel %vm206, %v255, 0
  %262 = vmatprep.subr.bf16.mxu0 0
  %263 = vmatpush1.bf16.xpose.msra.mxu0 %v260
  %264 = vmatprep.subr.bf16.mxu0 0
  %265 = vmatpush1.bf16.xpose.msra.mxu0 0
  %266 = vmatprep.subr.bf16.mxu0 0
  %267 = vmatpush1.bf16.xpose.msra.mxu0 0
  %268 = vmatprep.subr.bf16.mxu0 0
  %269 = vmatpush1.bf16.xpose.msra.mxu0 0
  %270 = vmatprep.subr.bf16.mxu0 0
  %271 = vmatpush1.bf16.xpose.msra.mxu0 0
  %272 = vmatprep.subr.bf16.mxu0 0
  %273 = vmatpush1.bf16.xpose.msra.mxu0 0
  %274 = vmatprep.subr.bf16.mxu0 0
  %275 = vmatpush1.bf16.xpose.msra.mxu0 0
  %276 = vmatprep.subr.bf16.mxu0 0
  %277 = vmatpush1.bf16.xpose.msra.mxu0 0
  %278 = vmatprep.subr.bf16.mxu0 0
  %279 = vmatpush1.bf16.xpose.msra.mxu0 0
  %280 = vmatprep.subr.bf16.mxu0 0
  %281 = vmatpush1.bf16.xpose.msra.mxu0 0
  %282 = vmatprep.subr.bf16.mxu0 0
  %283 = vmatpush1.bf16.xpose.msra.mxu0 0
  %284 = vmatprep.subr.bf16.mxu0 0
  %285 = vmatpush1.bf16.xpose.msra.mxu0 0
  %286 = vmatprep.subr.bf16.mxu0 0
  %287 = vmatpush1.bf16.xpose.msra.mxu0 0
  %288 = vmatprep.subr.bf16.mxu0 0
  %289 = vmatpush1.bf16.xpose.msra.mxu0 0
  %290 = vmatprep.subr.bf16.mxu0 0
  %291 = vmatpush1.bf16.xpose.msra.mxu0 0
  %292 = vmatprep.subr.bf16.mxu0 0
  %293 = vmatpush1.bf16.xpose.msra.mxu0 0
  %294 = vmatprep.mubr.bf16.mxu0 0
  %295 = vmatmul.mubr.bf16.gmra.mrb[0].mxu0 %v257
  %v296 = vpop.f32.mrb[0].mxu0
  %v297 = vadd.f32 0.0, %v296
  %v298 = vpop.f32.mrb[0].mxu0
  %v299 = vpop.f32.mrb[0].mxu0
  %v300 = vpop.f32.mrb[0].mxu0
  %301 = vdwg.mxu0
  %v302 = vmul.f32 %v248, 0.35355338
  %v303 = vmul.f32 %v297, 0.35355338
  %v304 = vadd.f32 %v302, %v62
  %v305 = vadd.f32 %v303, %v63
  %v306 = vsel %vm206, %v304, -inf
  %307 = vmax.xlane.f32.xlu0 %v306
  %v308 = vpop.xlane.xlu0 %307
  %v309 = vsel %vm206, %v305, -inf
  %310 = vmax.xlane.f32.xlu0 %v309
  %v311 = vpop.xlane.xlu0 %310
  %v312 = vsub.f32 %v304, %v308
  %v313 = vsub.f32 %v305, %v311
  %v314 = vmul.f32 %v312, 1.442695
  %v315 = vpow.pop %v314
  %v316 = vmul.f32 %v313, 1.442695
  %v317 = vpow.pop %v316
  %v318 = vsel %vm206, %v315, 0.0
  %319 = vadd.xlane.f32.xlu0 %v318
  %v320 = vpop.xlane.xlu0 %319
  %v321 = vsel %vm206, %v317, 0.0
  %322 = vadd.xlane.f32.xlu0 %v321
  %v323 = vpop.xlane.xlu0 %322
  %v324 = vrcp.pop %v320
  %v325 = vmul.f32 %v315, %v324
  %v326 = vrcp.pop %v323
  %v327 = vmul.f32 %v317, %v326
  %v328 = vpack.c.bf16 %v325, %v325
  %v329 = vpack.c.bf16 %v327, %v327
  %330 = vrot.lane.b32.xlu0 %v201, 64
  %v331 = vpop.permute.xlu0 %330
  %v333 = vsel %vm206, %v328, 0
  %vm335 = vcmask 1043456
  %v337 = vsel %vm335, %v331, 0
  %339 = vmatprep.subr.bf16.mxu0 0
  %340 = vmatpush1.bf16.msra.mxu0 %v337
  %341 = vmatprep.subr.bf16.mxu0 0
  %342 = vmatpush1.bf16.msra.mxu0 0
  %343 = vmatprep.subr.bf16.mxu0 0
  %344 = vmatpush1.bf16.msra.mxu0 0
  %345 = vmatprep.subr.bf16.mxu0 0
  %346 = vmatpush1.bf16.msra.mxu0 0
  %347 = vmatprep.subr.bf16.mxu0 0
  %348 = vmatpush1.bf16.msra.mxu0 0
  %349 = vmatprep.subr.bf16.mxu0 0
  %350 = vmatpush1.bf16.msra.mxu0 0
  %351 = vmatprep.subr.bf16.mxu0 0
  %352 = vmatpush1.bf16.msra.mxu0 0
  %353 = vmatprep.subr.bf16.mxu0 0
  %354 = vmatpush1.bf16.msra.mxu0 0
  %355 = vmatprep.subr.bf16.mxu0 0
  %356 = vmatpush1.bf16.msra.mxu0 0
  %357 = vmatprep.subr.bf16.mxu0 0
  %358 = vmatpush1.bf16.msra.mxu0 0
  %359 = vmatprep.subr.bf16.mxu0 0
  %360 = vmatpush1.bf16.msra.mxu0 0
  %361 = vmatprep.subr.bf16.mxu0 0
  %362 = vmatpush1.bf16.msra.mxu0 0
  %363 = vmatprep.subr.bf16.mxu0 0
  %364 = vmatpush1.bf16.msra.mxu0 0
  %365 = vmatprep.subr.bf16.mxu0 0
  %366 = vmatpush1.bf16.msra.mxu0 0
  %367 = vmatprep.subr.bf16.mxu0 0
  %368 = vmatpush1.bf16.msra.mxu0 0
  %369 = vmatprep.subr.bf16.mxu0 0
  %370 = vmatpush1.bf16.msra.mxu0 0
  %371 = vmatprep.mubr.bf16.mxu0 0
  %372 = vmatmul.mubr.bf16.gmra.mrb[0].mxu0 %v333
  %v373 = vpop.f32.mrb[0].mxu0
  %v374 = vadd.f32 0.0, %v373
  %v375 = vpop.f32.mrb[0].mxu0
  %v376 = vpop.f32.mrb[0].mxu0
  %v377 = vpop.f32.mrb[0].mxu0
  %378 = vdwg.mxu0
  %379 = vrot.lane.b32.xlu0 %v202, 64
  %v380 = vpop.permute.xlu0 %379
  %v382 = vsel %vm206, %v329, 0
  %v385 = vsel %vm335, %v380, 0
  %387 = vmatprep.subr.bf16.mxu0 0
  %388 = vmatpush1.bf16.msra.mxu0 %v385
  %389 = vmatprep.subr.bf16.mxu0 0
  %390 = vmatpush1.bf16.msra.mxu0 0
  %391 = vmatprep.subr.bf16.mxu0 0
  %392 = vmatpush1.bf16.msra.mxu0 0
  %393 = vmatprep.subr.bf16.mxu0 0
  %394 = vmatpush1.bf16.msra.mxu0 0
  %395 = vmatprep.subr.bf16.mxu0 0
  %396 = vmatpush1.bf16.msra.mxu0 0
  %397 = vmatprep.subr.bf16.mxu0 0
  %398 = vmatpush1.bf16.msra.mxu0 0
  %399 = vmatprep.subr.bf16.mxu0 0
  %400 = vmatpush1.bf16.msra.mxu0 0
  %401 = vmatprep.subr.bf16.mxu0 0
  %402 = vmatpush1.bf16.msra.mxu0 0
  %403 = vmatprep.subr.bf16.mxu0 0
  %404 = vmatpush1.bf16.msra.mxu0 0
  %405 = vmatprep.subr.bf16.mxu0 0
  %406 = vmatpush1.bf16.msra.mxu0 0
  %407 = vmatprep.subr.bf16.mxu0 0
  %408 = vmatpush1.bf16.msra.mxu0 0
  %409 = vmatprep.subr.bf16.mxu0 0
  %410 = vmatpush1.bf16.msra.mxu0 0
  %411 = vmatprep.subr.bf16.mxu0 0
  %412 = vmatpush1.bf16.msra.mxu0 0
  %413 = vmatprep.subr.bf16.mxu0 0
  %414 = vmatpush1.bf16.msra.mxu0 0
  %415 = vmatprep.subr.bf16.mxu0 0
  %416 = vmatpush1.bf16.msra.mxu0 0
  %417 = vmatprep.subr.bf16.mxu0 0
  %418 = vmatpush1.bf16.msra.mxu0 0
  %419 = vmatprep.mubr.bf16.mxu0 0
  %420 = vmatmul.mubr.bf16.gmra.mrb[0].mxu0 %v382
  %v421 = vpop.f32.mrb[0].mxu0
  %v422 = vadd.f32 0.0, %v421
  %v423 = vpop.f32.mrb[0].mxu0
  %v424 = vpop.f32.mrb[0].mxu0
  %v425 = vpop.f32.mrb[0].mxu0
  %426 = vdwg.mxu0
  %427 = vst.msk [vmem:[#allocation2] sm:$0xff] %vm206, %v374
  %428 = vst.msk [vmem:[#allocation2 + $0x8] sm:$0xff] %vm206, %v422
  %429 = vrot.lane.b32.xlu0 %v201, 120
  %v430 = vpop.permute.xlu0 %429
  %431 = vrot.lane.b32.xlu0 %v201, 88
  %v432 = vpop.permute.xlu0 %431
  %v434 = vsel %vm206, %v430, 0
  %v437 = vsel %vm206, %v432, 0
  %439 = vmatprep.subr.bf16.mxu0 0
  %440 = vmatpush1.bf16.xpose.msra.mxu0 %v437
  %441 = vmatprep.subr.bf16.mxu0 0
  %442 = vmatpush1.bf16.xpose.msra.mxu0 0
  %443 = vmatprep.subr.bf16.mxu0 0
  %444 = vmatpush1.bf16.xpose.msra.mxu0 0
  %445 = vmatprep.subr.bf16.mxu0 0
  %446 = vmatpush1.bf16.xpose.msra.mxu0 0
  %447 = vmatprep.subr.bf16.mxu0 0
  %448 = vmatpush1.bf16.xpose.msra.mxu0 0
  %449 = vmatprep.subr.bf16.mxu0 0
  %450 = vmatpush1.bf16.xpose.msra.mxu0 0
  %451 = vmatprep.subr.bf16.mxu0 0
  %452 = vmatpush1.bf16.xpose.msra.mxu0 0
  %453 = vmatprep.subr.bf16.mxu0 0
  %454 = vmatpush1.bf16.xpose.msra.mxu0 0
  %455 = vmatprep.subr.bf16.mxu0 0
  %456 = vmatpush1.bf16.xpose.msra.mxu0 0
  %457 = vmatprep.subr.bf16.mxu0 0
  %458 = vmatpush1.bf16.xpose.msra.mxu0 0
  %459 = vmatprep.subr.bf16.mxu0 0
  %460 = vmatpush1.bf16.xpose.msra.mxu0 0
  %461 = vmatprep.subr.bf16.mxu0 0
  %462 = vmatpush1.bf16.xpose.msra.mxu0 0
  %463 = vmatprep.subr.bf16.mxu0 0
  %464 = vmatpush1.bf16.xpose.msra.mxu0 0
  %465 = vmatprep.subr.bf16.mxu0 0
  %466 = vmatpush1.bf16.xpose.msra.mxu0 0
  %467 = vmatprep.subr.bf16.mxu0 0
  %468 = vmatpush1.bf16.xpose.msra.mxu0 0
  %469 = vmatprep.subr.bf16.mxu0 0
  %470 = vmatpush1.bf16.xpose.msra.mxu0 0
  %471 = vmatprep.mubr.bf16.mxu0 0
  %472 = vmatmul.mubr.bf16.gmra.mrb[0].mxu0 %v434
  %v473 = vpop.f32.mrb[0].mxu0
  %v474 = vadd.f32 0.0, %v473
  %v475 = vpop.f32.mrb[0].mxu0
  %v476 = vpop.f32.mrb[0].mxu0
  %v477 = vpop.f32.mrb[0].mxu0
  %478 = vdwg.mxu0
  %479 = vrot.lane.b32.xlu0 %v202, 120
  %v480 = vpop.permute.xlu0 %479
  %481 = vrot.lane.b32.xlu0 %v202, 88
  %v482 = vpop.permute.xlu0 %481
  %v484 = vsel %vm206, %v480, 0
  %v487 = vsel %vm206, %v482, 0
  %489 = vmatprep.subr.bf16.mxu0 0
  %490 = vmatpush1.bf16.xpose.msra.mxu0 %v487
  %491 = vmatprep.subr.bf16.mxu0 0
  %492 = vmatpush1.bf16.xpose.msra.mxu0 0
  %493 = vmatprep.subr.bf16.mxu0 0
  %494 = vmatpush1.bf16.xpose.msra.mxu0 0
  %495 = vmatprep.subr.bf16.mxu0 0
  %496 = vmatpush1.bf16.xpose.msra.mxu0 0
  %497 = vmatprep.subr.bf16.mxu0 0
  %498 = vmatpush1.bf16.xpose.msra.mxu0 0
  %499 = vmatprep.subr.bf16.mxu0 0
  %500 = vmatpush1.bf16.xpose.msra.mxu0 0
  %501 = vmatprep.subr.bf16.mxu0 0
  %502 = vmatpush1.bf16.xpose.msra.mxu0 0
  %503 = vmatprep.subr.bf16.mxu0 0
  %504 = vmatpush1.bf16.xpose.msra.mxu0 0
  %505 = vmatprep.subr.bf16.mxu0 0
  %506 = vmatpush1.bf16.xpose.msra.mxu0 0
  %507 = vmatprep.subr.bf16.mxu0 0
  %508 = vmatpush1.bf16.xpose.msra.mxu0 0
  %509 = vmatprep.subr.bf16.mxu0 0
  %510 = vmatpush1.bf16.xpose.msra.mxu0 0
  %511 = vmatprep.subr.bf16.mxu0 0
  %512 = vmatpush1.bf16.xpose.msra.mxu0 0
  %513 = vmatprep.subr.bf16.mxu0 0
  %514 = vmatpush1.bf16.xpose.msra.mxu0 0
  %515 = vmatprep.subr.bf16.mxu0 0
  %516 = vmatpush1.bf16.xpose.msra.mxu0 0
  %517 = vmatprep.subr.bf16.mxu0 0
  %518 = vmatpush1.bf16.xpose.msra.mxu0 0
  %519 = vmatprep.subr.bf16.mxu0 0
  %520 = vmatpush1.bf16.xpose.msra.mxu0 0
  %521 = vmatprep.mubr.bf16.mxu0 0
  %522 = vmatmul.mubr.bf16.gmra.mrb[0].mxu0 %v484
  %v523 = vpop.f32.mrb[0].mxu0
  %v524 = vadd.f32 0.0, %v523
  %v525 = vpop.f32.mrb[0].mxu0
  %v526 = vpop.f32.mrb[0].mxu0
  %v527 = vpop.f32.mrb[0].mxu0
  %528 = vdwg.mxu0
  %v529 = vmul.f32 %v474, 0.35355338
  %v530 = vmul.f32 %v524, 0.35355338
  %v531 = vadd.f32 %v529, %v62
  %v532 = vadd.f32 %v530, %v63
  %v533 = vsel %vm206, %v531, -inf
  %534 = vmax.xlane.f32.xlu0 %v533
  %v535 = vpop.xlane.xlu0 %534
  %v536 = vsel %vm206, %v532, -inf
  %537 = vmax.xlane.f32.xlu0 %v536
  %v538 = vpop.xlane.xlu0 %537
  %v539 = vsub.f32 %v531, %v535
  %v540 = vsub.f32 %v532, %v538
  %v541 = vmul.f32 %v539, 1.442695
  %v542 = vpow.pop %v541
  %v543 = vmul.f32 %v540, 1.442695
  %v544 = vpow.pop %v543
  %v545 = vsel %vm206, %v542, 0.0
  %546 = vadd.xlane.f32.xlu0 %v545
  %v547 = vpop.xlane.xlu0 %546
  %v548 = vsel %vm206, %v544, 0.0
  %549 = vadd.xlane.f32.xlu0 %v548
  %v550 = vpop.xlane.xlu0 %549
  %v551 = vrcp.pop %v547
  %v552 = vmul.f32 %v542, %v551
  %v553 = vrcp.pop %v550
  %v554 = vmul.f32 %v544, %v553
  %v555 = vpack.c.bf16 %v552, %v552
  %v556 = vpack.c.bf16 %v554, %v554
  %557 = vrot.lane.b32.xlu0 %v201, 56
  %v558 = vpop.permute.xlu0 %557
  %v560 = vsel %vm206, %v555, 0
  %v563 = vsel %vm335, %v558, 0
  %565 = vmatprep.subr.bf16.mxu0 0
  %566 = vmatpush1.bf16.msra.mxu0 %v563
  %567 = vmatprep.subr.bf16.mxu0 0
  %568 = vmatpush1.bf16.msra.mxu0 0
  %569 = vmatprep.subr.bf16.mxu0 0
  %570 = vmatpush1.bf16.msra.mxu0 0
  %571 = vmatprep.subr.bf16.mxu0 0
  %572 = vmatpush1.bf16.msra.mxu0 0
  %573 = vmatprep.subr.bf16.mxu0 0
  %574 = vmatpush1.bf16.msra.mxu0 0
  %575 = vmatprep.subr.bf16.mxu0 0
  %576 = vmatpush1.bf16.msra.mxu0 0
  %577 = vmatprep.subr.bf16.mxu0 0
  %578 = vmatpush1.bf16.msra.mxu0 0
  %579 = vmatprep.subr.bf16.mxu0 0
  %580 = vmatpush1.bf16.msra.mxu0 0
  %581 = vmatprep.subr.bf16.mxu0 0
  %582 = vmatpush1.bf16.msra.mxu0 0
  %583 = vmatprep.subr.bf16.mxu0 0
  %584 = vmatpush1.bf16.msra.mxu0 0
  %585 = vmatprep.subr.bf16.mxu0 0
  %586 = vmatpush1.bf16.msra.mxu0 0
  %587 = vmatprep.subr.bf16.mxu0 0
  %588 = vmatpush1.bf16.msra.mxu0 0
  %589 = vmatprep.subr.bf16.mxu0 0
  %590 = vmatpush1.bf16.msra.mxu0 0
  %591 = vmatprep.subr.bf16.mxu0 0
  %592 = vmatpush1.bf16.msra.mxu0 0
  %593 = vmatprep.subr.bf16.mxu0 0
  %594 = vmatpush1.bf16.msra.mxu0 0
  %595 = vmatprep.subr.bf16.mxu0 0
  %596 = vmatpush1.bf16.msra.mxu0 0
  %597 = vmatprep.mubr.bf16.mxu0 0
  %598 = vmatmul.mubr.bf16.gmra.mrb[0].mxu0 %v560
  %v599 = vpop.f32.mrb[0].mxu0
  %v600 = vadd.f32 0.0, %v599
  %v601 = vpop.f32.mrb[0].mxu0
  %v602 = vpop.f32.mrb[0].mxu0
  %v603 = vpop.f32.mrb[0].mxu0
  %604 = vdwg.mxu0
  %605 = vrot.lane.b32.xlu0 %v202, 56
  %v606 = vpop.permute.xlu0 %605
  %v608 = vsel %vm206, %v556, 0
  %v611 = vsel %vm335, %v606, 0
  %613 = vmatprep.subr.bf16.mxu0 0
  %614 = vmatpush1.bf16.msra.mxu0 %v611
  %615 = vmatprep.subr.bf16.mxu0 0
  %616 = vmatpush1.bf16.msra.mxu0 0
  %617 = vmatprep.subr.bf16.mxu0 0
  %618 = vmatpush1.bf16.msra.mxu0 0
  %619 = vmatprep.subr.bf16.mxu0 0
  %620 = vmatpush1.bf16.msra.mxu0 0
  %621 = vmatprep.subr.bf16.mxu0 0
  %622 = vmatpush1.bf16.msra.mxu0 0
  %623 = vmatprep.subr.bf16.mxu0 0
  %624 = vmatpush1.bf16.msra.mxu0 0
  %625 = vmatprep.subr.bf16.mxu0 0
  %626 = vmatpush1.bf16.msra.mxu0 0
  %627 = vmatprep.subr.bf16.mxu0 0
  %628 = vmatpush1.bf16.msra.mxu0 0
  %629 = vmatprep.subr.bf16.mxu0 0
  %630 = vmatpush1.bf16.msra.mxu0 0
  %631 = vmatprep.subr.bf16.mxu0 0
  %632 = vmatpush1.bf16.msra.mxu0 0
  %633 = vmatprep.subr.bf16.mxu0 0
  %634 = vmatpush1.bf16.msra.mxu0 0
  %635 = vmatprep.subr.bf16.mxu0 0
  %636 = vmatpush1.bf16.msra.mxu0 0
  %637 = vmatprep.subr.bf16.mxu0 0
  %638 = vmatpush1.bf16.msra.mxu0 0
  %639 = vmatprep.subr.bf16.mxu0 0
  %640 = vmatpush1.bf16.msra.mxu0 0
  %641 = vmatprep.subr.bf16.mxu0 0
  %642 = vmatpush1.bf16.msra.mxu0 0
  %643 = vmatprep.subr.bf16.mxu0 0
  %644 = vmatpush1.bf16.msra.mxu0 0
  %645 = vmatprep.mubr.bf16.mxu0 0
  %646 = vmatmul.mubr.bf16.gmra.mrb[0].mxu0 %v608
  %v647 = vpop.f32.mrb[0].mxu0
  %v648 = vadd.f32 0.0, %v647
  %v649 = vpop.f32.mrb[0].mxu0
  %v650 = vpop.f32.mrb[0].mxu0
  %v651 = vpop.f32.mrb[0].mxu0
  %652 = vdwg.mxu0
  %655 = vrot.lane.b32.xlu0 %v600, 8
  %v656 = vpop.permute.xlu0 %655
  %657 = vrot.lane.b32.xlu0 %v648, 8
  %v658 = vpop.permute.xlu0 %657
  %vm661 = vcmask 130112
  %662 = vst.msk [vmem:[#allocation2] sm:$0xff] %vm661, %v656
  %663 = vst.msk [vmem:[#allocation2 + $0x8] sm:$0xff] %vm661, %v658
  %664 = vrot.lane.b32.xlu0 %v201, 112
  %v665 = vpop.permute.xlu0 %664
  %666 = vrot.lane.b32.xlu0 %v201, 80
  %v667 = vpop.permute.xlu0 %666
  %v669 = vsel %vm206, %v665, 0
  %v672 = vsel %vm206, %v667, 0
  %674 = vmatprep.subr.bf16.mxu0 0
  %675 = vmatpush1.bf16.xpose.msra.mxu0 %v672
  %676 = vmatprep.subr.bf16.mxu0 0
  %677 = vmatpush1.bf16.xpose.msra.mxu0 0
  %678 = vmatprep.subr.bf16.mxu0 0
  %679 = vmatpush1.bf16.xpose.msra.mxu0 0
  %680 = vmatprep.subr.bf16.mxu0 0
  %681 = vmatpush1.bf16.xpose.msra.mxu0 0
  %682 = vmatprep.subr.bf16.mxu0 0
  %683 = vmatpush1.bf16.xpose.msra.mxu0 0
  %684 = vmatprep.subr.bf16.mxu0 0
  %685 = vmatpush1.bf16.xpose.msra.mxu0 0
  %686 = vmatprep.subr.bf16.mxu0 0
  %687 = vmatpush1.bf16.xpose.msra.mxu0 0
  %688 = vmatprep.subr.bf16.mxu0 0
  %689 = vmatpush1.bf16.xpose.msra.mxu0 0
  %690 = vmatprep.subr.bf16.mxu0 0
  %691 = vmatpush1.bf16.xpose.msra.mxu0 0
  %692 = vmatprep.subr.bf16.mxu0 0
  %693 = vmatpush1.bf16.xpose.msra.mxu0 0
  %694 = vmatprep.subr.bf16.mxu0 0
  %695 = vmatpush1.bf16.xpose.msra.mxu0 0
  %696 = vmatprep.subr.bf16.mxu0 0
  %697 = vmatpush1.bf16.xpose.msra.mxu0 0
  %698 = vmatprep.subr.bf16.mxu0 0
  %699 = vmatpush1.bf16.xpose.msra.mxu0 0
  %700 = vmatprep.subr.bf16.mxu0 0
  %701 = vmatpush1.bf16.xpose.msra.mxu0 0
  %702 = vmatprep.subr.bf16.mxu0 0
  %703 = vmatpush1.bf16.xpose.msra.mxu0 0
  %704 = vmatprep.subr.bf16.mxu0 0
  %705 = vmatpush1.bf16.xpose.msra.mxu0 0
  %706 = vmatprep.mubr.bf16.mxu0 0
  %707 = vmatmul.mubr.bf16.gmra.mrb[0].mxu0 %v669
  %v708 = vpop.f32.mrb[0].mxu0
  %v709 = vadd.f32 0.0, %v708
  %v710 = vpop.f32.mrb[0].mxu0
  %v711 = vpop.f32.mrb[0].mxu0
  %v712 = vpop.f32.mrb[0].mxu0
  %713 = vdwg.mxu0
  %714 = vrot.lane.b32.xlu0 %v202, 112
  %v715 = vpop.permute.xlu0 %714
  %716 = vrot.lane.b32.xlu0 %v202, 80
  %v717 = vpop.permute.xlu0 %716
  %v719 = vsel %vm206, %v715, 0
  %v722 = vsel %vm206, %v717, 0
  %724 = vmatprep.subr.bf16.mxu0 0
  %725 = vmatpush1.bf16.xpose.msra.mxu0 %v722
  %726 = vmatprep.subr.bf16.mxu0 0
  %727 = vmatpush1.bf16.xpose.msra.mxu0 0
  %728 = vmatprep.subr.bf16.mxu0 0
  %729 = vmatpush1.bf16.xpose.msra.mxu0 0
  %730 = vmatprep.subr.bf16.mxu0 0
  %731 = vmatpush1.bf16.xpose.msra.mxu0 0
  %732 = vmatprep.subr.bf16.mxu0 0
  %733 = vmatpush1.bf16.xpose.msra.mxu0 0
  %734 = vmatprep.subr.bf16.mxu0 0
  %735 = vmatpush1.bf16.xpose.msra.mxu0 0
  %736 = vmatprep.subr.bf16.mxu0 0
  %737 = vmatpush1.bf16.xpose.msra.mxu0 0
  %738 = vmatprep.subr.bf16.mxu0 0
  %739 = vmatpush1.bf16.xpose.msra.mxu0 0
  %740 = vmatprep.subr.bf16.mxu0 0
  %741 = vmatpush1.bf16.xpose.msra.mxu0 0
  %742 = vmatprep.subr.bf16.mxu0 0
  %743 = vmatpush1.bf16.xpose.msra.mxu0 0
  %744 = vmatprep.subr.bf16.mxu0 0
  %745 = vmatpush1.bf16.xpose.msra.mxu0 0
  %746 = vmatprep.subr.bf16.mxu0 0
  %747 = vmatpush1.bf16.xpose.msra.mxu0 0
  %748 = vmatprep.subr.bf16.mxu0 0
  %749 = vmatpush1.bf16.xpose.msra.mxu0 0
  %750 = vmatprep.subr.bf16.mxu0 0
  %751 = vmatpush1.bf16.xpose.msra.mxu0 0
  %752 = vmatprep.subr.bf16.mxu0 0
  %753 = vmatpush1.bf16.xpose.msra.mxu0 0
  %754 = vmatprep.subr.bf16.mxu0 0
  %755 = vmatpush1.bf16.xpose.msra.mxu0 0
  %756 = vmatprep.mubr.bf16.mxu0 0
  %757 = vmatmul.mubr.bf16.gmra.mrb[0].mxu0 %v719
  %v758 = vpop.f32.mrb[0].mxu0
  %v759 = vadd.f32 0.0, %v758
  %v760 = vpop.f32.mrb[0].mxu0
  %v761 = vpop.f32.mrb[0].mxu0
  %v762 = vpop.f32.mrb[0].mxu0
  %763 = vdwg.mxu0
  %v764 = vmul.f32 %v709, 0.35355338
  %v765 = vmul.f32 %v759, 0.35355338
  %v766 = vadd.f32 %v764, %v62
  %v767 = vadd.f32 %v765, %v63
  %v768 = vsel %vm206, %v766, -inf
  %769 = vmax.xlane.f32.xlu0 %v768
  %v770 = vpop.xlane.xlu0 %769
  %v771 = vsel %vm206, %v767, -inf
  %772 = vmax.xlane.f32.xlu0 %v771
  %v773 = vpop.xlane.xlu0 %772
  %v774 = vsub.f32 %v766, %v770
  %v775 = vsub.f32 %v767, %v773
  %v776 = vmul.f32 %v774, 1.442695
  %v777 = vpow.pop %v776
  %v778 = vmul.f32 %v775, 1.442695
  %v779 = vpow.pop %v778
  %v780 = vsel %vm206, %v777, 0.0
  %781 = vadd.xlane.f32.xlu0 %v780
  %v782 = vpop.xlane.xlu0 %781
  %v783 = vsel %vm206, %v779, 0.0
  %784 = vadd.xlane.f32.xlu0 %v783
  %v785 = vpop.xlane.xlu0 %784
  %v786 = vrcp.pop %v782
  %v787 = vmul.f32 %v777, %v786
  %v788 = vrcp.pop %v785
  %v789 = vmul.f32 %v779, %v788
  %v790 = vpack.c.bf16 %v787, %v787
  %v791 = vpack.c.bf16 %v789, %v789
  %792 = vrot.lane.b32.xlu0 %v201, 48
  %v793 = vpop.permute.xlu0 %792
  %v795 = vsel %vm206, %v790, 0
  %v798 = vsel %vm335, %v793, 0
  %800 = vmatprep.subr.bf16.mxu0 0
  %801 = vmatpush1.bf16.msra.mxu0 %v798
  %802 = vmatprep.subr.bf16.mxu0 0
  %803 = vmatpush1.bf16.msra.mxu0 0
  %804 = vmatprep.subr.bf16.mxu0 0
  %805 = vmatpush1.bf16.msra.mxu0 0
  %806 = vmatprep.subr.bf16.mxu0 0
  %807 = vmatpush1.bf16.msra.mxu0 0
  %808 = vmatprep.subr.bf16.mxu0 0
  %809 = vmatpush1.bf16.msra.mxu0 0
  %810 = vmatprep.subr.bf16.mxu0 0
  %811 = vmatpush1.bf16.msra.mxu0 0
  %812 = vmatprep.subr.bf16.mxu0 0
  %813 = vmatpush1.bf16.msra.mxu0 0
  %814 = vmatprep.subr.bf16.mxu0 0
  %815 = vmatpush1.bf16.msra.mxu0 0
  %816 = vmatprep.subr.bf16.mxu0 0
  %817 = vmatpush1.bf16.msra.mxu0 0
  %818 = vmatprep.subr.bf16.mxu0 0
  %819 = vmatpush1.bf16.msra.mxu0 0
  %820 = vmatprep.subr.bf16.mxu0 0
  %821 = vmatpush1.bf16.msra.mxu0 0
  %822 = vmatprep.subr.bf16.mxu0 0
  %823 = vmatpush1.bf16.msra.mxu0 0
  %824 = vmatprep.subr.bf16.mxu0 0
  %825 = vmatpush1.bf16.msra.mxu0 0
  %826 = vmatprep.subr.bf16.mxu0 0
  %827 = vmatpush1.bf16.msra.mxu0 0
  %828 = vmatprep.subr.bf16.mxu0 0
  %829 = vmatpush1.bf16.msra.mxu0 0
  %830 = vmatprep.subr.bf16.mxu0 0
  %831 = vmatpush1.bf16.msra.mxu0 0
  %832 = vmatprep.mubr.bf16.mxu0 0
  %833 = vmatmul.mubr.bf16.gmra.mrb[0].mxu0 %v795
  %v834 = vpop.f32.mrb[0].mxu0
  %v835 = vadd.f32 0.0, %v834
  %v836 = vpop.f32.mrb[0].mxu0
  %v837 = vpop.f32.mrb[0].mxu0
  %v838 = vpop.f32.mrb[0].mxu0
  %839 = vdwg.mxu0
  %840 = vrot.lane.b32.xlu0 %v202, 48
  %v841 = vpop.permute.xlu0 %840
  %v843 = vsel %vm206, %v791, 0
  %v846 = vsel %vm335, %v841, 0
  %848 = vmatprep.subr.bf16.mxu0 0
  %849 = vmatpush1.bf16.msra.mxu0 %v846
  %850 = vmatprep.subr.bf16.mxu0 0
  %851 = vmatpush1.bf16.msra.mxu0 0
  %852 = vmatprep.subr.bf16.mxu0 0
  %853 = vmatpush1.bf16.msra.mxu0 0
  %854 = vmatprep.subr.bf16.mxu0 0
  %855 = vmatpush1.bf16.msra.mxu0 0
  %856 = vmatprep.subr.bf16.mxu0 0
  %857 = vmatpush1.bf16.msra.mxu0 0
  %858 = vmatprep.subr.bf16.mxu0 0
  %859 = vmatpush1.bf16.msra.mxu0 0
  %860 = vmatprep.subr.bf16.mxu0 0
  %861 = vmatpush1.bf16.msra.mxu0 0
  %862 = vmatprep.subr.bf16.mxu0 0
  %863 = vmatpush1.bf16.msra.mxu0 0
  %864 = vmatprep.subr.bf16.mxu0 0
  %865 = vmatpush1.bf16.msra.mxu0 0
  %866 = vmatprep.subr.bf16.mxu0 0
  %867 = vmatpush1.bf16.msra.mxu0 0
  %868 = vmatprep.subr.bf16.mxu0 0
  %869 = vmatpush1.bf16.msra.mxu0 0
  %870 = vmatprep.subr.bf16.mxu0 0
  %871 = vmatpush1.bf16.msra.mxu0 0
  %872 = vmatprep.subr.bf16.mxu0 0
  %873 = vmatpush1.bf16.msra.mxu0 0
  %874 = vmatprep.subr.bf16.mxu0 0
  %875 = vmatpush1.bf16.msra.mxu0 0
  %876 = vmatprep.subr.bf16.mxu0 0
  %877 = vmatpush1.bf16.msra.mxu0 0
  %878 = vmatprep.subr.bf16.mxu0 0
  %879 = vmatpush1.bf16.msra.mxu0 0
  %880 = vmatprep.mubr.bf16.mxu0 0
  %881 = vmatmul.mubr.bf16.gmra.mrb[0].mxu0 %v843
  %v882 = vpop.f32.mrb[0].mxu0
  %v883 = vadd.f32 0.0, %v882
  %v884 = vpop.f32.mrb[0].mxu0
  %v885 = vpop.f32.mrb[0].mxu0
  %v886 = vpop.f32.mrb[0].mxu0
  %887 = vdwg.mxu0
  %890 = vrot.lane.b32.xlu0 %v835, 16
  %v891 = vpop.permute.xlu0 %890
  %892 = vrot.lane.b32.xlu0 %v883, 16
  %v893 = vpop.permute.xlu0 %892
  %vm896 = vcmask 195712
  %897 = vst.msk [vmem:[#allocation2] sm:$0xff] %vm896, %v891
  %898 = vst.msk [vmem:[#allocation2 + $0x8] sm:$0xff] %vm896, %v893
  %899 = vrot.lane.b32.xlu0 %v201, 104
  %v900 = vpop.permute.xlu0 %899
  %901 = vrot.lane.b32.xlu0 %v201, 72
  %v902 = vpop.permute.xlu0 %901
  %v904 = vsel %vm206, %v900, 0
  %v907 = vsel %vm206, %v902, 0
  %909 = vmatprep.subr.bf16.mxu0 0
  %910 = vmatpush1.bf16.xpose.msra.mxu0 %v907
  %911 = vmatprep.subr.bf16.mxu0 0
  %912 = vmatpush1.bf16.xpose.msra.mxu0 0
  %913 = vmatprep.subr.bf16.mxu0 0
  %914 = vmatpush1.bf16.xpose.msra.mxu0 0
  %915 = vmatprep.subr.bf16.mxu0 0
  %916 = vmatpush1.bf16.xpose.msra.mxu0 0
  %917 = vmatprep.subr.bf16.mxu0 0
  %918 = vmatpush1.bf16.xpose.msra.mxu0 0
  %919 = vmatprep.subr.bf16.mxu0 0
  %920 = vmatpush1.bf16.xpose.msra.mxu0 0
  %921 = vmatprep.subr.bf16.mxu0 0
  %922 = vmatpush1.bf16.xpose.msra.mxu0 0
  %923 = vmatprep.subr.bf16.mxu0 0
  %924 = vmatpush1.bf16.xpose.msra.mxu0 0
  %925 = vmatprep.subr.bf16.mxu0 0
  %926 = vmatpush1.bf16.xpose.msra.mxu0 0
  %927 = vmatprep.subr.bf16.mxu0 0
  %928 = vmatpush1.bf16.xpose.msra.mxu0 0
  %929 = vmatprep.subr.bf16.mxu0 0
  %930 = vmatpush1.bf16.xpose.msra.mxu0 0
  %931 = vmatprep.subr.bf16.mxu0 0
  %932 = vmatpush1.bf16.xpose.msra.mxu0 0
  %933 = vmatprep.subr.bf16.mxu0 0
  %934 = vmatpush1.bf16.xpose.msra.mxu0 0
  %935 = vmatprep.subr.bf16.mxu0 0
  %936 = vmatpush1.bf16.xpose.msra.mxu0 0
  %937 = vmatprep.subr.bf16.mxu0 0
  %938 = vmatpush1.bf16.xpose.msra.mxu0 0
  %939 = vmatprep.subr.bf16.mxu0 0
  %940 = vmatpush1.bf16.xpose.msra.mxu0 0
  %941 = vmatprep.mubr.bf16.mxu0 0
  %942 = vmatmul.mubr.bf16.gmra.mrb[0].mxu0 %v904
  %v943 = vpop.f32.mrb[0].mxu0
  %v944 = vadd.f32 0.0, %v943
  %v945 = vpop.f32.mrb[0].mxu0
  %v946 = vpop.f32.mrb[0].mxu0
  %v947 = vpop.f32.mrb[0].mxu0
  %948 = vdwg.mxu0
  %949 = vrot.lane.b32.xlu0 %v202, 104
  %v950 = vpop.permute.xlu0 %949
  %951 = vrot.lane.b32.xlu0 %v202, 72
  %v952 = vpop.permute.xlu0 %951
  %v954 = vsel %vm206, %v950, 0
  %v957 = vsel %vm206, %v952, 0
  %959 = vmatprep.subr.bf16.mxu0 0
  %960 = vmatpush1.bf16.xpose.msra.mxu0 %v957
  %961 = vmatprep.subr.bf16.mxu0 0
  %962 = vmatpush1.bf16.xpose.msra.mxu0 0
  %963 = vmatprep.subr.bf16.mxu0 0
  %964 = vmatpush1.bf16.xpose.msra.mxu0 0
  %965 = vmatprep.subr.bf16.mxu0 0
  %966 = vmatpush1.bf16.xpose.msra.mxu0 0
  %967 = vmatprep.subr.bf16.mxu0 0
  %968 = vmatpush1.bf16.xpose.msra.mxu0 0
  %969 = vmatprep.subr.bf16.mxu0 0
  %970 = vmatpush1.bf16.xpose.msra.mxu0 0
  %971 = vmatprep.subr.bf16.mxu0 0
  %972 = vmatpush1.bf16.xpose.msra.mxu0 0
  %973 = vmatprep.subr.bf16.mxu0 0
  %974 = vmatpush1.bf16.xpose.msra.mxu0 0
  %975 = vmatprep.subr.bf16.mxu0 0
  %976 = vmatpush1.bf16.xpose.msra.mxu0 0
  %977 = vmatprep.subr.bf16.mxu0 0
  %978 = vmatpush1.bf16.xpose.msra.mxu0 0
  %979 = vmatprep.subr.bf16.mxu0 0
  %980 = vmatpush1.bf16.xpose.msra.mxu0 0
  %981 = vmatprep.subr.bf16.mxu0 0
  %982 = vmatpush1.bf16.xpose.msra.mxu0 0
  %983 = vmatprep.subr.bf16.mxu0 0
  %984 = vmatpush1.bf16.xpose.msra.mxu0 0
  %985 = vmatprep.subr.bf16.mxu0 0
  %986 = vmatpush1.bf16.xpose.msra.mxu0 0
  %987 = vmatprep.subr.bf16.mxu0 0
  %988 = vmatpush1.bf16.xpose.msra.mxu0 0
  %989 = vmatprep.subr.bf16.mxu0 0
  %990 = vmatpush1.bf16.xpose.msra.mxu0 0
  %991 = vmatprep.mubr.bf16.mxu0 0
  %992 = vmatmul.mubr.bf16.gmra.mrb[0].mxu0 %v954
  %v993 = vpop.f32.mrb[0].mxu0
  %v994 = vadd.f32 0.0, %v993
  %v995 = vpop.f32.mrb[0].mxu0
  %v996 = vpop.f32.mrb[0].mxu0
  %v997 = vpop.f32.mrb[0].mxu0
  %998 = vdwg.mxu0
  %v999 = vmul.f32 %v944, 0.35355338
  %v1000 = vmul.f32 %v994, 0.35355338
  %v1001 = vadd.f32 %v999, %v62
  %v1002 = vadd.f32 %v1000, %v63
  %v1003 = vsel %vm206, %v1001, -inf
  %1004 = vmax.xlane.f32.xlu0 %v1003
  %v1005 = vpop.xlane.xlu0 %1004
  %v1006 = vsel %vm206, %v1002, -inf
  %1007 = vmax.xlane.f32.xlu0 %v1006
  %v1008 = vpop.xlane.xlu0 %1007
  %v1009 = vsub.f32 %v1001, %v1005
  %v1010 = vsub.f32 %v1002, %v1008
  %v1011 = vmul.f32 %v1009, 1.442695
  %v1012 = vpow.pop %v1011
  %v1013 = vmul.f32 %v1010, 1.442695
  %v1014 = vpow.pop %v1013
  %v1015 = vsel %vm206, %v1012, 0.0
  %1016 = vadd.xlane.f32.xlu0 %v1015
  %v1017 = vpop.xlane.xlu0 %1016
  %v1018 = vsel %vm206, %v1014, 0.0
  %1019 = vadd.xlane.f32.xlu0 %v1018
  %v1020 = vpop.xlane.xlu0 %1019
  %v1021 = vrcp.pop %v1017
  %v1022 = vmul.f32 %v1012, %v1021
  %v1023 = vrcp.pop %v1020
  %v1024 = vmul.f32 %v1014, %v1023
  %v1025 = vpack.c.bf16 %v1022, %v1022
  %v1026 = vpack.c.bf16 %v1024, %v1024
  %1027 = vrot.lane.b32.xlu0 %v201, 40
  %v1028 = vpop.permute.xlu0 %1027
  %v1030 = vsel %vm206, %v1025, 0
  %v1033 = vsel %vm335, %v1028, 0
  %1035 = vmatprep.subr.bf16.mxu0 0
  %1036 = vmatpush1.bf16.msra.mxu0 %v1033
  %1037 = vmatprep.subr.bf16.mxu0 0
  %1038 = vmatpush1.bf16.msra.mxu0 0
  %1039 = vmatprep.subr.bf16.mxu0 0
  %1040 = vmatpush1.bf16.msra.mxu0 0
  %1041 = vmatprep.subr.bf16.mxu0 0
  %1042 = vmatpush1.bf16.msra.mxu0 0
  %1043 = vmatprep.subr.bf16.mxu0 0
  %1044 = vmatpush1.bf16.msra.mxu0 0
  %1045 = vmatprep.subr.bf16.mxu0 0
  %1046 = vmatpush1.bf16.msra.mxu0 0
  %1047 = vmatprep.subr.bf16.mxu0 0
  %1048 = vmatpush1.bf16.msra.mxu0 0
  %1049 = vmatprep.subr.bf16.mxu0 0
  %1050 = vmatpush1.bf16.msra.mxu0 0
  %1051 = vmatprep.subr.bf16.mxu0 0
  %1052 = vmatpush1.bf16.msra.mxu0 0
  %1053 = vmatprep.subr.bf16.mxu0 0
  %1054 = vmatpush1.bf16.msra.mxu0 0
  %1055 = vmatprep.subr.bf16.mxu0 0
  %1056 = vmatpush1.bf16.msra.mxu0 0
  %1057 = vmatprep.subr.bf16.mxu0 0
  %1058 = vmatpush1.bf16.msra.mxu0 0
  %1059 = vmatprep.subr.bf16.mxu0 0
  %1060 = vmatpush1.bf16.msra.mxu0 0
  %1061 = vmatprep.subr.bf16.mxu0 0
  %1062 = vmatpush1.bf16.msra.mxu0 0
  %1063 = vmatprep.subr.bf16.mxu0 0
  %1064 = vmatpush1.bf16.msra.mxu0 0
  %1065 = vmatprep.subr.bf16.mxu0 0
  %1066 = vmatpush1.bf16.msra.mxu0 0
  %1067 = vmatprep.mubr.bf16.mxu0 0
  %1068 = vmatmul.mubr.bf16.gmra.mrb[0].mxu0 %v1030
  %v1069 = vpop.f32.mrb[0].mxu0
  %v1070 = vadd.f32 0.0, %v1069
  %v1071 = vpop.f32.mrb[0].mxu0
  %v1072 = vpop.f32.mrb[0].mxu0
  %v1073 = vpop.f32.mrb[0].mxu0
  %1074 = vdwg.mxu0
  %1075 = vrot.lane.b32.xlu0 %v202, 40
  %v1076 = vpop.permute.xlu0 %1075
  %v1078 = vsel %vm206, %v1026, 0
  %v1081 = vsel %vm335, %v1076, 0
  %1083 = vmatprep.subr.bf16.mxu0 0
  %1084 = vmatpush1.bf16.msra.mxu0 %v1081
  %1085 = vmatprep.subr.bf16.mxu0 0
  %1086 = vmatpush1.bf16.msra.mxu0 0
  %1087 = vmatprep.subr.bf16.mxu0 0
  %1088 = vmatpush1.bf16.msra.mxu0 0
  %1089 = vmatprep.subr.bf16.mxu0 0
  %1090 = vmatpush1.bf16.msra.mxu0 0
  %1091 = vmatprep.subr.bf16.mxu0 0
  %1092 = vmatpush1.bf16.msra.mxu0 0
  %1093 = vmatprep.subr.bf16.mxu0 0
  %1094 = vmatpush1.bf16.msra.mxu0 0
  %1095 = vmatprep.subr.bf16.mxu0 0
  %1096 = vmatpush1.bf16.msra.mxu0 0
  %1097 = vmatprep.subr.bf16.mxu0 0
  %1098 = vmatpush1.bf16.msra.mxu0 0
  %1099 = vmatprep.subr.bf16.mxu0 0
  %1100 = vmatpush1.bf16.msra.mxu0 0
  %1101 = vmatprep.subr.bf16.mxu0 0
  %1102 = vmatpush1.bf16.msra.mxu0 0
  %1103 = vmatprep.subr.bf16.mxu0 0
  %1104 = vmatpush1.bf16.msra.mxu0 0
  %1105 = vmatprep.subr.bf16.mxu0 0
  %1106 = vmatpush1.bf16.msra.mxu0 0
  %1107 = vmatprep.subr.bf16.mxu0 0
  %1108 = vmatpush1.bf16.msra.mxu0 0
  %1109 = vmatprep.subr.bf16.mxu0 0
  %1110 = vmatpush1.bf16.msra.mxu0 0
  %1111 = vmatprep.subr.bf16.mxu0 0
  %1112 = vmatpush1.bf16.msra.mxu0 0
  %1113 = vmatprep.subr.bf16.mxu0 0
  %1114 = vmatpush1.bf16.msra.mxu0 0
  %1115 = vmatprep.mubr.bf16.mxu0 0
  %1116 = vmatmul.mubr.bf16.gmra.mrb[0].mxu0 %v1078
  %v1117 = vpop.f32.mrb[0].mxu0
  %v1118 = vadd.f32 0.0, %v1117
  %v1119 = vpop.f32.mrb[0].mxu0
  %v1120 = vpop.f32.mrb[0].mxu0
  %v1121 = vpop.f32.mrb[0].mxu0
  %1122 = vdwg.mxu0
  %1125 = vrot.lane.b32.xlu0 %v1070, 24
  %v1126 = vpop.permute.xlu0 %1125
  %1127 = vrot.lane.b32.xlu0 %v1118, 24
  %v1128 = vpop.permute.xlu0 %1127
  %vm1131 = vcmask 261312
  %1132 = vst.msk [vmem:[#allocation2] sm:$0xff] %vm1131, %v1126
  %1133 = vst.msk [vmem:[#allocation2 + $0x8] sm:$0xff] %vm1131, %v1128
  %v1134 = vld [vmem:[#allocation2] sm:$0xff]
  %v1135 = vld [vmem:[#allocation2 + $0x8] sm:$0xff]
  %v1136 = vpack.c.bf16 %v1135, %v1134
  %v1141 = vunpack.c.l.b16 %v76
  %v1142 = vunpack.c.l.b16 %v77
  %v1143 = vunpack.c.l.b16 %v78
  %v1144 = vunpack.c.l.b16 %v79
  %v1145 = vpack.c.b16 %v1142, %v1141
  %v1146 = vpack.c.b16 %v1144, %v1143
  %v1150 = vsel %vm100, %v1136, 0
  %1152 = vmatprep.subr.bf16.mxu0 0
  %1153 = vmatpush1.bf16.msra.mxu0 %v1145
  %1154 = vmatprep.subr.bf16.mxu0 0
  %1155 = vmatpush1.bf16.msra.mxu0 %v1146
  %1156 = vmatprep.subr.bf16.mxu0 0
  %1157 = vmatpush1.bf16.msra.mxu0 0
  %1158 = vmatprep.subr.bf16.mxu0 0
  %1159 = vmatpush1.bf16.msra.mxu0 0
  %1160 = vmatprep.subr.bf16.mxu0 0
  %1161 = vmatpush1.bf16.msra.mxu0 0
  %1162 = vmatprep.subr.bf16.mxu0 0
  %1163 = vmatpush1.bf16.msra.mxu0 0
  %1164 = vmatprep.subr.bf16.mxu0 0
  %1165 = vmatpush1.bf16.msra.mxu0 0
  %1166 = vmatprep.subr.bf16.mxu0 0
  %1167 = vmatpush1.bf16.msra.mxu0 0
  %1168 = vmatprep.subr.bf16.mxu0 0
  %1169 = vmatpush1.bf16.msra.mxu0 0
  %1170 = vmatprep.subr.bf16.mxu0 0
  %1171 = vmatpush1.bf16.msra.mxu0 0
  %1172 = vmatprep.subr.bf16.mxu0 0
  %1173 = vmatpush1.bf16.msra.mxu0 0
  %1174 = vmatprep.subr.bf16.mxu0 0
  %1175 = vmatpush1.bf16.msra.mxu0 0
  %1176 = vmatprep.subr.bf16.mxu0 0
  %1177 = vmatpush1.bf16.msra.mxu0 0
  %1178 = vmatprep.subr.bf16.mxu0 0
  %1179 = vmatpush1.bf16.msra.mxu0 0
  %1180 = vmatprep.subr.bf16.mxu0 0
  %1181 = vmatpush1.bf16.msra.mxu0 0
  %1182 = vmatprep.subr.bf16.mxu0 0
  %1183 = vmatpush1.bf16.msra.mxu0 0
  %1184 = vmatprep.mubr.bf16.mxu0 0
  %1185 = vmatmul.mubr.bf16.gmra.mrb[0].mxu0 %v1150
  %v1186 = vpop.f32.mrb[0].mxu0
  %v1187 = vadd.f32 0.0, %v1186
  %v1188 = vpop.f32.mrb[0].mxu0
  %v1189 = vpop.f32.mrb[0].mxu0
  %v1190 = vadd.f32 0.0, %v1189
  %v1191 = vpop.f32.mrb[0].mxu0
  %1192 = vdwg.mxu0
  %v1193 = vadd.f32 %v18, %v1187
  %v1194 = vadd.f32 %v19, %v1190
  %v1195 = vlaneseq
  %v1196 = vshrl.u32 %v1195, 7
  %v1197 = vsub.s32 0, %v1196
  %v1198 = vrot.slane %v67, %v1197
  %v1199 = vadd.f32 %v1193, %v1198
  %v1200 = vadd.f32 %v1194, %v1198
  %v1201 = vsel %vm100, %v1199, 0.0
  %1202 = vadd.xlane.f32.xlu0 %v1201
  %v1203 = vpop.xlane.xlu0 %1202
  %v1204 = vsel %vm100, %v1200, 0.0
  %1205 = vadd.xlane.f32.xlu0 %v1204
  %v1206 = vpop.xlane.xlu0 %1205
  %v1207 = vmul.f32 %v1203, %v107
  %v1208 = vmul.f32 %v1206, %v107
  %v1209 = vsub.f32 %v1199, %v1207
  %v1210 = vsub.f32 %v1200, %v1208
  %v1211 = vmul.f32 %v1209, %v1209
  %v1212 = vmul.f32 %v1210, %v1210
  %v1213 = vsel %vm100, %v1211, 0.0
  %1214 = vadd.xlane.f32.xlu0 %v1213
  %v1215 = vpop.xlane.xlu0 %1214
  %v1216 = vsel %vm100, %v1212, 0.0
  %1217 = vadd.xlane.f32.xlu0 %v1216
  %v1218 = vpop.xlane.xlu0 %1217
  %v1219 = vmul.f32 %v1215, %v107
  %v1220 = vmul.f32 %v1218, %v107
  %v1221 = vadd.f32 %v1219, 1e-05
  %v1222 = vadd.f32 %v1220, 1e-05
  %v1223 = vrsqrt.pop %v1221
  %v1224 = vrsqrt.pop %v1222
  %v1225 = vmul.f32 %v1209, %v1223
  %v1226 = vmul.f32 %v1210, %v1224
  %v1227 = vlaneseq
  %v1228 = vshrl.u32 %v1227, 7
  %v1229 = vsub.s32 0, %v1228
  %v1230 = vrot.slane %v68, %v1229
  %v1231 = vmul.f32 %v1225, %v1230
  %v1232 = vmul.f32 %v1226, %v1230
  %v1233 = vlaneseq
  %v1234 = vshrl.u32 %v1233, 7
  %v1235 = vsub.s32 0, %v1234
  %v1236 = vrot.slane %v69, %v1235
  %v1237 = vadd.f32 %v1231, %v1236
  %v1238 = vadd.f32 %v1232, %v1236
  %v1239 = vpack.c.bf16 %v1238, %v1237
  %v1240 = vlaneseq
  %v1241 = vshrl.u32 %v1240, 7
  %v1242 = vsub.s32 0, %v1241
  %v1243 = vrot.slane %v70, %v1242
  %v1248 = vunpack.c.l.b16 %v80
  %v1249 = vunpack.c.l.b16 %v81
  %v1250 = vunpack.c.l.b16 %v82
  %v1251 = vunpack.c.l.b16 %v83
  %v1252 = vpack.c.b16 %v1249, %v1248
  %v1253 = vpack.c.b16 %v1251, %v1250
  %v1257 = vsel %vm100, %v1239, 0
  %1259 = vmatprep.subr.bf16.mxu0 0
  %1260 = vmatpush1.bf16.msra.mxu0 %v1252
  %1261 = vmatprep.subr.bf16.mxu0 0
  %1262 = vmatpush1.bf16.msra.mxu0 %v1253
  %1263 = vmatprep.subr.bf16.mxu0 0
  %1264 = vmatpush1.bf16.msra.mxu0 0
  %1265 = vmatprep.subr.bf16.mxu0 0
  %1266 = vmatpush1.bf16.msra.mxu0 0
  %1267 = vmatprep.subr.bf16.mxu0 0
  %1268 = vmatpush1.bf16.msra.mxu0 0
  %1269 = vmatprep.subr.bf16.mxu0 0
  %1270 = vmatpush1.bf16.msra.mxu0 0
  %1271 = vmatprep.subr.bf16.mxu0 0
  %1272 = vmatpush1.bf16.msra.mxu0 0
  %1273 = vmatprep.subr.bf16.mxu0 0
  %1274 = vmatpush1.bf16.msra.mxu0 0
  %1275 = vmatprep.subr.bf16.mxu0 0
  %1276 = vmatpush1.bf16.msra.mxu0 0
  %1277 = vmatprep.subr.bf16.mxu0 0
  %1278 = vmatpush1.bf16.msra.mxu0 0
  %1279 = vmatprep.subr.bf16.mxu0 0
  %1280 = vmatpush1.bf16.msra.mxu0 0
  %1281 = vmatprep.subr.bf16.mxu0 0
  %1282 = vmatpush1.bf16.msra.mxu0 0
  %1283 = vmatprep.subr.bf16.mxu0 0
  %1284 = vmatpush1.bf16.msra.mxu0 0
  %1285 = vmatprep.subr.bf16.mxu0 0
  %1286 = vmatpush1.bf16.msra.mxu0 0
  %1287 = vmatprep.subr.bf16.mxu0 0
  %1288 = vmatpush1.bf16.msra.mxu0 0
  %1289 = vmatprep.subr.bf16.mxu0 0
  %1290 = vmatpush1.bf16.msra.mxu0 0
  %1291 = vmatprep.mubr.bf16.mxu0 0
  %1292 = vmatmul.mubr.bf16.gmra.mrb[0].mxu0 %v1257
  %v1293 = vpop.f32.mrb[0].mxu0
  %v1294 = vadd.f32 %v1243, %v1293
  %v1295 = vpop.f32.mrb[0].mxu0
  %v1296 = vpop.f32.mrb[0].mxu0
  %v1297 = vadd.f32 %v1243, %v1296
  %v1298 = vpop.f32.mrb[0].mxu0
  %1299 = vdwg.mxu0
  %v1300 = vmul.f32 %v1294, %v1294
  %v1301 = vmul.f32 %v1297, %v1297
  %v1302 = vmul.f32 %v1294, %v1300
  %v1303 = vmul.f32 %v1297, %v1301
  %v1304 = vmul.f32 %v1302, 0.044715
  %v1305 = vmul.f32 %v1303, 0.044715
  %v1306 = vadd.f32 %v1294, %v1304
  %v1307 = vadd.f32 %v1297, %v1305
  %v1308 = vmul.f32 %v1306, 0.7978846
  %v1309 = vmul.f32 %v1307, 0.7978846
  %v1310 = vtanh.pop %v1308
  %v1311 = vtanh.pop %v1309
  %v1312 = vadd.f32 %v1310, 1.0
  %v1313 = vadd.f32 %v1311, 1.0
  %v1314 = vmul.f32 %v1312, 0.5
  %v1315 = vmul.f32 %v1313, 0.5
  %v1316 = vmul.f32 %v1294, %v1314
  %v1317 = vmul.f32 %v1297, %v1315
  %v1318 = vpack.c.bf16 %v1317, %v1316
  %v1335 = vunpack.c.l.b16 %v84
  %v1336 = vunpack.c.l.b16 %v85
  %v1337 = vunpack.c.l.b16 %v86
  %v1338 = vunpack.c.l.b16 %v87
  %v1339 = vunpack.c.l.b16 %v88
  %v1340 = vunpack.c.l.b16 %v89
  %v1341 = vunpack.c.l.b16 %v90
  %v1342 = vunpack.c.l.b16 %v91
  %v1343 = vunpack.c.l.b16 %v92
  %v1344 = vunpack.c.l.b16 %v93
  %v1345 = vunpack.c.l.b16 %v94
  %v1346 = vunpack.c.l.b16 %v95
  %v1347 = vunpack.c.l.b16 %v96
  %v1348 = vunpack.c.l.b16 %v97
  %v1349 = vunpack.c.l.b16 %v98
  %v1350 = vunpack.c.l.b16 %v99
  %v1351 = vpack.c.b16 %v1336, %v1335
  %v1352 = vpack.c.b16 %v1338, %v1337
  %v1353 = vpack.c.b16 %v1340, %v1339
  %v1354 = vpack.c.b16 %v1342, %v1341
  %v1355 = vpack.c.b16 %v1344, %v1343
  %v1356 = vpack.c.b16 %v1346, %v1345
  %v1357 = vpack.c.b16 %v1348, %v1347
  %v1358 = vpack.c.b16 %v1350, %v1349
  %1367 = vmatprep.subr.bf16.mxu0 0
  %1368 = vmatpush1.bf16.msra.mxu0 %v1351
  %1369 = vmatprep.subr.bf16.mxu0 0
  %1370 = vmatpush1.bf16.msra.mxu0 %v1352
  %1371 = vmatprep.subr.bf16.mxu0 0
  %1372 = vmatpush1.bf16.msra.mxu0 %v1353
  %1373 = vmatprep.subr.bf16.mxu0 0
  %1374 = vmatpush1.bf16.msra.mxu0 %v1354
  %1375 = vmatprep.subr.bf16.mxu0 0
  %1376 = vmatpush1.bf16.msra.mxu0 %v1355
  %1377 = vmatprep.subr.bf16.mxu0 0
  %1378 = vmatpush1.bf16.msra.mxu0 %v1356
  %1379 = vmatprep.subr.bf16.mxu0 0
  %1380 = vmatpush1.bf16.msra.mxu0 %v1357
  %1381 = vmatprep.subr.bf16.mxu0 0
  %1382 = vmatpush1.bf16.msra.mxu0 %v1358
  %1383 = vmatprep.subr.bf16.mxu0 0
  %1384 = vmatpush1.bf16.msra.mxu0 0
  %1385 = vmatprep.subr.bf16.mxu0 0
  %1386 = vmatpush1.bf16.msra.mxu0 0
  %1387 = vmatprep.subr.bf16.mxu0 0
  %1388 = vmatpush1.bf16.msra.mxu0 0
  %1389 = vmatprep.subr.bf16.mxu0 0
  %1390 = vmatpush1.bf16.msra.mxu0 0
  %1391 = vmatprep.subr.bf16.mxu0 0
  %1392 = vmatpush1.bf16.msra.mxu0 0
  %1393 = vmatprep.subr.bf16.mxu0 0
  %1394 = vmatpush1.bf16.msra.mxu0 0
  %1395 = vmatprep.subr.bf16.mxu0 0
  %1396 = vmatpush1.bf16.msra.mxu0 0
  %1397 = vmatprep.subr.bf16.mxu0 0
  %1398 = vmatpush1.bf16.msra.mxu0 0
  %1399 = vmatprep.mubr.bf16.mxu0 0
  %1400 = vmatmul.mubr.bf16.gmra.mrb[0].mxu0 %v1318
  %v1401 = vpop.f32.mrb[0].mxu0
  %v1402 = vadd.f32 0.0, %v1401
  %v1403 = vpop.f32.mrb[0].mxu0
  %v1404 = vpop.f32.mrb[0].mxu0
  %v1405 = vadd.f32 0.0, %v1404
  %v1406 = vpop.f32.mrb[0].mxu0
  %1407 = vdwg.mxu0
  %v1408 = vadd.f32 %v1199, %v1402
  %v1409 = vadd.f32 %v1200, %v1405
  %v1410 = vlaneseq
  %v1411 = vshrl.u32 %v1410, 7
  %v1412 = vsub.s32 0, %v1411
  %v1413 = vrot.slane %v71, %v1412
  %v1414 = vadd.f32 %v1408, %v1413
  %v1415 = vadd.f32 %v1409, %v1413
  %v1416 = vld [vmem:[%s3 + $0x8] sm:$0x1]
  %v1417 = vld [vmem:[%s3 + $0x9] sm:$0x1]
  %v1418 = vld [vmem:[%s3 + $0xa] sm:$0x1]
  %v1419 = vld [vmem:[%s3 + $0xb] sm:$0x1]
  %v1420 = vld [vmem:[%s3 + $0xc] sm:$0x1]
  %v1421 = vld [vmem:[%s3 + $0xd] sm:$0x1]
  %v1422 = vld [vmem:[%s3 + $0xe] sm:$0x1]
  %v1423 = vld [vmem:[%s3 + $0xf] sm:$0x1]
  %v1424 = vld [vmem:[%s2 + $0x70] sm:$0xf]
  %v1425 = vld [vmem:[%s2 + $0x74] sm:$0xf]
  %v1426 = vld [vmem:[%s2 + $0x78] sm:$0xf]
  %v1427 = vld [vmem:[%s2 + $0x7c] sm:$0xf]
  %v1428 = vld [vmem:[%s2 + $0x80] sm:$0xf]
  %v1429 = vld [vmem:[%s2 + $0x84] sm:$0xf]
  %v1430 = vld [vmem:[%s2 + $0x88] sm:$0xf]
  %v1431 = vld [vmem:[%s2 + $0x8c] sm:$0xf]
  %v1432 = vld [vmem:[%s2 + $0x90] sm:$0xf]
  %v1433 = vld [vmem:[%s2 + $0x94] sm:$0xf]
  %v1434 = vld [vmem:[%s2 + $0x98] sm:$0xf]
  %v1435 = vld [vmem:[%s2 + $0x9c] sm:$0xf]
  %v1436 = vld [vmem:[%s2 + $0xa0] sm:$0xf]
  %v1437 = vld [vmem:[%s2 + $0xa4] sm:$0xf]
  %v1438 = vld [vmem:[%s2 + $0xa8] sm:$0xf]
  %v1439 = vld [vmem:[%s2 + $0xac] sm:$0xf]
  %v1440 = vld [vmem:[%s2 + $0xb0] sm:$0xf]
  %v1441 = vld [vmem:[%s2 + $0xb4] sm:$0xf]
  %v1442 = vld [vmem:[%s2 + $0xb8] sm:$0xf]
  %v1443 = vld [vmem:[%s2 + $0xbc] sm:$0xf]
  %v1444 = vld [vmem:[%s2 + $0xc0] sm:$0xf]
  %v1445 = vld [vmem:[%s2 + $0xc4] sm:$0xf]
  %v1446 = vld [vmem:[%s2 + $0xc8] sm:$0xf]
  %v1447 = vld [vmem:[%s2 + $0xcc] sm:$0xf]
  %v1448 = vld [vmem:[%s2 + $0xd0] sm:$0xf]
  %v1449 = vld [vmem:[%s2 + $0xd4] sm:$0xf]
  %v1450 = vld [vmem:[%s2 + $0xd8] sm:$0xf]
  %v1451 = vld [vmem:[%s2 + $0xdc] sm:$0xf]
  %v1452 = vsel %vm100, %v1414, 0.0
  %1453 = vadd.xlane.f32.xlu0 %v1452
  %v1454 = vpop.xlane.xlu0 %1453
  %v1455 = vsel %vm100, %v1415, 0.0
  %1456 = vadd.xlane.f32.xlu0 %v1455
  %v1457 = vpop.xlane.xlu0 %1456
  %v1458 = vmul.f32 %v1454, %v107
  %v1459 = vmul.f32 %v1457, %v107
  %v1460 = vsub.f32 %v1414, %v1458
  %v1461 = vsub.f32 %v1415, %v1459
  %v1462 = vmul.f32 %v1460, %v1460
  %v1463 = vmul.f32 %v1461, %v1461
  %v1464 = vsel %vm100, %v1462, 0.0
  %1465 = vadd.xlane.f32.xlu0 %v1464
  %v1466 = vpop.xlane.xlu0 %1465
  %v1467 = vsel %vm100, %v1463, 0.0
  %1468 = vadd.xlane.f32.xlu0 %v1467
  %v1469 = vpop.xlane.xlu0 %1468
  %v1470 = vmul.f32 %v1466, %v107
  %v1471 = vmul.f32 %v1469, %v107
  %v1472 = vadd.f32 %v1470, 1e-05
  %v1473 = vadd.f32 %v1471, 1e-05
  %v1474 = vrsqrt.pop %v1472
  %v1475 = vrsqrt.pop %v1473
  %v1476 = vmul.f32 %v1460, %v1474
  %v1477 = vmul.f32 %v1461, %v1475
  %v1478 = vlaneseq
  %v1479 = vshrl.u32 %v1478, 7
  %v1480 = vsub.s32 0, %v1479
  %v1481 = vrot.slane %v1416, %v1480
  %v1482 = vmul.f32 %v1476, %v1481
  %v1483 = vmul.f32 %v1477, %v1481
  %v1484 = vlaneseq
  %v1485 = vshrl.u32 %v1484, 7
  %v1486 = vsub.s32 0, %v1485
  %v1487 = vrot.slane %v1417, %v1486
  %v1488 = vadd.f32 %v1482, %v1487
  %v1489 = vadd.f32 %v1483, %v1487
  %v1490 = vpack.c.bf16 %v1489, %v1488
  %v1491 = vlaneseq
  %v1492 = vshrl.u32 %v1491, 7
  %v1493 = vsub.s32 0, %v1492
  %v1494 = vrot.slane %v1418, %v1493
  %v1499 = vunpack.c.l.b16 %v1424
  %v1500 = vunpack.c.l.b16 %v1425
  %v1501 = vunpack.c.l.b16 %v1426
  %v1502 = vunpack.c.l.b16 %v1427
  %v1503 = vpack.c.b16 %v1500, %v1499
  %v1504 = vpack.c.b16 %v1502, %v1501
  %v1508 = vsel %vm100, %v1490, 0
  %1510 = vmatprep.subr.bf16.mxu0 0
  %1511 = vmatpush1.bf16.msra.mxu0 %v1503
  %1512 = vmatprep.subr.bf16.mxu0 0
  %1513 = vmatpush1.bf16.msra.mxu0 %v1504
  %1514 = vmatprep.subr.bf16.mxu0 0
  %1515 = vmatpush1.bf16.msra.mxu0 0
  %1516 = vmatprep.subr.bf16.mxu0 0
  %1517 = vmatpush1.bf16.msra.mxu0 0
  %1518 = vmatprep.subr.bf16.mxu0 0
  %1519 = vmatpush1.bf16.msra.mxu0 0
  %1520 = vmatprep.subr.bf16.mxu0 0
  %1521 = vmatpush1.bf16.msra.mxu0 0
  %1522 = vmatprep.subr.bf16.mxu0 0
  %1523 = vmatpush1.bf16.msra.mxu0 0
  %1524 = vmatprep.subr.bf16.mxu0 0
  %1525 = vmatpush1.bf16.msra.mxu0 0
  %1526 = vmatprep.subr.bf16.mxu0 0
  %1527 = vmatpush1.bf16.msra.mxu0 0
  %1528 = vmatprep.subr.bf16.mxu0 0
  %1529 = vmatpush1.bf16.msra.mxu0 0
  %1530 = vmatprep.subr.bf16.mxu0 0
  %1531 = vmatpush1.bf16.msra.mxu0 0
  %1532 = vmatprep.subr.bf16.mxu0 0
  %1533 = vmatpush1.bf16.msra.mxu0 0
  %1534 = vmatprep.subr.bf16.mxu0 0
  %1535 = vmatpush1.bf16.msra.mxu0 0
  %1536 = vmatprep.subr.bf16.mxu0 0
  %1537 = vmatpush1.bf16.msra.mxu0 0
  %1538 = vmatprep.subr.bf16.mxu0 0
  %1539 = vmatpush1.bf16.msra.mxu0 0
  %1540 = vmatprep.subr.bf16.mxu0 0
  %1541 = vmatpush1.bf16.msra.mxu0 0
  %1542 = vmatprep.mubr.bf16.mxu0 0
  %1543 = vmatmul.mubr.bf16.gmra.mrb[0].mxu0 %v1508
  %v1544 = vpop.f32.mrb[0].mxu0
  %v1545 = vadd.f32 %v1494, %v1544
  %v1546 = vpop.f32.mrb[0].mxu0
  %v1547 = vpop.f32.mrb[0].mxu0
  %v1548 = vadd.f32 %v1494, %v1547
  %v1549 = vpop.f32.mrb[0].mxu0
  %1550 = vdwg.mxu0
  %v1551 = vpack.c.bf16 %v1545, %v1545
  %v1552 = vpack.c.bf16 %v1548, %v1548
  %1554 = vrot.lane.b32.xlu0 %v1551, 96
  %v1555 = vpop.permute.xlu0 %1554
  %v1557 = vsel %vm206, %v1551, 0
  %v1560 = vsel %vm206, %v1555, 0
  %1562 = vmatprep.subr.bf16.mxu0 0
  %1563 = vmatpush1.bf16.xpose.msra.mxu0 %v1560
  %1564 = vmatprep.subr.bf16.mxu0 0
  %1565 = vmatpush1.bf16.xpose.msra.mxu0 0
  %1566 = vmatprep.subr.bf16.mxu0 0
  %1567 = vmatpush1.bf16.xpose.msra.mxu0 0
  %1568 = vmatprep.subr.bf16.mxu0 0
  %1569 = vmatpush1.bf16.xpose.msra.mxu0 0
  %1570 = vmatprep.subr.bf16.mxu0 0
  %1571 = vmatpush1.bf16.xpose.msra.mxu0 0
  %1572 = vmatprep.subr.bf16.mxu0 0
  %1573 = vmatpush1.bf16.xpose.msra.mxu0 0
  %1574 = vmatprep.subr.bf16.mxu0 0
  %1575 = vmatpush1.bf16.xpose.msra.mxu0 0
  %1576 = vmatprep.subr.bf16.mxu0 0
  %1577 = vmatpush1.bf16.xpose.msra.mxu0 0
  %1578 = vmatprep.subr.bf16.mxu0 0
  %1579 = vmatpush1.bf16.xpose.msra.mxu0 0
  %1580 = vmatprep.subr.bf16.mxu0 0
  %1581 = vmatpush1.bf16.xpose.msra.mxu0 0
  %1582 = vmatprep.subr.bf16.mxu0 0
  %1583 = vmatpush1.bf16.xpose.msra.mxu0 0
  %1584 = vmatprep.subr.bf16.mxu0 0
  %1585 = vmatpush1.bf16.xpose.msra.mxu0 0
  %1586 = vmatprep.subr.bf16.mxu0 0
  %1587 = vmatpush1.bf16.xpose.msra.mxu0 0
  %1588 = vmatprep.subr.bf16.mxu0 0
  %1589 = vmatpush1.bf16.xpose.msra.mxu0 0
  %1590 = vmatprep.subr.bf16.mxu0 0
  %1591 = vmatpush1.bf16.xpose.msra.mxu0 0
  %1592 = vmatprep.subr.bf16.mxu0 0
  %1593 = vmatpush1.bf16.xpose.msra.mxu0 0
  %1594 = vmatprep.mubr.bf16.mxu0 0
  %1595 = vmatmul.mubr.bf16.gmra.mrb[0].mxu0 %v1557
  %v1596 = vpop.f32.mrb[0].mxu0
  %v1597 = vadd.f32 0.0, %v1596
  %v1598 = vpop.f32.mrb[0].mxu0
  %v1599 = vpop.f32.mrb[0].mxu0
  %v1600 = vpop.f32.mrb[0].mxu0
  %1601 = vdwg.mxu0
  %1603 = vrot.lane.b32.xlu0 %v1552, 96
  %v1604 = vpop.permute.xlu0 %1603
  %v1606 = vsel %vm206, %v1552, 0
  %v1609 = vsel %vm206, %v1604, 0
  %1611 = vmatprep.subr.bf16.mxu0 0
  %1612 = vmatpush1.bf16.xpose.msra.mxu0 %v1609
  %1613 = vmatprep.subr.bf16.mxu0 0
  %1614 = vmatpush1.bf16.xpose.msra.mxu0 0
  %1615 = vmatprep.subr.bf16.mxu0 0
  %1616 = vmatpush1.bf16.xpose.msra.mxu0 0
  %1617 = vmatprep.subr.bf16.mxu0 0
  %1618 = vmatpush1.bf16.xpose.msra.mxu0 0
  %1619 = vmatprep.subr.bf16.mxu0 0
  %1620 = vmatpush1.bf16.xpose.msra.mxu0 0
  %1621 = vmatprep.subr.bf16.mxu0 0
  %1622 = vmatpush1.bf16.xpose.msra.mxu0 0
  %1623 = vmatprep.subr.bf16.mxu0 0
  %1624 = vmatpush1.bf16.xpose.msra.mxu0 0
  %1625 = vmatprep.subr.bf16.mxu0 0
  %1626 = vmatpush1.bf16.xpose.msra.mxu0 0
  %1627 = vmatprep.subr.bf16.mxu0 0
  %1628 = vmatpush1.bf16.xpose.msra.mxu0 0
  %1629 = vmatprep.subr.bf16.mxu0 0
  %1630 = vmatpush1.bf16.xpose.msra.mxu0 0
  %1631 = vmatprep.subr.bf16.mxu0 0
  %1632 = vmatpush1.bf16.xpose.msra.mxu0 0
  %1633 = vmatprep.subr.bf16.mxu0 0
  %1634 = vmatpush1.bf16.xpose.msra.mxu0 0
  %1635 = vmatprep.subr.bf16.mxu0 0
  %1636 = vmatpush1.bf16.xpose.msra.mxu0 0
  %1637 = vmatprep.subr.bf16.mxu0 0
  %1638 = vmatpush1.bf16.xpose.msra.mxu0 0
  %1639 = vmatprep.subr.bf16.mxu0 0
  %1640 = vmatpush1.bf16.xpose.msra.mxu0 0
  %1641 = vmatprep.subr.bf16.mxu0 0
  %1642 = vmatpush1.bf16.xpose.msra.mxu0 0
  %1643 = vmatprep.mubr.bf16.mxu0 0
  %1644 = vmatmul.mubr.bf16.gmra.mrb[0].mxu0 %v1606
  %v1645 = vpop.f32.mrb[0].mxu0
  %v1646 = vadd.f32 0.0, %v1645
  %v1647 = vpop.f32.mrb[0].mxu0
  %v1648 = vpop.f32.mrb[0].mxu0
  %v1649 = vpop.f32.mrb[0].mxu0
  %1650 = vdwg.mxu0
  %v1651 = vmul.f32 %v1597, 0.35355338
  %v1652 = vmul.f32 %v1646, 0.35355338
  %v1653 = vadd.f32 %v1651, %v62
  %v1654 = vadd.f32 %v1652, %v63
  %v1655 = vsel %vm206, %v1653, -inf
  %1656 = vmax.xlane.f32.xlu0 %v1655
  %v1657 = vpop.xlane.xlu0 %1656
  %v1658 = vsel %vm206, %v1654, -inf
  %1659 = vmax.xlane.f32.xlu0 %v1658
  %v1660 = vpop.xlane.xlu0 %1659
  %v1661 = vsub.f32 %v1653, %v1657
  %v1662 = vsub.f32 %v1654, %v1660
  %v1663 = vmul.f32 %v1661, 1.442695
  %v1664 = vpow.pop %v1663
  %v1665 = vmul.f32 %v1662, 1.442695
  %v1666 = vpow.pop %v1665
  %v1667 = vsel %vm206, %v1664, 0.0
  %1668 = vadd.xlane.f32.xlu0 %v1667
  %v1669 = vpop.xlane.xlu0 %1668
  %v1670 = vsel %vm206, %v1666, 0.0
  %1671 = vadd.xlane.f32.xlu0 %v1670
  %v1672 = vpop.xlane.xlu0 %1671
  %v1673 = vrcp.pop %v1669
  %v1674 = vmul.f32 %v1664, %v1673
  %v1675 = vrcp.pop %v1672
  %v1676 = vmul.f32 %v1666, %v1675
  %v1677 = vpack.c.bf16 %v1674, %v1674
  %v1678 = vpack.c.bf16 %v1676, %v1676
  %1679 = vrot.lane.b32.xlu0 %v1551, 64
  %v1680 = vpop.permute.xlu0 %1679
  %v1682 = vsel %vm206, %v1677, 0
  %v1685 = vsel %vm335, %v1680, 0
  %1687 = vmatprep.subr.bf16.mxu0 0
  %1688 = vmatpush1.bf16.msra.mxu0 %v1685
  %1689 = vmatprep.subr.bf16.mxu0 0
  %1690 = vmatpush1.bf16.msra.mxu0 0
  %1691 = vmatprep.subr.bf16.mxu0 0
  %1692 = vmatpush1.bf16.msra.mxu0 0
  %1693 = vmatprep.subr.bf16.mxu0 0
  %1694 = vmatpush1.bf16.msra.mxu0 0
  %1695 = vmatprep.subr.bf16.mxu0 0
  %1696 = vmatpush1.bf16.msra.mxu0 0
  %1697 = vmatprep.subr.bf16.mxu0 0
  %1698 = vmatpush1.bf16.msra.mxu0 0
  %1699 = vmatprep.subr.bf16.mxu0 0
  %1700 = vmatpush1.bf16.msra.mxu0 0
  %1701 = vmatprep.subr.bf16.mxu0 0
  %1702 = vmatpush1.bf16.msra.mxu0 0
  %1703 = vmatprep.subr.bf16.mxu0 0
  %1704 = vmatpush1.bf16.msra.mxu0 0
  %1705 = vmatprep.subr.bf16.mxu0 0
  %1706 = vmatpush1.bf16.msra.mxu0 0
  %1707 = vmatprep.subr.bf16.mxu0 0
  %1708 = vmatpush1.bf16.msra.mxu0 0
  %1709 = vmatprep.subr.bf16.mxu0 0
  %1710 = vmatpush1.bf16.msra.mxu0 0
  %1711 = vmatprep.subr.bf16.mxu0 0
  %1712 = vmatpush1.bf16.msra.mxu0 0
  %1713 = vmatprep.subr.bf16.mxu0 0
  %1714 = vmatpush1.bf16.msra.mxu0 0
  %1715 = vmatprep.subr.bf16.mxu0 0
  %1716 = vmatpush1.bf16.msra.mxu0 0
  %1717 = vmatprep.subr.bf16.mxu0 0
  %1718 = vmatpush1.bf16.msra.mxu0 0
  %1719 = vmatprep.mubr.bf16.mxu0 0
  %1720 = vmatmul.mubr.bf16.gmra.mrb[0].mxu0 %v1682
  %v1721 = vpop.f32.mrb[0].mxu0
  %v1722 = vadd.f32 0.0, %v1721
  %v1723 = vpop.f32.mrb[0].mxu0
  %v1724 = vpop.f32.mrb[0].mxu0
  %v1725 = vpop.f32.mrb[0].mxu0
  %1726 = vdwg.mxu0
  %1727 = vrot.lane.b32.xlu0 %v1552, 64
  %v1728 = vpop.permute.xlu0 %1727
  %v1730 = vsel %vm206, %v1678, 0
  %v1733 = vsel %vm335, %v1728, 0
  %1735 = vmatprep.subr.bf16.mxu0 0
  %1736 = vmatpush1.bf16.msra.mxu0 %v1733
  %1737 = vmatprep.subr.bf16.mxu0 0
  %1738 = vmatpush1.bf16.msra.mxu0 0
  %1739 = vmatprep.subr.bf16.mxu0 0
  %1740 = vmatpush1.bf16.msra.mxu0 0
  %1741 = vmatprep.subr.bf16.mxu0 0
  %1742 = vmatpush1.bf16.msra.mxu0 0
  %1743 = vmatprep.subr.bf16.mxu0 0
  %1744 = vmatpush1.bf16.msra.mxu0 0
  %1745 = vmatprep.subr.bf16.mxu0 0
  %1746 = vmatpush1.bf16.msra.mxu0 0
  %1747 = vmatprep.subr.bf16.mxu0 0
  %1748 = vmatpush1.bf16.msra.mxu0 0
  %1749 = vmatprep.subr.bf16.mxu0 0
  %1750 = vmatpush1.bf16.msra.mxu0 0
  %1751 = vmatprep.subr.bf16.mxu0 0
  %1752 = vmatpush1.bf16.msra.mxu0 0
  %1753 = vmatprep.subr.bf16.mxu0 0
  %1754 = vmatpush1.bf16.msra.mxu0 0
  %1755 = vmatprep.subr.bf16.mxu0 0
  %1756 = vmatpush1.bf16.msra.mxu0 0
  %1757 = vmatprep.subr.bf16.mxu0 0
  %1758 = vmatpush1.bf16.msra.mxu0 0
  %1759 = vmatprep.subr.bf16.mxu0 0
  %1760 = vmatpush1.bf16.msra.mxu0 0
  %1761 = vmatprep.subr.bf16.mxu0 0
  %1762 = vmatpush1.bf16.msra.mxu0 0
  %1763 = vmatprep.subr.bf16.mxu0 0
  %1764 = vmatpush1.bf16.msra.mxu0 0
  %1765 = vmatprep.subr.bf16.mxu0 0
  %1766 = vmatpush1.bf16.msra.mxu0 0
  %1767 = vmatprep.mubr.bf16.mxu0 0
  %1768 = vmatmul.mubr.bf16.gmra.mrb[0].mxu0 %v1730
  %v1769 = vpop.f32.mrb[0].mxu0
  %v1770 = vadd.f32 0.0, %v1769
  %v1771 = vpop.f32.mrb[0].mxu0
  %v1772 = vpop.f32.mrb[0].mxu0
  %v1773 = vpop.f32.mrb[0].mxu0
  %1774 = vdwg.mxu0
  %1775 = vst.msk [vmem:[#allocation2] sm:$0xff] %vm206, %v1722
  %1776 = vst.msk [vmem:[#allocation2 + $0x8] sm:$0xff] %vm206, %v1770
  %1777 = vrot.lane.b32.xlu0 %v1551, 120
  %v1778 = vpop.permute.xlu0 %1777
  %1779 = vrot.lane.b32.xlu0 %v1551, 88
  %v1780 = vpop.permute.xlu0 %1779
  %v1782 = vsel %vm206, %v1778, 0
  %v1785 = vsel %vm206, %v1780, 0
  %1787 = vmatprep.subr.bf16.mxu0 0
  %1788 = vmatpush1.bf16.xpose.msra.mxu0 %v1785
  %1789 = vmatprep.subr.bf16.mxu0 0
  %1790 = vmatpush1.bf16.xpose.msra.mxu0 0
  %1791 = vmatprep.subr.bf16.mxu0 0
  %1792 = vmatpush1.bf16.xpose.msra.mxu0 0
  %1793 = vmatprep.subr.bf16.mxu0 0
  %1794 = vmatpush1.bf16.xpose.msra.mxu0 0
  %1795 = vmatprep.subr.bf16.mxu0 0
  %1796 = vmatpush1.bf16.xpose.msra.mxu0 0
  %1797 = vmatprep.subr.bf16.mxu0 0
  %1798 = vmatpush1.bf16.xpose.msra.mxu0 0
  %1799 = vmatprep.subr.bf16.mxu0 0
  %1800 = vmatpush1.bf16.xpose.msra.mxu0 0
  %1801 = vmatprep.subr.bf16.mxu0 0
  %1802 = vmatpush1.bf16.xpose.msra.mxu0 0
  %1803 = vmatprep.subr.bf16.mxu0 0
  %1804 = vmatpush1.bf16.xpose.msra.mxu0 0
  %1805 = vmatprep.subr.bf16.mxu0 0
  %1806 = vmatpush1.bf16.xpose.msra.mxu0 0
  %1807 = vmatprep.subr.bf16.mxu0 0
  %1808 = vmatpush1.bf16.xpose.msra.mxu0 0
  %1809 = vmatprep.subr.bf16.mxu0 0
  %1810 = vmatpush1.bf16.xpose.msra.mxu0 0
  %1811 = vmatprep.subr.bf16.mxu0 0
  %1812 = vmatpush1.bf16.xpose.msra.mxu0 0
  %1813 = vmatprep.subr.bf16.mxu0 0
  %1814 = vmatpush1.bf16.xpose.msra.mxu0 0
  %1815 = vmatprep.subr.bf16.mxu0 0
  %1816 = vmatpush1.bf16.xpose.msra.mxu0 0
  %1817 = vmatprep.subr.bf16.mxu0 0
  %1818 = vmatpush1.bf16.xpose.msra.mxu0 0
  %1819 = vmatprep.mubr.bf16.mxu0 0
  %1820 = vmatmul.mubr.bf16.gmra.mrb[0].mxu0 %v1782
  %v1821 = vpop.f32.mrb[0].mxu0
  %v1822 = vadd.f32 0.0, %v1821
  %v1823 = vpop.f32.mrb[0].mxu0
  %v1824 = vpop.f32.mrb[0].mxu0
  %v1825 = vpop.f32.mrb[0].mxu0
  %1826 = vdwg.mxu0
  %1827 = vrot.lane.b32.xlu0 %v1552, 120
  %v1828 = vpop.permute.xlu0 %1827
  %1829 = vrot.lane.b32.xlu0 %v1552, 88
  %v1830 = vpop.permute.xlu0 %1829
  %v1832 = vsel %vm206, %v1828, 0
  %v1835 = vsel %vm206, %v1830, 0
  %1837 = vmatprep.subr.bf16.mxu0 0
  %1838 = vmatpush1.bf16.xpose.msra.mxu0 %v1835
  %1839 = vmatprep.subr.bf16.mxu0 0
  %1840 = vmatpush1.bf16.xpose.msra.mxu0 0
  %1841 = vmatprep.subr.bf16.mxu0 0
  %1842 = vmatpush1.bf16.xpose.msra.mxu0 0
  %1843 = vmatprep.subr.bf16.mxu0 0
  %1844 = vmatpush1.bf16.xpose.msra.mxu0 0
  %1845 = vmatprep.subr.bf16.mxu0 0
  %1846 = vmatpush1.bf16.xpose.msra.mxu0 0
  %1847 = vmatprep.subr.bf16.mxu0 0
  %1848 = vmatpush1.bf16.xpose.msra.mxu0 0
  %1849 = vmatprep.subr.bf16.mxu0 0
  %1850 = vmatpush1.bf16.xpose.msra.mxu0 0
  %1851 = vmatprep.subr.bf16.mxu0 0
  %1852 = vmatpush1.bf16.xpose.msra.mxu0 0
  %1853 = vmatprep.subr.bf16.mxu0 0
  %1854 = vmatpush1.bf16.xpose.msra.mxu0 0
  %1855 = vmatprep.subr.bf16.mxu0 0
  %1856 = vmatpush1.bf16.xpose.msra.mxu0 0
  %1857 = vmatprep.subr.bf16.mxu0 0
  %1858 = vmatpush1.bf16.xpose.msra.mxu0 0
  %1859 = vmatprep.subr.bf16.mxu0 0
  %1860 = vmatpush1.bf16.xpose.msra.mxu0 0
  %1861 = vmatprep.subr.bf16.mxu0 0
  %1862 = vmatpush1.bf16.xpose.msra.mxu0 0
  %1863 = vmatprep.subr.bf16.mxu0 0
  %1864 = vmatpush1.bf16.xpose.msra.mxu0 0
  %1865 = vmatprep.subr.bf16.mxu0 0
  %1866 = vmatpush1.bf16.xpose.msra.mxu0 0
  %1867 = vmatprep.subr.bf16.mxu0 0
  %1868 = vmatpush1.bf16.xpose.msra.mxu0 0
  %1869 = vmatprep.mubr.bf16.mxu0 0
  %1870 = vmatmul.mubr.bf16.gmra.mrb[0].mxu0 %v1832
  %v1871 = vpop.f32.mrb[0].mxu0
  %v1872 = vadd.f32 0.0, %v1871
  %v1873 = vpop.f32.mrb[0].mxu0
  %v1874 = vpop.f32.mrb[0].mxu0
  %v1875 = vpop.f32.mrb[0].mxu0
  %1876 = vdwg.mxu0
  %v1877 = vmul.f32 %v1822, 0.35355338
  %v1878 = vmul.f32 %v1872, 0.35355338
  %v1879 = vadd.f32 %v1877, %v62
  %v1880 = vadd.f32 %v1878, %v63
  %v1881 = vsel %vm206, %v1879, -inf
  %1882 = vmax.xlane.f32.xlu0 %v1881
  %v1883 = vpop.xlane.xlu0 %1882
  %v1884 = vsel %vm206, %v1880, -inf
  %1885 = vmax.xlane.f32.xlu0 %v1884
  %v1886 = vpop.xlane.xlu0 %1885
  %v1887 = vsub.f32 %v1879, %v1883
  %v1888 = vsub.f32 %v1880, %v1886
  %v1889 = vmul.f32 %v1887, 1.442695
  %v1890 = vpow.pop %v1889
  %v1891 = vmul.f32 %v1888, 1.442695
  %v1892 = vpow.pop %v1891
  %v1893 = vsel %vm206, %v1890, 0.0
  %1894 = vadd.xlane.f32.xlu0 %v1893
  %v1895 = vpop.xlane.xlu0 %1894
  %v1896 = vsel %vm206, %v1892, 0.0
  %1897 = vadd.xlane.f32.xlu0 %v1896
  %v1898 = vpop.xlane.xlu0 %1897
  %v1899 = vrcp.pop %v1895
  %v1900 = vmul.f32 %v1890, %v1899
  %v1901 = vrcp.pop %v1898
  %v1902 = vmul.f32 %v1892, %v1901
  %v1903 = vpack.c.bf16 %v1900, %v1900
  %v1904 = vpack.c.bf16 %v1902, %v1902
  %1905 = vrot.lane.b32.xlu0 %v1551, 56
  %v1906 = vpop.permute.xlu0 %1905
  %v1908 = vsel %vm206, %v1903, 0
  %v1911 = vsel %vm335, %v1906, 0
  %1913 = vmatprep.subr.bf16.mxu0 0
  %1914 = vmatpush1.bf16.msra.mxu0 %v1911
  %1915 = vmatprep.subr.bf16.mxu0 0
  %1916 = vmatpush1.bf16.msra.mxu0 0
  %1917 = vmatprep.subr.bf16.mxu0 0
  %1918 = vmatpush1.bf16.msra.mxu0 0
  %1919 = vmatprep.subr.bf16.mxu0 0
  %1920 = vmatpush1.bf16.msra.mxu0 0
  %1921 = vmatprep.subr.bf16.mxu0 0
  %1922 = vmatpush1.bf16.msra.mxu0 0
  %1923 = vmatprep.subr.bf16.mxu0 0
  %1924 = vmatpush1.bf16.msra.mxu0 0
  %1925 = vmatprep.subr.bf16.mxu0 0
  %1926 = vmatpush1.bf16.msra.mxu0 0
  %1927 = vmatprep.subr.bf16.mxu0 0
  %1928 = vmatpush1.bf16.msra.mxu0 0
  %1929 = vmatprep.subr.bf16.mxu0 0
  %1930 = vmatpush1.bf16.msra.mxu0 0
  %1931 = vmatprep.subr.bf16.mxu0 0
  %1932 = vmatpush1.bf16.msra.mxu0 0
  %1933 = vmatprep.subr.bf16.mxu0 0
  %1934 = vmatpush1.bf16.msra.mxu0 0
  %1935 = vmatprep.subr.bf16.mxu0 0
  %1936 = vmatpush1.bf16.msra.mxu0 0
  %1937 = vmatprep.subr.bf16.mxu0 0
  %1938 = vmatpush1.bf16.msra.mxu0 0
  %1939 = vmatprep.subr.bf16.mxu0 0
  %1940 = vmatpush1.bf16.msra.mxu0 0
  %1941 = vmatprep.subr.bf16.mxu0 0
  %1942 = vmatpush1.bf16.msra.mxu0 0
  %1943 = vmatprep.subr.bf16.mxu0 0
  %1944 = vmatpush1.bf16.msra.mxu0 0
  %1945 = vmatprep.mubr.bf16.mxu0 0
  %1946 = vmatmul.mubr.bf16.gmra.mrb[0].mxu0 %v1908
  %v1947 = vpop.f32.mrb[0].mxu0
  %v1948 = vadd.f32 0.0, %v1947
  %v1949 = vpop.f32.mrb[0].mxu0
  %v1950 = vpop.f32.mrb[0].mxu0
  %v1951 = vpop.f32.mrb[0].mxu0
  %1952 = vdwg.mxu0
  %1953 = vrot.lane.b32.xlu0 %v1552, 56
  %v1954 = vpop.permute.xlu0 %1953
  %v1956 = vsel %vm206, %v1904, 0
  %v1959 = vsel %vm335, %v1954, 0
  %1961 = vmatprep.subr.bf16.mxu0 0
  %1962 = vmatpush1.bf16.msra.mxu0 %v1959
  %1963 = vmatprep.subr.bf16.mxu0 0
  %1964 = vmatpush1.bf16.msra.mxu0 0
  %1965 = vmatprep.subr.bf16.mxu0 0
  %1966 = vmatpush1.bf16.msra.mxu0 0
  %1967 = vmatprep.subr.bf16.mxu0 0
  %1968 = vmatpush1.bf16.msra.mxu0 0
  %1969 = vmatprep.subr.bf16.mxu0 0
  %1970 = vmatpush1.bf16.msra.mxu0 0
  %1971 = vmatprep.subr.bf16.mxu0 0
  %1972 = vmatpush1.bf16.msra.mxu0 0
  %1973 = vmatprep.subr.bf16.mxu0 0
  %1974 = vmatpush1.bf16.msra.mxu0 0
  %1975 = vmatprep.subr.bf16.mxu0 0
  %1976 = vmatpush1.bf16.msra.mxu0 0
  %1977 = vmatprep.subr.bf16.mxu0 0
  %1978 = vmatpush1.bf16.msra.mxu0 0
  %1979 = vmatprep.subr.bf16.mxu0 0
  %1980 = vmatpush1.bf16.msra.mxu0 0
  %1981 = vmatprep.subr.bf16.mxu0 0
  %1982 = vmatpush1.bf16.msra.mxu0 0
  %1983 = vmatprep.subr.bf16.mxu0 0
  %1984 = vmatpush1.bf16.msra.mxu0 0
  %1985 = vmatprep.subr.bf16.mxu0 0
  %1986 = vmatpush1.bf16.msra.mxu0 0
  %1987 = vmatprep.subr.bf16.mxu0 0
  %1988 = vmatpush1.bf16.msra.mxu0 0
  %1989 = vmatprep.subr.bf16.mxu0 0
  %1990 = vmatpush1.bf16.msra.mxu0 0
  %1991 = vmatprep.subr.bf16.mxu0 0
  %1992 = vmatpush1.bf16.msra.mxu0 0
  %1993 = vmatprep.mubr.bf16.mxu0 0
  %1994 = vmatmul.mubr.bf16.gmra.mrb[0].mxu0 %v1956
  %v1995 = vpop.f32.mrb[0].mxu0
  %v1996 = vadd.f32 0.0, %v1995
  %v1997 = vpop.f32.mrb[0].mxu0
  %v1998 = vpop.f32.mrb[0].mxu0
  %v1999 = vpop.f32.mrb[0].mxu0
  %2000 = vdwg.mxu0
  %2003 = vrot.lane.b32.xlu0 %v1948, 8
  %v2004 = vpop.permute.xlu0 %2003
  %2005 = vrot.lane.b32.xlu0 %v1996, 8
  %v2006 = vpop.permute.xlu0 %2005
  %2009 = vst.msk [vmem:[#allocation2] sm:$0xff] %vm661, %v2004
  %2010 = vst.msk [vmem:[#allocation2 + $0x8] sm:$0xff] %vm661, %v2006
  %2011 = vrot.lane.b32.xlu0 %v1551, 112
  %v2012 = vpop.permute.xlu0 %2011
  %2013 = vrot.lane.b32.xlu0 %v1551, 80
  %v2014 = vpop.permute.xlu0 %2013
  %v2016 = vsel %vm206, %v2012, 0
  %v2019 = vsel %vm206, %v2014, 0
  %2021 = vmatprep.subr.bf16.mxu0 0
  %2022 = vmatpush1.bf16.xpose.msra.mxu0 %v2019
  %2023 = vmatprep.subr.bf16.mxu0 0
  %2024 = vmatpush1.bf16.xpose.msra.mxu0 0
  %2025 = vmatprep.subr.bf16.mxu0 0
  %2026 = vmatpush1.bf16.xpose.msra.mxu0 0
  %2027 = vmatprep.subr.bf16.mxu0 0
  %2028 = vmatpush1.bf16.xpose.msra.mxu0 0
  %2029 = vmatprep.subr.bf16.mxu0 0
  %2030 = vmatpush1.bf16.xpose.msra.mxu0 0
  %2031 = vmatprep.subr.bf16.mxu0 0
  %2032 = vmatpush1.bf16.xpose.msra.mxu0 0
  %2033 = vmatprep.subr.bf16.mxu0 0
  %2034 = vmatpush1.bf16.xpose.msra.mxu0 0
  %2035 = vmatprep.subr.bf16.mxu0 0
  %2036 = vmatpush1.bf16.xpose.msra.mxu0 0
  %2037 = vmatprep.subr.bf16.mxu0 0
  %2038 = vmatpush1.bf16.xpose.msra.mxu0 0
  %2039 = vmatprep.subr.bf16.mxu0 0
  %2040 = vmatpush1.bf16.xpose.msra.mxu0 0
  %2041 = vmatprep.subr.bf16.mxu0 0
  %2042 = vmatpush1.bf16.xpose.msra.mxu0 0
  %2043 = vmatprep.subr.bf16.mxu0 0
  %2044 = vmatpush1.bf16.xpose.msra.mxu0 0
  %2045 = vmatprep.subr.bf16.mxu0 0
  %2046 = vmatpush1.bf16.xpose.msra.mxu0 0
  %2047 = vmatprep.subr.bf16.mxu0 0
  %2048 = vmatpush1.bf16.xpose.msra.mxu0 0
  %2049 = vmatprep.subr.bf16.mxu0 0
  %2050 = vmatpush1.bf16.xpose.msra.mxu0 0
  %2051 = vmatprep.subr.bf16.mxu0 0
  %2052 = vmatpush1.bf16.xpose.msra.mxu0 0
  %2053 = vmatprep.mubr.bf16.mxu0 0
  %2054 = vmatmul.mubr.bf16.gmra.mrb[0].mxu0 %v2016
  %v2055 = vpop.f32.mrb[0].mxu0
  %v2056 = vadd.f32 0.0, %v2055
  %v2057 = vpop.f32.mrb[0].mxu0
  %v2058 = vpop.f32.mrb[0].mxu0
  %v2059 = vpop.f32.mrb[0].mxu0
  %2060 = vdwg.mxu0
  %2061 = vrot.lane.b32.xlu0 %v1552, 112
  %v2062 = vpop.permute.xlu0 %2061
  %2063 = vrot.lane.b32.xlu0 %v1552, 80
  %v2064 = vpop.permute.xlu0 %2063
  %v2066 = vsel %vm206, %v2062, 0
  %v2069 = vsel %vm206, %v2064, 0
  %2071 = vmatprep.subr.bf16.mxu0 0
  %2072 = vmatpush1.bf16.xpose.msra.mxu0 %v2069
  %2073 = vmatprep.subr.bf16.mxu0 0
  %2074 = vmatpush1.bf16.xpose.msra.mxu0 0
  %2075 = vmatprep.subr.bf16.mxu0 0
  %2076 = vmatpush1.bf16.xpose.msra.mxu0 0
  %2077 = vmatprep.subr.bf16.mxu0 0
  %2078 = vmatpush1.bf16.xpose.msra.mxu0 0
  %2079 = vmatprep.subr.bf16.mxu0 0
  %2080 = vmatpush1.bf16.xpose.msra.mxu0 0
  %2081 = vmatprep.subr.bf16.mxu0 0
  %2082 = vmatpush1.bf16.xpose.msra.mxu0 0
  %2083 = vmatprep.subr.bf16.mxu0 0
  %2084 = vmatpush1.bf16.xpose.msra.mxu0 0
  %2085 = vmatprep.subr.bf16.mxu0 0
  %2086 = vmatpush1.bf16.xpose.msra.mxu0 0
  %2087 = vmatprep.subr.bf16.mxu0 0
  %2088 = vmatpush1.bf16.xpose.msra.mxu0 0
  %2089 = vmatprep.subr.bf16.mxu0 0
  %2090 = vmatpush1.bf16.xpose.msra.mxu0 0
  %2091 = vmatprep.subr.bf16.mxu0 0
  %2092 = vmatpush1.bf16.xpose.msra.mxu0 0
  %2093 = vmatprep.subr.bf16.mxu0 0
  %2094 = vmatpush1.bf16.xpose.msra.mxu0 0
  %2095 = vmatprep.subr.bf16.mxu0 0
  %2096 = vmatpush1.bf16.xpose.msra.mxu0 0
  %2097 = vmatprep.subr.bf16.mxu0 0
  %2098 = vmatpush1.bf16.xpose.msra.mxu0 0
  %2099 = vmatprep.subr.bf16.mxu0 0
  %2100 = vmatpush1.bf16.xpose.msra.mxu0 0
  %2101 = vmatprep.subr.bf16.mxu0 0
  %2102 = vmatpush1.bf16.xpose.msra.mxu0 0
  %2103 = vmatprep.mubr.bf16.mxu0 0
  %2104 = vmatmul.mubr.bf16.gmra.mrb[0].mxu0 %v2066
  %v2105 = vpop.f32.mrb[0].mxu0
  %v2106 = vadd.f32 0.0, %v2105
  %v2107 = vpop.f32.mrb[0].mxu0
  %v2108 = vpop.f32.mrb[0].mxu0
  %v2109 = vpop.f32.mrb[0].mxu0
  %2110 = vdwg.mxu0
  %v2111 = vmul.f32 %v2056, 0.35355338
  %v2112 = vmul.f32 %v2106, 0.35355338
  %v2113 = vadd.f32 %v2111, %v62
  %v2114 = vadd.f32 %v2112, %v63
  %v2115 = vsel %vm206, %v2113, -inf
  %2116 = vmax.xlane.f32.xlu0 %v2115
  %v2117 = vpop.xlane.xlu0 %2116
  %v2118 = vsel %vm206, %v2114, -inf
  %2119 = vmax.xlane.f32.xlu0 %v2118
  %v2120 = vpop.xlane.xlu0 %2119
  %v2121 = vsub.f32 %v2113, %v2117
  %v2122 = vsub.f32 %v2114, %v2120
  %v2123 = vmul.f32 %v2121, 1.442695
  %v2124 = vpow.pop %v2123
  %v2125 = vmul.f32 %v2122, 1.442695
  %v2126 = vpow.pop %v2125
  %v2127 = vsel %vm206, %v2124, 0.0
  %2128 = vadd.xlane.f32.xlu0 %v2127
  %v2129 = vpop.xlane.xlu0 %2128
  %v2130 = vsel %vm206, %v2126, 0.0
  %2131 = vadd.xlane.f32.xlu0 %v2130
  %v2132 = vpop.xlane.xlu0 %2131
  %v2133 = vrcp.pop %v2129
  %v2134 = vmul.f32 %v2124, %v2133
  %v2135 = vrcp.pop %v2132
  %v2136 = vmul.f32 %v2126, %v2135
  %v2137 = vpack.c.bf16 %v2134, %v2134
  %v2138 = vpack.c.bf16 %v2136, %v2136
  %2139 = vrot.lane.b32.xlu0 %v1551, 48
  %v2140 = vpop.permute.xlu0 %2139
  %v2142 = vsel %vm206, %v2137, 0
  %v2145 = vsel %vm335, %v2140, 0
  %2147 = vmatprep.subr.bf16.mxu0 0
  %2148 = vmatpush1.bf16.msra.mxu0 %v2145
  %2149 = vmatprep.subr.bf16.mxu0 0
  %2150 = vmatpush1.bf16.msra.mxu0 0
  %2151 = vmatprep.subr.bf16.mxu0 0
  %2152 = vmatpush1.bf16.msra.mxu0 0
  %2153 = vmatprep.subr.bf16.mxu0 0
  %2154 = vmatpush1.bf16.msra.mxu0 0
  %2155 = vmatprep.subr.bf16.mxu0 0
  %2156 = vmatpush1.bf16.msra.mxu0 0
  %2157 = vmatprep.subr.bf16.mxu0 0
  %2158 = vmatpush1.bf16.msra.mxu0 0
  %2159 = vmatprep.subr.bf16.mxu0 0
  %2160 = vmatpush1.bf16.msra.mxu0 0
  %2161 = vmatprep.subr.bf16.mxu0 0
  %2162 = vmatpush1.bf16.msra.mxu0 0
  %2163 = vmatprep.subr.bf16.mxu0 0
  %2164 = vmatpush1.bf16.msra.mxu0 0
  %2165 = vmatprep.subr.bf16.mxu0 0
  %2166 = vmatpush1.bf16.msra.mxu0 0
  %2167 = vmatprep.subr.bf16.mxu0 0
  %2168 = vmatpush1.bf16.msra.mxu0 0
  %2169 = vmatprep.subr.bf16.mxu0 0
  %2170 = vmatpush1.bf16.msra.mxu0 0
  %2171 = vmatprep.subr.bf16.mxu0 0
  %2172 = vmatpush1.bf16.msra.mxu0 0
  %2173 = vmatprep.subr.bf16.mxu0 0
  %2174 = vmatpush1.bf16.msra.mxu0 0
  %2175 = vmatprep.subr.bf16.mxu0 0
  %2176 = vmatpush1.bf16.msra.mxu0 0
  %2177 = vmatprep.subr.bf16.mxu0 0
  %2178 = vmatpush1.bf16.msra.mxu0 0
  %2179 = vmatprep.mubr.bf16.mxu0 0
  %2180 = vmatmul.mubr.bf16.gmra.mrb[0].mxu0 %v2142
  %v2181 = vpop.f32.mrb[0].mxu0
  %v2182 = vadd.f32 0.0, %v2181
  %v2183 = vpop.f32.mrb[0].mxu0
  %v2184 = vpop.f32.mrb[0].mxu0
  %v2185 = vpop.f32.mrb[0].mxu0
  %2186 = vdwg.mxu0
  %2187 = vrot.lane.b32.xlu0 %v1552, 48
  %v2188 = vpop.permute.xlu0 %2187
  %v2190 = vsel %vm206, %v2138, 0
  %v2193 = vsel %vm335, %v2188, 0
  %2195 = vmatprep.subr.bf16.mxu0 0
  %2196 = vmatpush1.bf16.msra.mxu0 %v2193
  %2197 = vmatprep.subr.bf16.mxu0 0
  %2198 = vmatpush1.bf16.msra.mxu0 0
  %2199 = vmatprep.subr.bf16.mxu0 0
  %2200 = vmatpush1.bf16.msra.mxu0 0
  %2201 = vmatprep.subr.bf16.mxu0 0
  %2202 = vmatpush1.bf16.msra.mxu0 0
  %2203 = vmatprep.subr.bf16.mxu0 0
  %2204 = vmatpush1.bf16.msra.mxu0 0
  %2205 = vmatprep.subr.bf16.mxu0 0
  %2206 = vmatpush1.bf16.msra.mxu0 0
  %2207 = vmatprep.subr.bf16.mxu0 0
  %2208 = vmatpush1.bf16.msra.mxu0 0
  %2209 = vmatprep.subr.bf16.mxu0 0
  %2210 = vmatpush1.bf16.msra.mxu0 0
  %2211 = vmatprep.subr.bf16.mxu0 0
  %2212 = vmatpush1.bf16.msra.mxu0 0
  %2213 = vmatprep.subr.bf16.mxu0 0
  %2214 = vmatpush1.bf16.msra.mxu0 0
  %2215 = vmatprep.subr.bf16.mxu0 0
  %2216 = vmatpush1.bf16.msra.mxu0 0
  %2217 = vmatprep.subr.bf16.mxu0 0
  %2218 = vmatpush1.bf16.msra.mxu0 0
  %2219 = vmatprep.subr.bf16.mxu0 0
  %2220 = vmatpush1.bf16.msra.mxu0 0
  %2221 = vmatprep.subr.bf16.mxu0 0
  %2222 = vmatpush1.bf16.msra.mxu0 0
  %2223 = vmatprep.subr.bf16.mxu0 0
  %2224 = vmatpush1.bf16.msra.mxu0 0
  %2225 = vmatprep.subr.bf16.mxu0 0
  %2226 = vmatpush1.bf16.msra.mxu0 0
  %2227 = vmatprep.mubr.bf16.mxu0 0
  %2228 = vmatmul.mubr.bf16.gmra.mrb[0].mxu0 %v2190
  %v2229 = vpop.f32.mrb[0].mxu0
  %v2230 = vadd.f32 0.0, %v2229
  %v2231 = vpop.f32.mrb[0].mxu0
  %v2232 = vpop.f32.mrb[0].mxu0
  %v2233 = vpop.f32.mrb[0].mxu0
  %2234 = vdwg.mxu0
  %2237 = vrot.lane.b32.xlu0 %v2182, 16
  %v2238 = vpop.permute.xlu0 %2237
  %2239 = vrot.lane.b32.xlu0 %v2230, 16
  %v2240 = vpop.permute.xlu0 %2239
  %2243 = vst.msk [vmem:[#allocation2] sm:$0xff] %vm896, %v2238
  %2244 = vst.msk [vmem:[#allocation2 + $0x8] sm:$0xff] %vm896, %v2240
  %2245 = vrot.lane.b32.xlu0 %v1551, 104
  %v2246 = vpop.permute.xlu0 %2245
  %2247 = vrot.lane.b32.xlu0 %v1551, 72
  %v2248 = vpop.permute.xlu0 %2247
  %v2250 = vsel %vm206, %v2246, 0
  %v2253 = vsel %vm206, %v2248, 0
  %2255 = vmatprep.subr.bf16.mxu0 0
  %2256 = vmatpush1.bf16.xpose.msra.mxu0 %v2253
  %2257 = vmatprep.subr.bf16.mxu0 0
  %2258 = vmatpush1.bf16.xpose.msra.mxu0 0
  %2259 = vmatprep.subr.bf16.mxu0 0
  %2260 = vmatpush1.bf16.xpose.msra.mxu0 0
  %2261 = vmatprep.subr.bf16.mxu0 0
  %2262 = vmatpush1.bf16.xpose.msra.mxu0 0
  %2263 = vmatprep.subr.bf16.mxu0 0
  %2264 = vmatpush1.bf16.xpose.msra.mxu0 0
  %2265 = vmatprep.subr.bf16.mxu0 0
  %2266 = vmatpush1.bf16.xpose.msra.mxu0 0
  %2267 = vmatprep.subr.bf16.mxu0 0
  %2268 = vmatpush1.bf16.xpose.msra.mxu0 0
  %2269 = vmatprep.subr.bf16.mxu0 0
  %2270 = vmatpush1.bf16.xpose.msra.mxu0 0
  %2271 = vmatprep.subr.bf16.mxu0 0
  %2272 = vmatpush1.bf16.xpose.msra.mxu0 0
  %2273 = vmatprep.subr.bf16.mxu0 0
  %2274 = vmatpush1.bf16.xpose.msra.mxu0 0
  %2275 = vmatprep.subr.bf16.mxu0 0
  %2276 = vmatpush1.bf16.xpose.msra.mxu0 0
  %2277 = vmatprep.subr.bf16.mxu0 0
  %2278 = vmatpush1.bf16.xpose.msra.mxu0 0
  %2279 = vmatprep.subr.bf16.mxu0 0
  %2280 = vmatpush1.bf16.xpose.msra.mxu0 0
  %2281 = vmatprep.subr.bf16.mxu0 0
  %2282 = vmatpush1.bf16.xpose.msra.mxu0 0
  %2283 = vmatprep.subr.bf16.mxu0 0
  %2284 = vmatpush1.bf16.xpose.msra.mxu0 0
  %2285 = vmatprep.subr.bf16.mxu0 0
  %2286 = vmatpush1.bf16.xpose.msra.mxu0 0
  %2287 = vmatprep.mubr.bf16.mxu0 0
  %2288 = vmatmul.mubr.bf16.gmra.mrb[0].mxu0 %v2250
  %v2289 = vpop.f32.mrb[0].mxu0
  %v2290 = vadd.f32 0.0, %v2289
  %v2291 = vpop.f32.mrb[0].mxu0
  %v2292 = vpop.f32.mrb[0].mxu0
  %v2293 = vpop.f32.mrb[0].mxu0
  %2294 = vdwg.mxu0
  %2295 = vrot.lane.b32.xlu0 %v1552, 104
  %v2296 = vpop.permute.xlu0 %2295
  %2297 = vrot.lane.b32.xlu0 %v1552, 72
  %v2298 = vpop.permute.xlu0 %2297
  %v2300 = vsel %vm206, %v2296, 0
  %v2303 = vsel %vm206, %v2298, 0
  %2305 = vmatprep.subr.bf16.mxu0 0
  %2306 = vmatpush1.bf16.xpose.msra.mxu0 %v2303
  %2307 = vmatprep.subr.bf16.mxu0 0
  %2308 = vmatpush1.bf16.xpose.msra.mxu0 0
  %2309 = vmatprep.subr.bf16.mxu0 0
  %2310 = vmatpush1.bf16.xpose.msra.mxu0 0
  %2311 = vmatprep.subr.bf16.mxu0 0
  %2312 = vmatpush1.bf16.xpose.msra.mxu0 0
  %2313 = vmatprep.subr.bf16.mxu0 0
  %2314 = vmatpush1.bf16.xpose.msra.mxu0 0
  %2315 = vmatprep.subr.bf16.mxu0 0
  %2316 = vmatpush1.bf16.xpose.msra.mxu0 0
  %2317 = vmatprep.subr.bf16.mxu0 0
  %2318 = vmatpush1.bf16.xpose.msra.mxu0 0
  %2319 = vmatprep.subr.bf16.mxu0 0
  %2320 = vmatpush1.bf16.xpose.msra.mxu0 0
  %2321 = vmatprep.subr.bf16.mxu0 0
  %2322 = vmatpush1.bf16.xpose.msra.mxu0 0
  %2323 = vmatprep.subr.bf16.mxu0 0
  %2324 = vmatpush1.bf16.xpose.msra.mxu0 0
  %2325 = vmatprep.subr.bf16.mxu0 0
  %2326 = vmatpush1.bf16.xpose.msra.mxu0 0
  %2327 = vmatprep.subr.bf16.mxu0 0
  %2328 = vmatpush1.bf16.xpose.msra.mxu0 0
  %2329 = vmatprep.subr.bf16.mxu0 0
  %2330 = vmatpush1.bf16.xpose.msra.mxu0 0
  %2331 = vmatprep.subr.bf16.mxu0 0
  %2332 = vmatpush1.bf16.xpose.msra.mxu0 0
  %2333 = vmatprep.subr.bf16.mxu0 0
  %2334 = vmatpush1.bf16.xpose.msra.mxu0 0
  %2335 = vmatprep.subr.bf16.mxu0 0
  %2336 = vmatpush1.bf16.xpose.msra.mxu0 0
  %2337 = vmatprep.mubr.bf16.mxu0 0
  %2338 = vmatmul.mubr.bf16.gmra.mrb[0].mxu0 %v2300
  %v2339 = vpop.f32.mrb[0].mxu0
  %v2340 = vadd.f32 0.0, %v2339
  %v2341 = vpop.f32.mrb[0].mxu0
  %v2342 = vpop.f32.mrb[0].mxu0
  %v2343 = vpop.f32.mrb[0].mxu0
  %2344 = vdwg.mxu0
  %v2345 = vmul.f32 %v2290, 0.35355338
  %v2346 = vmul.f32 %v2340, 0.35355338
  %v2347 = vadd.f32 %v2345, %v62
  %v2348 = vadd.f32 %v2346, %v63
  %v2349 = vsel %vm206, %v2347, -inf
  %2350 = vmax.xlane.f32.xlu0 %v2349
  %v2351 = vpop.xlane.xlu0 %2350
  %v2352 = vsel %vm206, %v2348, -inf
  %2353 = vmax.xlane.f32.xlu0 %v2352
  %v2354 = vpop.xlane.xlu0 %2353
  %v2355 = vsub.f32 %v2347, %v2351
  %v2356 = vsub.f32 %v2348, %v2354
  %v2357 = vmul.f32 %v2355, 1.442695
  %v2358 = vpow.pop %v2357
  %v2359 = vmul.f32 %v2356, 1.442695
  %v2360 = vpow.pop %v2359
  %v2361 = vsel %vm206, %v2358, 0.0
  %2362 = vadd.xlane.f32.xlu0 %v2361
  %v2363 = vpop.xlane.xlu0 %2362
  %v2364 = vsel %vm206, %v2360, 0.0
  %2365 = vadd.xlane.f32.xlu0 %v2364
  %v2366 = vpop.xlane.xlu0 %2365
  %v2367 = vrcp.pop %v2363
  %v2368 = vmul.f32 %v2358, %v2367
  %v2369 = vrcp.pop %v2366
  %v2370 = vmul.f32 %v2360, %v2369
  %v2371 = vpack.c.bf16 %v2368, %v2368
  %v2372 = vpack.c.bf16 %v2370, %v2370
  %2373 = vrot.lane.b32.xlu0 %v1551, 40
  %v2374 = vpop.permute.xlu0 %2373
  %v2376 = vsel %vm206, %v2371, 0
  %v2379 = vsel %vm335, %v2374, 0
  %2381 = vmatprep.subr.bf16.mxu0 0
  %2382 = vmatpush1.bf16.msra.mxu0 %v2379
  %2383 = vmatprep.subr.bf16.mxu0 0
  %2384 = vmatpush1.bf16.msra.mxu0 0
  %2385 = vmatprep.subr.bf16.mxu0 0
  %2386 = vmatpush1.bf16.msra.mxu0 0
  %2387 = vmatprep.subr.bf16.mxu0 0
  %2388 = vmatpush1.bf16.msra.mxu0 0
  %2389 = vmatprep.subr.bf16.mxu0 0
  %2390 = vmatpush1.bf16.msra.mxu0 0
  %2391 = vmatprep.subr.bf16.mxu0 0
  %2392 = vmatpush1.bf16.msra.mxu0 0
  %2393 = vmatprep.subr.bf16.mxu0 0
  %2394 = vmatpush1.bf16.msra.mxu0 0
  %2395 = vmatprep.subr.bf16.mxu0 0
  %2396 = vmatpush1.bf16.msra.mxu0 0
  %2397 = vmatprep.subr.bf16.mxu0 0
  %2398 = vmatpush1.bf16.msra.mxu0 0
  %2399 = vmatprep.subr.bf16.mxu0 0
  %2400 = vmatpush1.bf16.msra.mxu0 0
  %2401 = vmatprep.subr.bf16.mxu0 0
  %2402 = vmatpush1.bf16.msra.mxu0 0
  %2403 = vmatprep.subr.bf16.mxu0 0
  %2404 = vmatpush1.bf16.msra.mxu0 0
  %2405 = vmatprep.subr.bf16.mxu0 0
  %2406 = vmatpush1.bf16.msra.mxu0 0
  %2407 = vmatprep.subr.bf16.mxu0 0
  %2408 = vmatpush1.bf16.msra.mxu0 0
  %2409 = vmatprep.subr.bf16.mxu0 0
  %2410 = vmatpush1.bf16.msra.mxu0 0
  %2411 = vmatprep.subr.bf16.mxu0 0
  %2412 = vmatpush1.bf16.msra.mxu0 0
  %2413 = vmatprep.mubr.bf16.mxu0 0
  %2414 = vmatmul.mubr.bf16.gmra.mrb[0].mxu0 %v2376
  %v2415 = vpop.f32.mrb[0].mxu0
  %v2416 = vadd.f32 0.0, %v2415
  %v2417 = vpop.f32.mrb[0].mxu0
  %v2418 = vpop.f32.mrb[0].mxu0
  %v2419 = vpop.f32.mrb[0].mxu0
  %2420 = vdwg.mxu0
  %2421 = vrot.lane.b32.xlu0 %v1552, 40
  %v2422 = vpop.permute.xlu0 %2421
  %v2424 = vsel %vm206, %v2372, 0
  %v2427 = vsel %vm335, %v2422, 0
  %2429 = vmatprep.subr.bf16.mxu0 0
  %2430 = vmatpush1.bf16.msra.mxu0 %v2427
  %2431 = vmatprep.subr.bf16.mxu0 0
  %2432 = vmatpush1.bf16.msra.mxu0 0
  %2433 = vmatprep.subr.bf16.mxu0 0
  %2434 = vmatpush1.bf16.msra.mxu0 0
  %2435 = vmatprep.subr.bf16.mxu0 0
  %2436 = vmatpush1.bf16.msra.mxu0 0
  %2437 = vmatprep.subr.bf16.mxu0 0
  %2438 = vmatpush1.bf16.msra.mxu0 0
  %2439 = vmatprep.subr.bf16.mxu0 0
  %2440 = vmatpush1.bf16.msra.mxu0 0
  %2441 = vmatprep.subr.bf16.mxu0 0
  %2442 = vmatpush1.bf16.msra.mxu0 0
  %2443 = vmatprep.subr.bf16.mxu0 0
  %2444 = vmatpush1.bf16.msra.mxu0 0
  %2445 = vmatprep.subr.bf16.mxu0 0
  %2446 = vmatpush1.bf16.msra.mxu0 0
  %2447 = vmatprep.subr.bf16.mxu0 0
  %2448 = vmatpush1.bf16.msra.mxu0 0
  %2449 = vmatprep.subr.bf16.mxu0 0
  %2450 = vmatpush1.bf16.msra.mxu0 0
  %2451 = vmatprep.subr.bf16.mxu0 0
  %2452 = vmatpush1.bf16.msra.mxu0 0
  %2453 = vmatprep.subr.bf16.mxu0 0
  %2454 = vmatpush1.bf16.msra.mxu0 0
  %2455 = vmatprep.subr.bf16.mxu0 0
  %2456 = vmatpush1.bf16.msra.mxu0 0
  %2457 = vmatprep.subr.bf16.mxu0 0
  %2458 = vmatpush1.bf16.msra.mxu0 0
  %2459 = vmatprep.subr.bf16.mxu0 0
  %2460 = vmatpush1.bf16.msra.mxu0 0
  %2461 = vmatprep.mubr.bf16.mxu0 0
  %2462 = vmatmul.mubr.bf16.gmra.mrb[0].mxu0 %v2424
  %v2463 = vpop.f32.mrb[0].mxu0
  %v2464 = vadd.f32 0.0, %v2463
  %v2465 = vpop.f32.mrb[0].mxu0
  %v2466 = vpop.f32.mrb[0].mxu0
  %v2467 = vpop.f32.mrb[0].mxu0
  %2468 = vdwg.mxu0
  %2471 = vrot.lane.b32.xlu0 %v2416, 24
  %v2472 = vpop.permute.xlu0 %2471
  %2473 = vrot.lane.b32.xlu0 %v2464, 24
  %v2474 = vpop.permute.xlu0 %2473
  %2477 = vst.msk [vmem:[#allocation2] sm:$0xff] %vm1131, %v2472
  %2478 = vst.msk [vmem:[#allocation2 + $0x8] sm:$0xff] %vm1131, %v2474
  %v2479 = vld [vmem:[#allocation2] sm:$0xff]
  %v2480 = vld [vmem:[#allocation2 + $0x8] sm:$0xff]
  %v2481 = vpack.c.bf16 %v2480, %v2479
  %v2486 = vunpack.c.l.b16 %v1428
  %v2487 = vunpack.c.l.b16 %v1429
  %v2488 = vunpack.c.l.b16 %v1430
  %v2489 = vunpack.c.l.b16 %v1431
  %v2490 = vpack.c.b16 %v2487, %v2486
  %v2491 = vpack.c.b16 %v2489, %v2488
  %v2495 = vsel %vm100, %v2481, 0
  %2497 = vmatprep.subr.bf16.mxu0 0
  %2498 = vmatpush1.bf16.msra.mxu0 %v2490
  %2499 = vmatprep.subr.bf16.mxu0 0
  %2500 = vmatpush1.bf16.msra.mxu0 %v2491
  %2501 = vmatprep.subr.bf16.mxu0 0
  %2502 = vmatpush1.bf16.msra.mxu0 0
  %2503 = vmatprep.subr.bf16.mxu0 0
  %2504 = vmatpush1.bf16.msra.mxu0 0
  %2505 = vmatprep.subr.bf16.mxu0 0
  %2506 = vmatpush1.bf16.msra.mxu0 0
  %2507 = vmatprep.subr.bf16.mxu0 0
  %2508 = vmatpush1.bf16.msra.mxu0 0
  %2509 = vmatprep.subr.bf16.mxu0 0
  %2510 = vmatpush1.bf16.msra.mxu0 0
  %2511 = vmatprep.subr.bf16.mxu0 0
  %2512 = vmatpush1.bf16.msra.mxu0 0
  %2513 = vmatprep.subr.bf16.mxu0 0
  %2514 = vmatpush1.bf16.msra.mxu0 0
  %2515 = vmatprep.subr.bf16.mxu0 0
  %2516 = vmatpush1.bf16.msra.mxu0 0
  %2517 = vmatprep.subr.bf16.mxu0 0
  %2518 = vmatpush1.bf16.msra.mxu0 0
  %2519 = vmatprep.subr.bf16.mxu0 0
  %2520 = vmatpush1.bf16.msra.mxu0 0
  %2521 = vmatprep.subr.bf16.mxu0 0
  %2522 = vmatpush1.bf16.msra.mxu0 0
  %2523 = vmatprep.subr.bf16.mxu0 0
  %2524 = vmatpush1.bf16.msra.mxu0 0
  %2525 = vmatprep.subr.bf16.mxu0 0
  %2526 = vmatpush1.bf16.msra.mxu0 0
  %2527 = vmatprep.subr.bf16.mxu0 0
  %2528 = vmatpush1.bf16.msra.mxu0 0
  %2529 = vmatprep.mubr.bf16.mxu0 0
  %2530 = vmatmul.mubr.bf16.gmra.mrb[0].mxu0 %v2495
  %v2531 = vpop.f32.mrb[0].mxu0
  %v2532 = vadd.f32 0.0, %v2531
  %v2533 = vpop.f32.mrb[0].mxu0
  %v2534 = vpop.f32.mrb[0].mxu0
  %v2535 = vadd.f32 0.0, %v2534
  %v2536 = vpop.f32.mrb[0].mxu0
  %2537 = vdwg.mxu0
  %v2538 = vadd.f32 %v1414, %v2532
  %v2539 = vadd.f32 %v1415, %v2535
  %v2540 = vlaneseq
  %v2541 = vshrl.u32 %v2540, 7
  %v2542 = vsub.s32 0, %v2541
  %v2543 = vrot.slane %v1419, %v2542
  %v2544 = vadd.f32 %v2538, %v2543
  %v2545 = vadd.f32 %v2539, %v2543
  %v2546 = vsel %vm100, %v2544, 0.0
  %2547 = vadd.xlane.f32.xlu0 %v2546
  %v2548 = vpop.xlane.xlu0 %2547
  %v2549 = vsel %vm100, %v2545, 0.0
  %2550 = vadd.xlane.f32.xlu0 %v2549
  %v2551 = vpop.xlane.xlu0 %2550
  %v2552 = vmul.f32 %v2548, %v107
  %v2553 = vmul.f32 %v2551, %v107
  %v2554 = vsub.f32 %v2544, %v2552
  %v2555 = vsub.f32 %v2545, %v2553
  %v2556 = vmul.f32 %v2554, %v2554
  %v2557 = vmul.f32 %v2555, %v2555
  %v2558 = vsel %vm100, %v2556, 0.0
  %2559 = vadd.xlane.f32.xlu0 %v2558
  %v2560 = vpop.xlane.xlu0 %2559
  %v2561 = vsel %vm100, %v2557, 0.0
  %2562 = vadd.xlane.f32.xlu0 %v2561
  %v2563 = vpop.xlane.xlu0 %2562
  %v2564 = vmul.f32 %v2560, %v107
  %v2565 = vmul.f32 %v2563, %v107
  %v2566 = vadd.f32 %v2564, 1e-05
  %v2567 = vadd.f32 %v2565, 1e-05
  %v2568 = vrsqrt.pop %v2566
  %v2569 = vrsqrt.pop %v2567
  %v2570 = vmul.f32 %v2554, %v2568
  %v2571 = vmul.f32 %v2555, %v2569
  %v2572 = vlaneseq
  %v2573 = vshrl.u32 %v2572, 7
  %v2574 = vsub.s32 0, %v2573
  %v2575 = vrot.slane %v1420, %v2574
  %v2576 = vmul.f32 %v2570, %v2575
  %v2577 = vmul.f32 %v2571, %v2575
  %v2578 = vlaneseq
  %v2579 = vshrl.u32 %v2578, 7
  %v2580 = vsub.s32 0, %v2579
  %v2581 = vrot.slane %v1421, %v2580
  %v2582 = vadd.f32 %v2576, %v2581
  %v2583 = vadd.f32 %v2577, %v2581
  %v2584 = vpack.c.bf16 %v2583, %v2582
  %v2585 = vlaneseq
  %v2586 = vshrl.u32 %v2585, 7
  %v2587 = vsub.s32 0, %v2586
  %v2588 = vrot.slane %v1422, %v2587
  %v2593 = vunpack.c.l.b16 %v1432
  %v2594 = vunpack.c.l.b16 %v1433
  %v2595 = vunpack.c.l.b16 %v1434
  %v2596 = vunpack.c.l.b16 %v1435
  %v2597 = vpack.c.b16 %v2594, %v2593
  %v2598 = vpack.c.b16 %v2596, %v2595
  %v2602 = vsel %vm100, %v2584, 0
  %2604 = vmatprep.subr.bf16.mxu0 0
  %2605 = vmatpush1.bf16.msra.mxu0 %v2597
  %2606 = vmatprep.subr.bf16.mxu0 0
  %2607 = vmatpush1.bf16.msra.mxu0 %v2598
  %2608 = vmatprep.subr.bf16.mxu0 0
  %2609 = vmatpush1.bf16.msra.mxu0 0
  %2610 = vmatprep.subr.bf16.mxu0 0
  %2611 = vmatpush1.bf16.msra.mxu0 0
  %2612 = vmatprep.subr.bf16.mxu0 0
  %2613 = vmatpush1.bf16.msra.mxu0 0
  %2614 = vmatprep.subr.bf16.mxu0 0
  %2615 = vmatpush1.bf16.msra.mxu0 0
  %2616 = vmatprep.subr.bf16.mxu0 0
  %2617 = vmatpush1.bf16.msra.mxu0 0
  %2618 = vmatprep.subr.bf16.mxu0 0
  %2619 = vmatpush1.bf16.msra.mxu0 0
  %2620 = vmatprep.subr.bf16.mxu0 0
  %2621 = vmatpush1.bf16.msra.mxu0 0
  %2622 = vmatprep.subr.bf16.mxu0 0
  %2623 = vmatpush1.bf16.msra.mxu0 0
  %2624 = vmatprep.subr.bf16.mxu0 0
  %2625 = vmatpush1.bf16.msra.mxu0 0
  %2626 = vmatprep.subr.bf16.mxu0 0
  %2627 = vmatpush1.bf16.msra.mxu0 0
  %2628 = vmatprep.subr.bf16.mxu0 0
  %2629 = vmatpush1.bf16.msra.mxu0 0
  %2630 = vmatprep.subr.bf16.mxu0 0
  %2631 = vmatpush1.bf16.msra.mxu0 0
  %2632 = vmatprep.subr.bf16.mxu0 0
  %2633 = vmatpush1.bf16.msra.mxu0 0
  %2634 = vmatprep.subr.bf16.mxu0 0
  %2635 = vmatpush1.bf16.msra.mxu0 0
  %2636 = vmatprep.mubr.bf16.mxu0 0
  %2637 = vmatmul.mubr.bf16.gmra.mrb[0].mxu0 %v2602
  %v2638 = vpop.f32.mrb[0].mxu0
  %v2639 = vadd.f32 %v2588, %v2638
  %v2640 = vpop.f32.mrb[0].mxu0
  %v2641 = vpop.f32.mrb[0].mxu0
  %v2642 = vadd.f32 %v2588, %v2641
  %v2643 = vpop.f32.mrb[0].mxu0
  %2644 = vdwg.mxu0
  %v2645 = vmul.f32 %v2639, %v2639
  %v2646 = vmul.f32 %v2642, %v2642
  %v2647 = vmul.f32 %v2639, %v2645
  %v2648 = vmul.f32 %v2642, %v2646
  %v2649 = vmul.f32 %v2647, 0.044715
  %v2650 = vmul.f32 %v2648, 0.044715
  %v2651 = vadd.f32 %v2639, %v2649
  %v2652 = vadd.f32 %v2642, %v2650
  %v2653 = vmul.f32 %v2651, 0.7978846
  %v2654 = vmul.f32 %v2652, 0.7978846
  %v2655 = vtanh.pop %v2653
  %v2656 = vtanh.pop %v2654
  %v2657 = vadd.f32 %v2655, 1.0
  %v2658 = vadd.f32 %v2656, 1.0
  %v2659 = vmul.f32 %v2657, 0.5
  %v2660 = vmul.f32 %v2658, 0.5
  %v2661 = vmul.f32 %v2639, %v2659
  %v2662 = vmul.f32 %v2642, %v2660
  %v2663 = vpack.c.bf16 %v2662, %v2661
  %v2680 = vunpack.c.l.b16 %v1436
  %v2681 = vunpack.c.l.b16 %v1437
  %v2682 = vunpack.c.l.b16 %v1438
  %v2683 = vunpack.c.l.b16 %v1439
  %v2684 = vunpack.c.l.b16 %v1440
  %v2685 = vunpack.c.l.b16 %v1441
  %v2686 = vunpack.c.l.b16 %v1442
  %v2687 = vunpack.c.l.b16 %v1443
  %v2688 = vunpack.c.l.b16 %v1444
  %v2689 = vunpack.c.l.b16 %v1445
  %v2690 = vunpack.c.l.b16 %v1446
  %v2691 = vunpack.c.l.b16 %v1447
  %v2692 = vunpack.c.l.b16 %v1448
  %v2693 = vunpack.c.l.b16 %v1449
  %v2694 = vunpack.c.l.b16 %v1450
  %v2695 = vunpack.c.l.b16 %v1451
  %v2696 = vpack.c.b16 %v2681, %v2680
  %v2697 = vpack.c.b16 %v2683, %v2682
  %v2698 = vpack.c.b16 %v2685, %v2684
  %v2699 = vpack.c.b16 %v2687, %v2686
  %v2700 = vpack.c.b16 %v2689, %v2688
  %v2701 = vpack.c.b16 %v2691, %v2690
  %v2702 = vpack.c.b16 %v2693, %v2692
  %v2703 = vpack.c.b16 %v2695, %v2694
  %2712 = vmatprep.subr.bf16.mxu0 0
  %2713 = vmatpush1.bf16.msra.mxu0 %v2696
  %2714 = vmatprep.subr.bf16.mxu0 0
  %2715 = vmatpush1.bf16.msra.mxu0 %v2697
  %2716 = vmatprep.subr.bf16.mxu0 0
  %2717 = vmatpush1.bf16.msra.mxu0 %v2698
  %2718 = vmatprep.subr.bf16.mxu0 0
  %2719 = vmatpush1.bf16.msra.mxu0 %v2699
  %2720 = vmatprep.subr.bf16.mxu0 0
  %2721 = vmatpush1.bf16.msra.mxu0 %v2700
  %2722 = vmatprep.subr.bf16.mxu0 0
  %2723 = vmatpush1.bf16.msra.mxu0 %v2701
  %2724 = vmatprep.subr.bf16.mxu0 0
  %2725 = vmatpush1.bf16.msra.mxu0 %v2702
  %2726 = vmatprep.subr.bf16.mxu0 0
  %2727 = vmatpush1.bf16.msra.mxu0 %v2703
  %2728 = vmatprep.subr.bf16.mxu0 0
  %2729 = vmatpush1.bf16.msra.mxu0 0
  %2730 = vmatprep.subr.bf16.mxu0 0
  %2731 = vmatpush1.bf16.msra.mxu0 0
  %2732 = vmatprep.subr.bf16.mxu0 0
  %2733 = vmatpush1.bf16.msra.mxu0 0
  %2734 = vmatprep.subr.bf16.mxu0 0
  %2735 = vmatpush1.bf16.msra.mxu0 0
  %2736 = vmatprep.subr.bf16.mxu0 0
  %2737 = vmatpush1.bf16.msra.mxu0 0
  %2738 = vmatprep.subr.bf16.mxu0 0
  %2739 = vmatpush1.bf16.msra.mxu0 0
  %2740 = vmatprep.subr.bf16.mxu0 0
  %2741 = vmatpush1.bf16.msra.mxu0 0
  %2742 = vmatprep.subr.bf16.mxu0 0
  %2743 = vmatpush1.bf16.msra.mxu0 0
  %2744 = vmatprep.mubr.bf16.mxu0 0
  %2745 = vmatmul.mubr.bf16.gmra.mrb[0].mxu0 %v2663
  %v2746 = vpop.f32.mrb[0].mxu0
  %v2747 = vadd.f32 0.0, %v2746
  %v2748 = vpop.f32.mrb[0].mxu0
  %v2749 = vpop.f32.mrb[0].mxu0
  %v2750 = vadd.f32 0.0, %v2749
  %v2751 = vpop.f32.mrb[0].mxu0
  %2752 = vdwg.mxu0
  %v2753 = vadd.f32 %v2544, %v2747
  %v2754 = vadd.f32 %v2545, %v2750
  %v2755 = vlaneseq
  %v2756 = vshrl.u32 %v2755, 7
  %v2757 = vsub.s32 0, %v2756
  %v2758 = vrot.slane %v1423, %v2757
  %v2759 = vadd.f32 %v2753, %v2758
  %v2760 = vadd.f32 %v2754, %v2758
  %v2761 = vld [vmem:[%s3 + $0x10] sm:$0x1]
  %v2762 = vld [vmem:[%s3 + $0x11] sm:$0x1]
  %v2763 = vld [vmem:[%s3 + $0x12] sm:$0x1]
  %v2764 = vld [vmem:[%s3 + $0x13] sm:$0x1]
  %v2765 = vsel %vm100, %v2759, 0.0
  %2766 = vadd.xlane.f32.xlu0 %v2765
  %v2767 = vpop.xlane.xlu0 %2766
  %v2768 = vsel %vm100, %v2760, 0.0
  %2769 = vadd.xlane.f32.xlu0 %v2768
  %v2770 = vpop.xlane.xlu0 %2769
  %v2771 = vmul.f32 %v2767, %v107
  %v2772 = vmul.f32 %v2770, %v107
  %v2773 = vsub.f32 %v2759, %v2771
  %v2774 = vsub.f32 %v2760, %v2772
  %v2775 = vmul.f32 %v2773, %v2773
  %v2776 = vmul.f32 %v2774, %v2774
  %v2777 = vsel %vm100, %v2775, 0.0
  %2778 = vadd.xlane.f32.xlu0 %v2777
  %v2779 = vpop.xlane.xlu0 %2778
  %v2780 = vsel %vm100, %v2776, 0.0
  %2781 = vadd.xlane.f32.xlu0 %v2780
  %v2782 = vpop.xlane.xlu0 %2781
  %v2783 = vmul.f32 %v2779, %v107
  %v2784 = vmul.f32 %v2782, %v107
  %v2785 = vadd.f32 %v2783, 1e-05
  %v2786 = vadd.f32 %v2784, 1e-05
  %v2787 = vrsqrt.pop %v2785
  %v2788 = vrsqrt.pop %v2786
  %v2789 = vmul.f32 %v2773, %v2787
  %v2790 = vmul.f32 %v2774, %v2788
  %v2791 = vlaneseq
  %v2792 = vshrl.u32 %v2791, 7
  %v2793 = vsub.s32 0, %v2792
  %v2794 = vrot.slane %v2761, %v2793
  %v2795 = vmul.f32 %v2789, %v2794
  %v2796 = vmul.f32 %v2790, %v2794
  %v2797 = vlaneseq
  %v2798 = vshrl.u32 %v2797, 7
  %v2799 = vsub.s32 0, %v2798
  %v2800 = vrot.slane %v2762, %v2799
  %v2801 = vadd.f32 %v2795, %v2800
  %v2802 = vadd.f32 %v2796, %v2800
  %v2803 = vsel %vm100, %v2801, 0.0
  %v2804 = vrot.slane %v2803, 4
  %v2805 = vadd.f32 %v2803, %v2804
  %v2806 = vrot.slane %v2805, 2
  %v2807 = vadd.f32 %v2805, %v2806
  %v2808 = vrot.slane %v2807, 1
  %v2809 = vadd.f32 %v2807, %v2808
  %v2810 = vsel %vm100, %v2802, 0.0
  %v2811 = vrot.slane %v2810, 4
  %v2812 = vadd.f32 %v2810, %v2811
  %v2813 = vrot.slane %v2812, 2
  %v2814 = vadd.f32 %v2812, %v2813
  %v2815 = vrot.slane %v2814, 1
  %v2816 = vadd.f32 %v2814, %v2815
  %v2817 = vrcp.pop 8.0
  %v2818 = vmul.f32 %v2809, %v2817
  %v2819 = vmul.f32 %v2816, %v2817
  %v2820 = vlaneseq
  %v2821 = vshrl.u32 %v2820, 7
  %v2822 = vsub.s32 0, %v2821
  %v2823 = vrot.slane %v2763, %v2822
  %v2824 = vmul.f32 %v2818, %v2823
  %v2825 = vmul.f32 %v2819, %v2823
  %v2828 = vrot.slane %v2825, 7
  %vm2829 = vcmask 1041409
  %v2830 = vsel %vm2829, %v2828, %v2824
  %vm2832 = vcmask 254976
  %v2833 = vsel %vm2832, %v2830, 0.0
  %2834 = vadd.xlane.f32.xlu0 %v2833
  %v2835 = vpop.xlane.xlu0 %2834
  %v2836 = vlaneseq
  %v2837 = vshrl.u32 %v2836, 7
  %v2838 = vsub.s32 0, %v2837
  %v2839 = vrot.slane %v2764, %v2838
  %v2840 = vadd.f32 %v2835, %v2839
  %vm2841 = vcmask 1024
  %2842 = vst.msk [vmem:[%s4] sm:$0x3] %vm2841, %v2840
  // Predicated region
  $region18: #{gpt2_reward_forward.1} parent=0 // pred_check
    _
  $region19: #{gpt2_reward_forward.1} parent=0 // pred_check_branch
    %2844 = sbr.rel (0) target = $region21
  $region20: #{gpt2_reward_forward.1} parent=0 // pred_region
    _
  $region21: #{gpt2_reward_forward.1} parent=0 // pred_fallthru
    _
  // Predicated region
  $region22: #{gpt2_reward_forward.1} parent=0 // pred_check
    _
  $region23: #{gpt2_reward_forward.1} parent=0 // pred_check_branch
    %2846 = sbr.rel (0) target = $region25
  $region24: #{gpt2_reward_forward.1} parent=0 // pred_region
    _
  $region25: #{gpt2_reward_forward.1} parent=0 // pred_fallthru
    _

</llo_original>
